<compile_context>
chip_gen: v7x
topology: tpu7x:2x2x1
jax: 0.10.0
libtpu: 0.0.40
codegen_flags: <defaults>
</compile_context>

<pallas_src>
import functools
import math

import jax
import jax.numpy as jnp
from jax.experimental import pallas as pl
from jax.experimental.pallas import tpu as pltpu


# ---------------------------------------------------------------------------
# Fused kernel: embedding + num_layers TransformerLayer's for a (Bt, L, C) slab
# ---------------------------------------------------------------------------
def _yolo_tr_kernel(x_ref, wlin_ref, blin_ref, wqkv_ref, bqkv_ref,
                    wo_ref, bo_ref, wffn_ref, o_ref,
                    *, num_layers, num_heads, imgs_per_block, seq_len):
    f32 = jnp.float32
    bf16 = jnp.bfloat16
    Bt, L = imgs_per_block, seq_len
    C = x_ref.shape[-1]
    H = num_heads
    d = C // H
    N = Bt * L

    # (Bt, L, C) -> (Bt*L, C): leading-dim merge, layout-trivial.
    p = x_ref[...].reshape(N, C)

    # p = p + Linear(p)   (self.linear, with bias) — one slab-wide matmul.
    p = p + blin_ref[...] + jnp.dot(p.astype(bf16), wlin_ref[...],
                                    preferred_element_type=f32)

    for l in range(num_layers):
        pb = p.astype(bf16)

        # ---- fused q/k/v in-projection --------------------------------
        # One (N, C) x (C, 3C) matmul (pre-proj + in_proj + scale folded in
        # the wrapper), then a single f32->bf16 cast covering q, k and v.
        qkv = (jnp.dot(pb, wqkv_ref[l], preferred_element_type=f32)
               + bqkv_ref[l]).astype(bf16)                        # (N, 3C)

        # ---- per-image multi-head attention ---------------------------
        ctx_imgs = []
        for b in range(Bt):
            qkv_b = qkv[b * L:(b + 1) * L]                        # (L, 3C)
            # per-head scores; independent -> MXU pushes go back-to-back
            scores = []
            for h in range(H):
                q_h = qkv_b[:, h * d:(h + 1) * d]
                k_h = qkv_b[:, C + h * d:C + (h + 1) * d]
                scores.append(jax.lax.dot_general(
                    q_h, k_h, (((1,), (1,)), ((), ())),
                    preferred_element_type=f32))                  # (L, L)
            s = jnp.stack(scores)                                 # (H, L, L)
            # softmax batched over heads (one max / exp / recip pass)
            s = s - jnp.max(s, axis=-1, keepdims=True)
            e = jnp.exp(s)
            a = (e * pl.reciprocal(jnp.sum(e, axis=-1, keepdims=True),
                                   approx=True)).astype(bf16)
            # per-head ctx, concatenated back to (L, C)
            ctx_h = [jnp.dot(a[h],
                             qkv_b[:, 2 * C + h * d:2 * C + (h + 1) * d],
                             preferred_element_type=f32)
                     for h in range(H)]
            ctx_imgs.append(jnp.concatenate(ctx_h, axis=-1))      # (L, C)
        ctx = (ctx_imgs[0] if Bt == 1
               else jnp.concatenate(ctx_imgs, axis=0))            # (N, C)

        # ---- single fused out-projection (all heads) + residual -------
        x1 = jnp.dot(ctx.astype(bf16), wo_ref[l],
                     preferred_element_type=f32) + bo_ref[l] + p

        # ---- FFN: fc2(fc1(x)) folded to ONE matmul + residual ---------
        p = jnp.dot(x1.astype(bf16), wffn_ref[l],
                    preferred_element_type=f32) + x1

    o_ref[...] = p.reshape(Bt, L, C)


# ---------------------------------------------------------------------------
# Parameter prep: fold / concat / transpose / stack / cast  (in the wrapper)
# ---------------------------------------------------------------------------
def _prepare_params(params, num_heads):
    C = params["linear_w"].shape[0]
    d = C // num_heads
    scale = 1.0 / math.sqrt(d)
    bf16 = jnp.bfloat16

    wqkv_l, bqkv_l, wo_l, bo_l, wffn_l = [], [], [], [], []
    for lyr in params["layers"]:
        win, bin_ = lyr["w_in"], lyr["b_in"][0]
        # fold bias-free q/k/v pre-projections into in_proj; pre-transpose to
        # the (x @ W) form; fold the 1/sqrt(d) scale into the q block.
        wq_t = (win[:C] @ lyr["wq"]).T * scale
        wk_t = (win[C:2 * C] @ lyr["wk"]).T
        wv_t = (win[2 * C:] @ lyr["wv"]).T
        wqkv_l.append(jnp.concatenate([wq_t, wk_t, wv_t], axis=1))   # (C, 3C)
        bqkv_l.append(jnp.concatenate([bin_[:C] * scale,
                                       bin_[C:2 * C],
                                       bin_[2 * C:]]).reshape(1, 3 * C))
        wo_l.append(lyr["w_out"].T)                                  # (C, C)
        bo_l.append(lyr["b_out"])                                    # (1, C)
        # fc2(fc1(x)) = x @ (wfc2 @ wfc1).T  (both bias-free, no activation)
        wffn_l.append((lyr["wfc2"] @ lyr["wfc1"]).T)                 # (C, C)

    return {
        "w_lin": params["linear_w"].T.astype(bf16),   # (C, C)
        "b_lin": params["linear_b"],                  # (1, C)   f32
        "w_qkv": jnp.stack(wqkv_l).astype(bf16),      # (NL, C, 3C)
        "b_qkv": jnp.stack(bqkv_l),                   # (NL, 1, 3C) f32
        "w_out": jnp.stack(wo_l).astype(bf16),        # (NL, C, C)
        "b_out": jnp.stack(bo_l),                     # (NL, 1, C)  f32
        "w_ffn": jnp.stack(wffn_l).astype(bf16),      # (NL, C, C)
    }


# ---------------------------------------------------------------------------
# Wrapper
# ---------------------------------------------------------------------------
def yolo_transformer_block(x, params, num_heads, imgs_per_block=None):
    """x: (B, C, H, W) float32 (NCHW, as in PyTorch). Returns (B, C, H, W)."""
    B, C, Hh, Ww = x.shape
    L = Hh * Ww
    NL = len(params["layers"])
    Bt = B if imgs_per_block is None else imgs_per_block
    assert B % Bt == 0, "batch must be divisible by imgs_per_block"

    # NCHW -> (B, L, C) token slab (same per-token math as PyTorch's (L,B,C)).
    p = jnp.transpose(x.reshape(B, C, L), (0, 2, 1))

    prep = _prepare_params(params, num_heads)
    order = ["w_lin", "b_lin", "w_qkv", "b_qkv", "w_out", "b_out", "w_ffn"]
    weights = [prep[k] for k in order]

    def resident(arr):
        # Full-array, grid-invariant spec: fetched once, kept resident in VMEM.
        nd = arr.ndim
        return pl.BlockSpec(arr.shape, lambda g, _n=nd: (0,) * _n)

    kernel = functools.partial(_yolo_tr_kernel, num_layers=NL,
                               num_heads=num_heads, imgs_per_block=Bt,
                               seq_len=L)

    # Advisory cost estimate so XLA schedules surrounding ops around the call.
    flops = (2 * B * L * C * C
             + B * NL * (2 * L * C * 3 * C + 4 * L * L * C + 4 * L * C * C))
    transcendentals = B * NL * num_heads * L * L
    bytes_accessed = 2 * B * L * C * 4 + sum(
        int(w.size) * w.dtype.itemsize for w in weights)

    out = pl.pallas_call(
        kernel,
        out_shape=jax.ShapeDtypeStruct((B, L, C), jnp.float32),
        grid=(B // Bt,),
        in_specs=[pl.BlockSpec((Bt, L, C), lambda g: (g, 0, 0))]
                 + [resident(w) for w in weights],
        out_specs=pl.BlockSpec((Bt, L, C), lambda g: (g, 0, 0)),
        compiler_params=pltpu.CompilerParams(
            dimension_semantics=("parallel",),
            vmem_limit_bytes=32 * 1024 * 1024),
        cost_estimate=pl.CostEstimate(flops=flops,
                                      transcendentals=transcendentals,
                                      bytes_accessed=bytes_accessed),
    )(p, *weights)

    # token slab -> NCHW
    return jnp.transpose(out, (0, 2, 1)).reshape(B, C, Hh, Ww)


# ---------------------------------------------------------------------------
# Deterministic parameter init (matches PyTorch parameter shapes)
# ---------------------------------------------------------------------------
def init_params(key, c, num_layers):
    scale = 1.0 / math.sqrt(c)
    keys = jax.random.split(key, 2 + num_layers)
    params = {
        "linear_w": jax.random.normal(keys[0], (c, c), jnp.float32) * scale,
        "linear_b": jax.random.normal(keys[1], (1, c), jnp.float32) * scale,
        "layers": [],
    }
    for i in range(num_layers):
        ks = jax.random.split(keys[2 + i], 9)
        params["layers"].append({
            "wq":    jax.random.normal(ks[0], (c, c), jnp.float32) * scale,
            "wk":    jax.random.normal(ks[1], (c, c), jnp.float32) * scale,
            "wv":    jax.random.normal(ks[2], (c, c), jnp.float32) * scale,
            "w_in":  jax.random.normal(ks[3], (3 * c, c), jnp.float32) * scale,
            "b_in":  jax.random.normal(ks[4], (1, 3 * c), jnp.float32) * scale,
            "w_out": jax.random.normal(ks[5], (c, c), jnp.float32) * scale,
            "b_out": jax.random.normal(ks[6], (1, c), jnp.float32) * scale,
            "wfc1":  jax.random.normal(ks[7], (c, c), jnp.float32) * scale,
            "wfc2":  jax.random.normal(ks[8], (c, c), jnp.float32) * scale,
        })
    return params


# ---------------------------------------------------------------------------
# Pure-JAX f32 reference (mirrors the PyTorch forward) for a correctness check
# ---------------------------------------------------------------------------
def reference_forward(x, params, num_heads):
    B, C, Hh, Ww = x.shape
    L = Hh * Ww
    d = C // num_heads
    p = jnp.transpose(x.reshape(B, C, L), (0, 2, 1))          # (B, L, C)
    p = p + p @ params["linear_w"].T + params["linear_b"][0]
    for layer in params["layers"]:
        q = p @ layer["wq"].T
        k = p @ layer["wk"].T
        v = p @ layer["wv"].T
        win, bin_ = layer["w_in"], layer["b_in"][0]
        qp = q @ win[:C].T + bin_[:C]
        kp = k @ win[C:2 * C].T + bin_[C:2 * C]
        vp = v @ win[2 * C:].T + bin_[2 * C:]
        qh = qp.reshape(B, L, num_heads, d)
        kh = kp.reshape(B, L, num_heads, d)
        vh = vp.reshape(B, L, num_heads, d)
        s = jnp.einsum('blhd,bmhd->bhlm', qh, kh) / math.sqrt(d)
        a = jax.nn.softmax(s, axis=-1)
        ctx = jnp.einsum('bhlm,bmhd->blhd', a, vh).reshape(B, L, C)
        x1 = ctx @ layer["w_out"].T + layer["b_out"][0] + p
        p = (x1 @ layer["wfc1"].T) @ layer["wfc2"].T + x1
    return jnp.transpose(p, (0, 2, 1)).reshape(B, C, Hh, Ww)


# ---------------------------------------------------------------------------
if __name__ == "__main__":
    c1 = c2 = 32          # c1 == c2  ->  self.conv is None (matches PyTorch)
    num_heads = 4
    num_layers = 2
    B, Hh, Ww = 2, 8, 8   # seq length L = 64

    key = jax.random.PRNGKey(0)
    kx, kp = jax.random.split(key)
    x = jax.random.normal(kx, (B, c1, Hh, Ww), jnp.float32)
    params = init_params(kp, c2, num_layers)

    out = jax.block_until_ready(yolo_transformer_block(x, params, num_heads))
    assert out.shape == (B, c2, Hh, Ww)

    ref = reference_forward(x, params, num_heads)
    err = float(jnp.max(jnp.abs(out - ref)))
    # bf16 MXU inputs (f32 accumulation) + folded weights -> relaxed tolerance
    tol = 2e-2 * float(jnp.max(jnp.abs(ref))) + 1e-2
    assert err < tol, f"max abs err {err} exceeds tol {tol}"

    print("KERNEL_OK")
</pallas_src>

<mosaic_0001>
module attributes {stable_mosaic.version = 11 : i64} {
  func.func @_yolo_tr_kernel(%arg0: i32, %arg1: memref<2x64x32xf32, #tpu.memory_space<vmem>>, %arg2: memref<32x32xbf16, #tpu.memory_space<vmem>>, %arg3: memref<1x32xf32, #tpu.memory_space<vmem>>, %arg4: memref<2x32x96xbf16, #tpu.memory_space<vmem>>, %arg5: memref<2x1x96xf32, #tpu.memory_space<vmem>>, %arg6: memref<2x32x32xbf16, #tpu.memory_space<vmem>>, %arg7: memref<2x1x32xf32, #tpu.memory_space<vmem>>, %arg8: memref<2x32x32xbf16, #tpu.memory_space<vmem>>, %arg9: memref<2x64x32xf32, #tpu.memory_space<vmem>>) attributes {dimension_semantics = [#tpu.dimension_semantics<parallel>], iteration_bounds = array<i64: 1>, scalar_prefetch = 0 : i64, scratch_operands = 0 : i64, tpu.core_type = #tpu.core_type<tc>, window_params = [{transform_indices = @transform_0, window_bounds = array<i64: 2, 64, 32>}, {pipeline_mode = #tpu.pipeline_mode<synchronous>, transform_indices = @transform_1, window_bounds = array<i64: 32, 32>}, {pipeline_mode = #tpu.pipeline_mode<synchronous>, transform_indices = @transform_2, window_bounds = array<i64: 1, 32>}, {pipeline_mode = #tpu.pipeline_mode<synchronous>, transform_indices = @transform_3, window_bounds = array<i64: 2, 32, 96>}, {pipeline_mode = #tpu.pipeline_mode<synchronous>, transform_indices = @transform_4, window_bounds = array<i64: 2, 1, 96>}, {pipeline_mode = #tpu.pipeline_mode<synchronous>, transform_indices = @transform_5, window_bounds = array<i64: 2, 32, 32>}, {pipeline_mode = #tpu.pipeline_mode<synchronous>, transform_indices = @transform_6, window_bounds = array<i64: 2, 1, 32>}, {pipeline_mode = #tpu.pipeline_mode<synchronous>, transform_indices = @transform_7, window_bounds = array<i64: 2, 32, 32>}, {transform_indices = @transform_8, window_bounds = array<i64: 2, 64, 32>}]} {
    %c0 = arith.constant 0 : index
    %c0_0 = arith.constant 0 : index
    %c0_1 = arith.constant 0 : index
    %0 = vector.load %arg1[%c0, %c0_0, %c0_1] : memref<2x64x32xf32, #tpu.memory_space<vmem>>, vector<2x64x32xf32>
    %1 = vector.shape_cast %0 : vector<2x64x32xf32> to vector<128x32xf32>
    %c0_2 = arith.constant 0 : index
    %c0_3 = arith.constant 0 : index
    %2 = vector.load %arg3[%c0_2, %c0_3] : memref<1x32xf32, #tpu.memory_space<vmem>>, vector<1x32xf32>
    %3 = vector.broadcast %2 : vector<1x32xf32> to vector<128x32xf32>
    %4 = arith.addf %1, %3 : vector<128x32xf32>
    %5 = arith.truncf %1 : vector<128x32xf32> to vector<128x32xbf16>
    %c0_4 = arith.constant 0 : index
    %c0_5 = arith.constant 0 : index
    %6 = vector.load %arg2[%c0_4, %c0_5] : memref<32x32xbf16, #tpu.memory_space<vmem>>, vector<32x32xbf16>
    %cst = arith.constant dense<0.000000e+00> : vector<128x32xf32>
    %7 = tpu.matmul %5, %6, %cst {dimension_numbers = #tpu.dot_dimension_numbers<[1], [0], [0], [1], [0, 0, 1, 1], [], []>} : vector<128x32xbf16>, vector<32x32xbf16>, vector<128x32xf32> -> vector<128x32xf32>
    %8 = arith.addf %4, %7 : vector<128x32xf32>
    %9 = arith.truncf %8 : vector<128x32xf32> to vector<128x32xbf16>
    %c0_6 = arith.constant 0 : index
    %c0_7 = arith.constant 0 : index
    %c0_8 = arith.constant 0 : index
    %10 = vector.load %arg4[%c0_6, %c0_7, %c0_8] : memref<2x32x96xbf16, #tpu.memory_space<vmem>>, vector<1x32x96xbf16>
    %11 = vector.shape_cast %10 : vector<1x32x96xbf16> to vector<32x96xbf16>
    %cst_9 = arith.constant dense<0.000000e+00> : vector<128x96xf32>
    %12 = tpu.matmul %9, %11, %cst_9 {dimension_numbers = #tpu.dot_dimension_numbers<[1], [0], [0], [1], [0, 0, 1, 1], [], []>} : vector<128x32xbf16>, vector<32x96xbf16>, vector<128x96xf32> -> vector<128x96xf32>
    %c0_10 = arith.constant 0 : index
    %c0_11 = arith.constant 0 : index
    %c0_12 = arith.constant 0 : index
    %13 = vector.load %arg5[%c0_10, %c0_11, %c0_12] : memref<2x1x96xf32, #tpu.memory_space<vmem>>, vector<1x1x96xf32>
    %14 = vector.shape_cast %13 : vector<1x1x96xf32> to vector<1x96xf32>
    %15 = vector.broadcast %14 : vector<1x96xf32> to vector<128x96xf32>
    %16 = arith.addf %12, %15 : vector<128x96xf32>
    %17 = arith.truncf %16 : vector<128x96xf32> to vector<128x96xbf16>
    %18 = vector.extract_strided_slice %17 {offsets = [0, 0], sizes = [64, 96], strides = [1, 1]} : vector<128x96xbf16> to vector<64x96xbf16>
    %19 = vector.extract_strided_slice %18 {offsets = [0, 0], sizes = [64, 8], strides = [1, 1]} : vector<64x96xbf16> to vector<64x8xbf16>
    %20 = vector.extract_strided_slice %18 {offsets = [0, 32], sizes = [64, 8], strides = [1, 1]} : vector<64x96xbf16> to vector<64x8xbf16>
    %cst_13 = arith.constant dense<0.000000e+00> : vector<64x64xf32>
    %21 = tpu.matmul %19, %20, %cst_13 {dimension_numbers = #tpu.dot_dimension_numbers<[1], [1], [0], [0], [0, 0, 1, 0], [], []>} : vector<64x8xbf16>, vector<64x8xbf16>, vector<64x64xf32> -> vector<64x64xf32>
    %22 = vector.extract_strided_slice %18 {offsets = [0, 8], sizes = [64, 8], strides = [1, 1]} : vector<64x96xbf16> to vector<64x8xbf16>
    %23 = vector.extract_strided_slice %18 {offsets = [0, 40], sizes = [64, 8], strides = [1, 1]} : vector<64x96xbf16> to vector<64x8xbf16>
    %cst_14 = arith.constant dense<0.000000e+00> : vector<64x64xf32>
    %24 = tpu.matmul %22, %23, %cst_14 {dimension_numbers = #tpu.dot_dimension_numbers<[1], [1], [0], [0], [0, 0, 1, 0], [], []>} : vector<64x8xbf16>, vector<64x8xbf16>, vector<64x64xf32> -> vector<64x64xf32>
    %25 = vector.extract_strided_slice %18 {offsets = [0, 16], sizes = [64, 8], strides = [1, 1]} : vector<64x96xbf16> to vector<64x8xbf16>
    %26 = vector.extract_strided_slice %18 {offsets = [0, 48], sizes = [64, 8], strides = [1, 1]} : vector<64x96xbf16> to vector<64x8xbf16>
    %cst_15 = arith.constant dense<0.000000e+00> : vector<64x64xf32>
    %27 = tpu.matmul %25, %26, %cst_15 {dimension_numbers = #tpu.dot_dimension_numbers<[1], [1], [0], [0], [0, 0, 1, 0], [], []>} : vector<64x8xbf16>, vector<64x8xbf16>, vector<64x64xf32> -> vector<64x64xf32>
    %28 = vector.extract_strided_slice %18 {offsets = [0, 24], sizes = [64, 8], strides = [1, 1]} : vector<64x96xbf16> to vector<64x8xbf16>
    %29 = vector.extract_strided_slice %18 {offsets = [0, 56], sizes = [64, 8], strides = [1, 1]} : vector<64x96xbf16> to vector<64x8xbf16>
    %cst_16 = arith.constant dense<0.000000e+00> : vector<64x64xf32>
    %30 = tpu.matmul %28, %29, %cst_16 {dimension_numbers = #tpu.dot_dimension_numbers<[1], [1], [0], [0], [0, 0, 1, 0], [], []>} : vector<64x8xbf16>, vector<64x8xbf16>, vector<64x64xf32> -> vector<64x64xf32>
    %31 = vector.shape_cast %21 : vector<64x64xf32> to vector<1x64x64xf32>
    %32 = vector.shape_cast %24 : vector<64x64xf32> to vector<1x64x64xf32>
    %33 = vector.shape_cast %27 : vector<64x64xf32> to vector<1x64x64xf32>
    %34 = vector.shape_cast %30 : vector<64x64xf32> to vector<1x64x64xf32>
    %35 = tpu.concatenate %31, %32, %33, %34 in 0 : vector<1x64x64xf32>, vector<1x64x64xf32>, vector<1x64x64xf32>, vector<1x64x64xf32> -> vector<4x64x64xf32>
    %cst_17 = arith.constant dense<0xFF800000> : vector<4x64xf32>
    %36 = vector.multi_reduction <maximumf>, %35, %cst_17 [2] : vector<4x64x64xf32> to vector<4x64xf32>
    %37 = vector.shape_cast %36 : vector<4x64xf32> to vector<4x64x1xf32>
    %38 = vector.broadcast %37 : vector<4x64x1xf32> to vector<4x64x64xf32>
    %39 = arith.subf %35, %38 : vector<4x64x64xf32>
    %40 = math.exp %39 : vector<4x64x64xf32>
    %cst_18 = arith.constant dense<0.000000e+00> : vector<4x64xf32>
    %41 = vector.multi_reduction <add>, %40, %cst_18 [2] : vector<4x64x64xf32> to vector<4x64xf32>
    %42 = vector.shape_cast %41 : vector<4x64xf32> to vector<4x64x1xf32>
    %43 = tpu.reciprocal %42 {approx = true} : vector<4x64x1xf32> -> vector<4x64x1xf32>
    %44 = vector.broadcast %43 : vector<4x64x1xf32> to vector<4x64x64xf32>
    %45 = arith.mulf %40, %44 : vector<4x64x64xf32>
    %46 = arith.truncf %45 : vector<4x64x64xf32> to vector<4x64x64xbf16>
    %47 = vector.extract_strided_slice %46 {offsets = [0, 0, 0], sizes = [1, 64, 64], strides = [1, 1, 1]} : vector<4x64x64xbf16> to vector<1x64x64xbf16>
    %48 = vector.shape_cast %47 : vector<1x64x64xbf16> to vector<64x64xbf16>
    %49 = vector.extract_strided_slice %18 {offsets = [0, 64], sizes = [64, 8], strides = [1, 1]} : vector<64x96xbf16> to vector<64x8xbf16>
    %cst_19 = arith.constant dense<0.000000e+00> : vector<64x8xf32>
    %50 = tpu.matmul %48, %49, %cst_19 {dimension_numbers = #tpu.dot_dimension_numbers<[1], [0], [0], [1], [0, 0, 1, 1], [], []>} : vector<64x64xbf16>, vector<64x8xbf16>, vector<64x8xf32> -> vector<64x8xf32>
    %51 = vector.extract_strided_slice %46 {offsets = [1, 0, 0], sizes = [1, 64, 64], strides = [1, 1, 1]} : vector<4x64x64xbf16> to vector<1x64x64xbf16>
    %52 = vector.shape_cast %51 : vector<1x64x64xbf16> to vector<64x64xbf16>
    %53 = vector.extract_strided_slice %18 {offsets = [0, 72], sizes = [64, 8], strides = [1, 1]} : vector<64x96xbf16> to vector<64x8xbf16>
    %cst_20 = arith.constant dense<0.000000e+00> : vector<64x8xf32>
    %54 = tpu.matmul %52, %53, %cst_20 {dimension_numbers = #tpu.dot_dimension_numbers<[1], [0], [0], [1], [0, 0, 1, 1], [], []>} : vector<64x64xbf16>, vector<64x8xbf16>, vector<64x8xf32> -> vector<64x8xf32>
    %55 = vector.extract_strided_slice %46 {offsets = [2, 0, 0], sizes = [1, 64, 64], strides = [1, 1, 1]} : vector<4x64x64xbf16> to vector<1x64x64xbf16>
    %56 = vector.shape_cast %55 : vector<1x64x64xbf16> to vector<64x64xbf16>
    %57 = vector.extract_strided_slice %18 {offsets = [0, 80], sizes = [64, 8], strides = [1, 1]} : vector<64x96xbf16> to vector<64x8xbf16>
    %cst_21 = arith.constant dense<0.000000e+00> : vector<64x8xf32>
    %58 = tpu.matmul %56, %57, %cst_21 {dimension_numbers = #tpu.dot_dimension_numbers<[1], [0], [0], [1], [0, 0, 1, 1], [], []>} : vector<64x64xbf16>, vector<64x8xbf16>, vector<64x8xf32> -> vector<64x8xf32>
    %59 = vector.extract_strided_slice %46 {offsets = [3, 0, 0], sizes = [1, 64, 64], strides = [1, 1, 1]} : vector<4x64x64xbf16> to vector<1x64x64xbf16>
    %60 = vector.shape_cast %59 : vector<1x64x64xbf16> to vector<64x64xbf16>
    %61 = vector.extract_strided_slice %18 {offsets = [0, 88], sizes = [64, 8], strides = [1, 1]} : vector<64x96xbf16> to vector<64x8xbf16>
    %cst_22 = arith.constant dense<0.000000e+00> : vector<64x8xf32>
    %62 = tpu.matmul %60, %61, %cst_22 {dimension_numbers = #tpu.dot_dimension_numbers<[1], [0], [0], [1], [0, 0, 1, 1], [], []>} : vector<64x64xbf16>, vector<64x8xbf16>, vector<64x8xf32> -> vector<64x8xf32>
    %63 = tpu.concatenate %50, %54, %58, %62 in 1 : vector<64x8xf32>, vector<64x8xf32>, vector<64x8xf32>, vector<64x8xf32> -> vector<64x32xf32>
    %64 = vector.extract_strided_slice %17 {offsets = [64, 0], sizes = [64, 96], strides = [1, 1]} : vector<128x96xbf16> to vector<64x96xbf16>
    %65 = vector.extract_strided_slice %64 {offsets = [0, 0], sizes = [64, 8], strides = [1, 1]} : vector<64x96xbf16> to vector<64x8xbf16>
    %66 = vector.extract_strided_slice %64 {offsets = [0, 32], sizes = [64, 8], strides = [1, 1]} : vector<64x96xbf16> to vector<64x8xbf16>
    %cst_23 = arith.constant dense<0.000000e+00> : vector<64x64xf32>
    %67 = tpu.matmul %65, %66, %cst_23 {dimension_numbers = #tpu.dot_dimension_numbers<[1], [1], [0], [0], [0, 0, 1, 0], [], []>} : vector<64x8xbf16>, vector<64x8xbf16>, vector<64x64xf32> -> vector<64x64xf32>
    %68 = vector.extract_strided_slice %64 {offsets = [0, 8], sizes = [64, 8], strides = [1, 1]} : vector<64x96xbf16> to vector<64x8xbf16>
    %69 = vector.extract_strided_slice %64 {offsets = [0, 40], sizes = [64, 8], strides = [1, 1]} : vector<64x96xbf16> to vector<64x8xbf16>
    %cst_24 = arith.constant dense<0.000000e+00> : vector<64x64xf32>
    %70 = tpu.matmul %68, %69, %cst_24 {dimension_numbers = #tpu.dot_dimension_numbers<[1], [1], [0], [0], [0, 0, 1, 0], [], []>} : vector<64x8xbf16>, vector<64x8xbf16>, vector<64x64xf32> -> vector<64x64xf32>
    %71 = vector.extract_strided_slice %64 {offsets = [0, 16], sizes = [64, 8], strides = [1, 1]} : vector<64x96xbf16> to vector<64x8xbf16>
    %72 = vector.extract_strided_slice %64 {offsets = [0, 48], sizes = [64, 8], strides = [1, 1]} : vector<64x96xbf16> to vector<64x8xbf16>
    %cst_25 = arith.constant dense<0.000000e+00> : vector<64x64xf32>
    %73 = tpu.matmul %71, %72, %cst_25 {dimension_numbers = #tpu.dot_dimension_numbers<[1], [1], [0], [0], [0, 0, 1, 0], [], []>} : vector<64x8xbf16>, vector<64x8xbf16>, vector<64x64xf32> -> vector<64x64xf32>
    %74 = vector.extract_strided_slice %64 {offsets = [0, 24], sizes = [64, 8], strides = [1, 1]} : vector<64x96xbf16> to vector<64x8xbf16>
    %75 = vector.extract_strided_slice %64 {offsets = [0, 56], sizes = [64, 8], strides = [1, 1]} : vector<64x96xbf16> to vector<64x8xbf16>
    %cst_26 = arith.constant dense<0.000000e+00> : vector<64x64xf32>
    %76 = tpu.matmul %74, %75, %cst_26 {dimension_numbers = #tpu.dot_dimension_numbers<[1], [1], [0], [0], [0, 0, 1, 0], [], []>} : vector<64x8xbf16>, vector<64x8xbf16>, vector<64x64xf32> -> vector<64x64xf32>
    %77 = vector.shape_cast %67 : vector<64x64xf32> to vector<1x64x64xf32>
    %78 = vector.shape_cast %70 : vector<64x64xf32> to vector<1x64x64xf32>
    %79 = vector.shape_cast %73 : vector<64x64xf32> to vector<1x64x64xf32>
    %80 = vector.shape_cast %76 : vector<64x64xf32> to vector<1x64x64xf32>
    %81 = tpu.concatenate %77, %78, %79, %80 in 0 : vector<1x64x64xf32>, vector<1x64x64xf32>, vector<1x64x64xf32>, vector<1x64x64xf32> -> vector<4x64x64xf32>
    %cst_27 = arith.constant dense<0xFF800000> : vector<4x64xf32>
    %82 = vector.multi_reduction <maximumf>, %81, %cst_27 [2] : vector<4x64x64xf32> to vector<4x64xf32>
    %83 = vector.shape_cast %82 : vector<4x64xf32> to vector<4x64x1xf32>
    %84 = vector.broadcast %83 : vector<4x64x1xf32> to vector<4x64x64xf32>
    %85 = arith.subf %81, %84 : vector<4x64x64xf32>
    %86 = math.exp %85 : vector<4x64x64xf32>
    %cst_28 = arith.constant dense<0.000000e+00> : vector<4x64xf32>
    %87 = vector.multi_reduction <add>, %86, %cst_28 [2] : vector<4x64x64xf32> to vector<4x64xf32>
    %88 = vector.shape_cast %87 : vector<4x64xf32> to vector<4x64x1xf32>
    %89 = tpu.reciprocal %88 {approx = true} : vector<4x64x1xf32> -> vector<4x64x1xf32>
    %90 = vector.broadcast %89 : vector<4x64x1xf32> to vector<4x64x64xf32>
    %91 = arith.mulf %86, %90 : vector<4x64x64xf32>
    %92 = arith.truncf %91 : vector<4x64x64xf32> to vector<4x64x64xbf16>
    %93 = vector.extract_strided_slice %92 {offsets = [0, 0, 0], sizes = [1, 64, 64], strides = [1, 1, 1]} : vector<4x64x64xbf16> to vector<1x64x64xbf16>
    %94 = vector.shape_cast %93 : vector<1x64x64xbf16> to vector<64x64xbf16>
    %95 = vector.extract_strided_slice %64 {offsets = [0, 64], sizes = [64, 8], strides = [1, 1]} : vector<64x96xbf16> to vector<64x8xbf16>
    %cst_29 = arith.constant dense<0.000000e+00> : vector<64x8xf32>
    %96 = tpu.matmul %94, %95, %cst_29 {dimension_numbers = #tpu.dot_dimension_numbers<[1], [0], [0], [1], [0, 0, 1, 1], [], []>} : vector<64x64xbf16>, vector<64x8xbf16>, vector<64x8xf32> -> vector<64x8xf32>
    %97 = vector.extract_strided_slice %92 {offsets = [1, 0, 0], sizes = [1, 64, 64], strides = [1, 1, 1]} : vector<4x64x64xbf16> to vector<1x64x64xbf16>
    %98 = vector.shape_cast %97 : vector<1x64x64xbf16> to vector<64x64xbf16>
    %99 = vector.extract_strided_slice %64 {offsets = [0, 72], sizes = [64, 8], strides = [1, 1]} : vector<64x96xbf16> to vector<64x8xbf16>
    %cst_30 = arith.constant dense<0.000000e+00> : vector<64x8xf32>
    %100 = tpu.matmul %98, %99, %cst_30 {dimension_numbers = #tpu.dot_dimension_numbers<[1], [0], [0], [1], [0, 0, 1, 1], [], []>} : vector<64x64xbf16>, vector<64x8xbf16>, vector<64x8xf32> -> vector<64x8xf32>
    %101 = vector.extract_strided_slice %92 {offsets = [2, 0, 0], sizes = [1, 64, 64], strides = [1, 1, 1]} : vector<4x64x64xbf16> to vector<1x64x64xbf16>
    %102 = vector.shape_cast %101 : vector<1x64x64xbf16> to vector<64x64xbf16>
    %103 = vector.extract_strided_slice %64 {offsets = [0, 80], sizes = [64, 8], strides = [1, 1]} : vector<64x96xbf16> to vector<64x8xbf16>
    %cst_31 = arith.constant dense<0.000000e+00> : vector<64x8xf32>
    %104 = tpu.matmul %102, %103, %cst_31 {dimension_numbers = #tpu.dot_dimension_numbers<[1], [0], [0], [1], [0, 0, 1, 1], [], []>} : vector<64x64xbf16>, vector<64x8xbf16>, vector<64x8xf32> -> vector<64x8xf32>
    %105 = vector.extract_strided_slice %92 {offsets = [3, 0, 0], sizes = [1, 64, 64], strides = [1, 1, 1]} : vector<4x64x64xbf16> to vector<1x64x64xbf16>
    %106 = vector.shape_cast %105 : vector<1x64x64xbf16> to vector<64x64xbf16>
    %107 = vector.extract_strided_slice %64 {offsets = [0, 88], sizes = [64, 8], strides = [1, 1]} : vector<64x96xbf16> to vector<64x8xbf16>
    %cst_32 = arith.constant dense<0.000000e+00> : vector<64x8xf32>
    %108 = tpu.matmul %106, %107, %cst_32 {dimension_numbers = #tpu.dot_dimension_numbers<[1], [0], [0], [1], [0, 0, 1, 1], [], []>} : vector<64x64xbf16>, vector<64x8xbf16>, vector<64x8xf32> -> vector<64x8xf32>
    %109 = tpu.concatenate %96, %100, %104, %108 in 1 : vector<64x8xf32>, vector<64x8xf32>, vector<64x8xf32>, vector<64x8xf32> -> vector<64x32xf32>
    %110 = tpu.concatenate %63, %109 in 0 : vector<64x32xf32>, vector<64x32xf32> -> vector<128x32xf32>
    %111 = arith.truncf %110 : vector<128x32xf32> to vector<128x32xbf16>
    %c0_33 = arith.constant 0 : index
    %c0_34 = arith.constant 0 : index
    %c0_35 = arith.constant 0 : index
    %112 = vector.load %arg6[%c0_33, %c0_34, %c0_35] : memref<2x32x32xbf16, #tpu.memory_space<vmem>>, vector<1x32x32xbf16>
    %113 = vector.shape_cast %112 : vector<1x32x32xbf16> to vector<32x32xbf16>
    %cst_36 = arith.constant dense<0.000000e+00> : vector<128x32xf32>
    %114 = tpu.matmul %111, %113, %cst_36 {dimension_numbers = #tpu.dot_dimension_numbers<[1], [0], [0], [1], [0, 0, 1, 1], [], []>} : vector<128x32xbf16>, vector<32x32xbf16>, vector<128x32xf32> -> vector<128x32xf32>
    %c0_37 = arith.constant 0 : index
    %c0_38 = arith.constant 0 : index
    %c0_39 = arith.constant 0 : index
    %115 = vector.load %arg7[%c0_37, %c0_38, %c0_39] : memref<2x1x32xf32, #tpu.memory_space<vmem>>, vector<1x1x32xf32>
    %116 = vector.shape_cast %115 : vector<1x1x32xf32> to vector<1x32xf32>
    %117 = vector.broadcast %116 : vector<1x32xf32> to vector<128x32xf32>
    %118 = arith.addf %114, %117 : vector<128x32xf32>
    %119 = arith.addf %118, %8 : vector<128x32xf32>
    %120 = arith.truncf %119 : vector<128x32xf32> to vector<128x32xbf16>
    %c0_40 = arith.constant 0 : index
    %c0_41 = arith.constant 0 : index
    %c0_42 = arith.constant 0 : index
    %121 = vector.load %arg8[%c0_40, %c0_41, %c0_42] : memref<2x32x32xbf16, #tpu.memory_space<vmem>>, vector<1x32x32xbf16>
    %122 = vector.shape_cast %121 : vector<1x32x32xbf16> to vector<32x32xbf16>
    %cst_43 = arith.constant dense<0.000000e+00> : vector<128x32xf32>
    %123 = tpu.matmul %120, %122, %cst_43 {dimension_numbers = #tpu.dot_dimension_numbers<[1], [0], [0], [1], [0, 0, 1, 1], [], []>} : vector<128x32xbf16>, vector<32x32xbf16>, vector<128x32xf32> -> vector<128x32xf32>
    %124 = arith.addf %123, %119 : vector<128x32xf32>
    %125 = arith.truncf %124 : vector<128x32xf32> to vector<128x32xbf16>
    %c1 = arith.constant 1 : index
    %c0_44 = arith.constant 0 : index
    %c0_45 = arith.constant 0 : index
    %126 = vector.load %arg4[%c1, %c0_44, %c0_45] : memref<2x32x96xbf16, #tpu.memory_space<vmem>>, vector<1x32x96xbf16>
    %127 = vector.shape_cast %126 : vector<1x32x96xbf16> to vector<32x96xbf16>
    %cst_46 = arith.constant dense<0.000000e+00> : vector<128x96xf32>
    %128 = tpu.matmul %125, %127, %cst_46 {dimension_numbers = #tpu.dot_dimension_numbers<[1], [0], [0], [1], [0, 0, 1, 1], [], []>} : vector<128x32xbf16>, vector<32x96xbf16>, vector<128x96xf32> -> vector<128x96xf32>
    %c1_47 = arith.constant 1 : index
    %c0_48 = arith.constant 0 : index
    %c0_49 = arith.constant 0 : index
    %129 = vector.load %arg5[%c1_47, %c0_48, %c0_49] : memref<2x1x96xf32, #tpu.memory_space<vmem>>, vector<1x1x96xf32>
    %130 = vector.shape_cast %129 : vector<1x1x96xf32> to vector<1x96xf32>
    %131 = vector.broadcast %130 : vector<1x96xf32> to vector<128x96xf32>
    %132 = arith.addf %128, %131 : vector<128x96xf32>
    %133 = arith.truncf %132 : vector<128x96xf32> to vector<128x96xbf16>
    %134 = vector.extract_strided_slice %133 {offsets = [0, 0], sizes = [64, 96], strides = [1, 1]} : vector<128x96xbf16> to vector<64x96xbf16>
    %135 = vector.extract_strided_slice %134 {offsets = [0, 0], sizes = [64, 8], strides = [1, 1]} : vector<64x96xbf16> to vector<64x8xbf16>
    %136 = vector.extract_strided_slice %134 {offsets = [0, 32], sizes = [64, 8], strides = [1, 1]} : vector<64x96xbf16> to vector<64x8xbf16>
    %cst_50 = arith.constant dense<0.000000e+00> : vector<64x64xf32>
    %137 = tpu.matmul %135, %136, %cst_50 {dimension_numbers = #tpu.dot_dimension_numbers<[1], [1], [0], [0], [0, 0, 1, 0], [], []>} : vector<64x8xbf16>, vector<64x8xbf16>, vector<64x64xf32> -> vector<64x64xf32>
    %138 = vector.extract_strided_slice %134 {offsets = [0, 8], sizes = [64, 8], strides = [1, 1]} : vector<64x96xbf16> to vector<64x8xbf16>
    %139 = vector.extract_strided_slice %134 {offsets = [0, 40], sizes = [64, 8], strides = [1, 1]} : vector<64x96xbf16> to vector<64x8xbf16>
    %cst_51 = arith.constant dense<0.000000e+00> : vector<64x64xf32>
    %140 = tpu.matmul %138, %139, %cst_51 {dimension_numbers = #tpu.dot_dimension_numbers<[1], [1], [0], [0], [0, 0, 1, 0], [], []>} : vector<64x8xbf16>, vector<64x8xbf16>, vector<64x64xf32> -> vector<64x64xf32>
    %141 = vector.extract_strided_slice %134 {offsets = [0, 16], sizes = [64, 8], strides = [1, 1]} : vector<64x96xbf16> to vector<64x8xbf16>
    %142 = vector.extract_strided_slice %134 {offsets = [0, 48], sizes = [64, 8], strides = [1, 1]} : vector<64x96xbf16> to vector<64x8xbf16>
    %cst_52 = arith.constant dense<0.000000e+00> : vector<64x64xf32>
    %143 = tpu.matmul %141, %142, %cst_52 {dimension_numbers = #tpu.dot_dimension_numbers<[1], [1], [0], [0], [0, 0, 1, 0], [], []>} : vector<64x8xbf16>, vector<64x8xbf16>, vector<64x64xf32> -> vector<64x64xf32>
    %144 = vector.extract_strided_slice %134 {offsets = [0, 24], sizes = [64, 8], strides = [1, 1]} : vector<64x96xbf16> to vector<64x8xbf16>
    %145 = vector.extract_strided_slice %134 {offsets = [0, 56], sizes = [64, 8], strides = [1, 1]} : vector<64x96xbf16> to vector<64x8xbf16>
    %cst_53 = arith.constant dense<0.000000e+00> : vector<64x64xf32>
    %146 = tpu.matmul %144, %145, %cst_53 {dimension_numbers = #tpu.dot_dimension_numbers<[1], [1], [0], [0], [0, 0, 1, 0], [], []>} : vector<64x8xbf16>, vector<64x8xbf16>, vector<64x64xf32> -> vector<64x64xf32>
    %147 = vector.shape_cast %137 : vector<64x64xf32> to vector<1x64x64xf32>
    %148 = vector.shape_cast %140 : vector<64x64xf32> to vector<1x64x64xf32>
    %149 = vector.shape_cast %143 : vector<64x64xf32> to vector<1x64x64xf32>
    %150 = vector.shape_cast %146 : vector<64x64xf32> to vector<1x64x64xf32>
    %151 = tpu.concatenate %147, %148, %149, %150 in 0 : vector<1x64x64xf32>, vector<1x64x64xf32>, vector<1x64x64xf32>, vector<1x64x64xf32> -> vector<4x64x64xf32>
    %cst_54 = arith.constant dense<0xFF800000> : vector<4x64xf32>
    %152 = vector.multi_reduction <maximumf>, %151, %cst_54 [2] : vector<4x64x64xf32> to vector<4x64xf32>
    %153 = vector.shape_cast %152 : vector<4x64xf32> to vector<4x64x1xf32>
    %154 = vector.broadcast %153 : vector<4x64x1xf32> to vector<4x64x64xf32>
    %155 = arith.subf %151, %154 : vector<4x64x64xf32>
    %156 = math.exp %155 : vector<4x64x64xf32>
    %cst_55 = arith.constant dense<0.000000e+00> : vector<4x64xf32>
    %157 = vector.multi_reduction <add>, %156, %cst_55 [2] : vector<4x64x64xf32> to vector<4x64xf32>
    %158 = vector.shape_cast %157 : vector<4x64xf32> to vector<4x64x1xf32>
    %159 = tpu.reciprocal %158 {approx = true} : vector<4x64x1xf32> -> vector<4x64x1xf32>
    %160 = vector.broadcast %159 : vector<4x64x1xf32> to vector<4x64x64xf32>
    %161 = arith.mulf %156, %160 : vector<4x64x64xf32>
    %162 = arith.truncf %161 : vector<4x64x64xf32> to vector<4x64x64xbf16>
    %163 = vector.extract_strided_slice %162 {offsets = [0, 0, 0], sizes = [1, 64, 64], strides = [1, 1, 1]} : vector<4x64x64xbf16> to vector<1x64x64xbf16>
    %164 = vector.shape_cast %163 : vector<1x64x64xbf16> to vector<64x64xbf16>
    %165 = vector.extract_strided_slice %134 {offsets = [0, 64], sizes = [64, 8], strides = [1, 1]} : vector<64x96xbf16> to vector<64x8xbf16>
    %cst_56 = arith.constant dense<0.000000e+00> : vector<64x8xf32>
    %166 = tpu.matmul %164, %165, %cst_56 {dimension_numbers = #tpu.dot_dimension_numbers<[1], [0], [0], [1], [0, 0, 1, 1], [], []>} : vector<64x64xbf16>, vector<64x8xbf16>, vector<64x8xf32> -> vector<64x8xf32>
    %167 = vector.extract_strided_slice %162 {offsets = [1, 0, 0], sizes = [1, 64, 64], strides = [1, 1, 1]} : vector<4x64x64xbf16> to vector<1x64x64xbf16>
    %168 = vector.shape_cast %167 : vector<1x64x64xbf16> to vector<64x64xbf16>
    %169 = vector.extract_strided_slice %134 {offsets = [0, 72], sizes = [64, 8], strides = [1, 1]} : vector<64x96xbf16> to vector<64x8xbf16>
    %cst_57 = arith.constant dense<0.000000e+00> : vector<64x8xf32>
    %170 = tpu.matmul %168, %169, %cst_57 {dimension_numbers = #tpu.dot_dimension_numbers<[1], [0], [0], [1], [0, 0, 1, 1], [], []>} : vector<64x64xbf16>, vector<64x8xbf16>, vector<64x8xf32> -> vector<64x8xf32>
    %171 = vector.extract_strided_slice %162 {offsets = [2, 0, 0], sizes = [1, 64, 64], strides = [1, 1, 1]} : vector<4x64x64xbf16> to vector<1x64x64xbf16>
    %172 = vector.shape_cast %171 : vector<1x64x64xbf16> to vector<64x64xbf16>
    %173 = vector.extract_strided_slice %134 {offsets = [0, 80], sizes = [64, 8], strides = [1, 1]} : vector<64x96xbf16> to vector<64x8xbf16>
    %cst_58 = arith.constant dense<0.000000e+00> : vector<64x8xf32>
    %174 = tpu.matmul %172, %173, %cst_58 {dimension_numbers = #tpu.dot_dimension_numbers<[1], [0], [0], [1], [0, 0, 1, 1], [], []>} : vector<64x64xbf16>, vector<64x8xbf16>, vector<64x8xf32> -> vector<64x8xf32>
    %175 = vector.extract_strided_slice %162 {offsets = [3, 0, 0], sizes = [1, 64, 64], strides = [1, 1, 1]} : vector<4x64x64xbf16> to vector<1x64x64xbf16>
    %176 = vector.shape_cast %175 : vector<1x64x64xbf16> to vector<64x64xbf16>
    %177 = vector.extract_strided_slice %134 {offsets = [0, 88], sizes = [64, 8], strides = [1, 1]} : vector<64x96xbf16> to vector<64x8xbf16>
    %cst_59 = arith.constant dense<0.000000e+00> : vector<64x8xf32>
    %178 = tpu.matmul %176, %177, %cst_59 {dimension_numbers = #tpu.dot_dimension_numbers<[1], [0], [0], [1], [0, 0, 1, 1], [], []>} : vector<64x64xbf16>, vector<64x8xbf16>, vector<64x8xf32> -> vector<64x8xf32>
    %179 = tpu.concatenate %166, %170, %174, %178 in 1 : vector<64x8xf32>, vector<64x8xf32>, vector<64x8xf32>, vector<64x8xf32> -> vector<64x32xf32>
    %180 = vector.extract_strided_slice %133 {offsets = [64, 0], sizes = [64, 96], strides = [1, 1]} : vector<128x96xbf16> to vector<64x96xbf16>
    %181 = vector.extract_strided_slice %180 {offsets = [0, 0], sizes = [64, 8], strides = [1, 1]} : vector<64x96xbf16> to vector<64x8xbf16>
    %182 = vector.extract_strided_slice %180 {offsets = [0, 32], sizes = [64, 8], strides = [1, 1]} : vector<64x96xbf16> to vector<64x8xbf16>
    %cst_60 = arith.constant dense<0.000000e+00> : vector<64x64xf32>
    %183 = tpu.matmul %181, %182, %cst_60 {dimension_numbers = #tpu.dot_dimension_numbers<[1], [1], [0], [0], [0, 0, 1, 0], [], []>} : vector<64x8xbf16>, vector<64x8xbf16>, vector<64x64xf32> -> vector<64x64xf32>
    %184 = vector.extract_strided_slice %180 {offsets = [0, 8], sizes = [64, 8], strides = [1, 1]} : vector<64x96xbf16> to vector<64x8xbf16>
    %185 = vector.extract_strided_slice %180 {offsets = [0, 40], sizes = [64, 8], strides = [1, 1]} : vector<64x96xbf16> to vector<64x8xbf16>
    %cst_61 = arith.constant dense<0.000000e+00> : vector<64x64xf32>
    %186 = tpu.matmul %184, %185, %cst_61 {dimension_numbers = #tpu.dot_dimension_numbers<[1], [1], [0], [0], [0, 0, 1, 0], [], []>} : vector<64x8xbf16>, vector<64x8xbf16>, vector<64x64xf32> -> vector<64x64xf32>
    %187 = vector.extract_strided_slice %180 {offsets = [0, 16], sizes = [64, 8], strides = [1, 1]} : vector<64x96xbf16> to vector<64x8xbf16>
    %188 = vector.extract_strided_slice %180 {offsets = [0, 48], sizes = [64, 8], strides = [1, 1]} : vector<64x96xbf16> to vector<64x8xbf16>
    %cst_62 = arith.constant dense<0.000000e+00> : vector<64x64xf32>
    %189 = tpu.matmul %187, %188, %cst_62 {dimension_numbers = #tpu.dot_dimension_numbers<[1], [1], [0], [0], [0, 0, 1, 0], [], []>} : vector<64x8xbf16>, vector<64x8xbf16>, vector<64x64xf32> -> vector<64x64xf32>
    %190 = vector.extract_strided_slice %180 {offsets = [0, 24], sizes = [64, 8], strides = [1, 1]} : vector<64x96xbf16> to vector<64x8xbf16>
    %191 = vector.extract_strided_slice %180 {offsets = [0, 56], sizes = [64, 8], strides = [1, 1]} : vector<64x96xbf16> to vector<64x8xbf16>
    %cst_63 = arith.constant dense<0.000000e+00> : vector<64x64xf32>
    %192 = tpu.matmul %190, %191, %cst_63 {dimension_numbers = #tpu.dot_dimension_numbers<[1], [1], [0], [0], [0, 0, 1, 0], [], []>} : vector<64x8xbf16>, vector<64x8xbf16>, vector<64x64xf32> -> vector<64x64xf32>
    %193 = vector.shape_cast %183 : vector<64x64xf32> to vector<1x64x64xf32>
    %194 = vector.shape_cast %186 : vector<64x64xf32> to vector<1x64x64xf32>
    %195 = vector.shape_cast %189 : vector<64x64xf32> to vector<1x64x64xf32>
    %196 = vector.shape_cast %192 : vector<64x64xf32> to vector<1x64x64xf32>
    %197 = tpu.concatenate %193, %194, %195, %196 in 0 : vector<1x64x64xf32>, vector<1x64x64xf32>, vector<1x64x64xf32>, vector<1x64x64xf32> -> vector<4x64x64xf32>
    %cst_64 = arith.constant dense<0xFF800000> : vector<4x64xf32>
    %198 = vector.multi_reduction <maximumf>, %197, %cst_64 [2] : vector<4x64x64xf32> to vector<4x64xf32>
    %199 = vector.shape_cast %198 : vector<4x64xf32> to vector<4x64x1xf32>
    %200 = vector.broadcast %199 : vector<4x64x1xf32> to vector<4x64x64xf32>
    %201 = arith.subf %197, %200 : vector<4x64x64xf32>
    %202 = math.exp %201 : vector<4x64x64xf32>
    %cst_65 = arith.constant dense<0.000000e+00> : vector<4x64xf32>
    %203 = vector.multi_reduction <add>, %202, %cst_65 [2] : vector<4x64x64xf32> to vector<4x64xf32>
    %204 = vector.shape_cast %203 : vector<4x64xf32> to vector<4x64x1xf32>
    %205 = tpu.reciprocal %204 {approx = true} : vector<4x64x1xf32> -> vector<4x64x1xf32>
    %206 = vector.broadcast %205 : vector<4x64x1xf32> to vector<4x64x64xf32>
    %207 = arith.mulf %202, %206 : vector<4x64x64xf32>
    %208 = arith.truncf %207 : vector<4x64x64xf32> to vector<4x64x64xbf16>
    %209 = vector.extract_strided_slice %208 {offsets = [0, 0, 0], sizes = [1, 64, 64], strides = [1, 1, 1]} : vector<4x64x64xbf16> to vector<1x64x64xbf16>
    %210 = vector.shape_cast %209 : vector<1x64x64xbf16> to vector<64x64xbf16>
    %211 = vector.extract_strided_slice %180 {offsets = [0, 64], sizes = [64, 8], strides = [1, 1]} : vector<64x96xbf16> to vector<64x8xbf16>
    %cst_66 = arith.constant dense<0.000000e+00> : vector<64x8xf32>
    %212 = tpu.matmul %210, %211, %cst_66 {dimension_numbers = #tpu.dot_dimension_numbers<[1], [0], [0], [1], [0, 0, 1, 1], [], []>} : vector<64x64xbf16>, vector<64x8xbf16>, vector<64x8xf32> -> vector<64x8xf32>
    %213 = vector.extract_strided_slice %208 {offsets = [1, 0, 0], sizes = [1, 64, 64], strides = [1, 1, 1]} : vector<4x64x64xbf16> to vector<1x64x64xbf16>
    %214 = vector.shape_cast %213 : vector<1x64x64xbf16> to vector<64x64xbf16>
    %215 = vector.extract_strided_slice %180 {offsets = [0, 72], sizes = [64, 8], strides = [1, 1]} : vector<64x96xbf16> to vector<64x8xbf16>
    %cst_67 = arith.constant dense<0.000000e+00> : vector<64x8xf32>
    %216 = tpu.matmul %214, %215, %cst_67 {dimension_numbers = #tpu.dot_dimension_numbers<[1], [0], [0], [1], [0, 0, 1, 1], [], []>} : vector<64x64xbf16>, vector<64x8xbf16>, vector<64x8xf32> -> vector<64x8xf32>
    %217 = vector.extract_strided_slice %208 {offsets = [2, 0, 0], sizes = [1, 64, 64], strides = [1, 1, 1]} : vector<4x64x64xbf16> to vector<1x64x64xbf16>
    %218 = vector.shape_cast %217 : vector<1x64x64xbf16> to vector<64x64xbf16>
    %219 = vector.extract_strided_slice %180 {offsets = [0, 80], sizes = [64, 8], strides = [1, 1]} : vector<64x96xbf16> to vector<64x8xbf16>
    %cst_68 = arith.constant dense<0.000000e+00> : vector<64x8xf32>
    %220 = tpu.matmul %218, %219, %cst_68 {dimension_numbers = #tpu.dot_dimension_numbers<[1], [0], [0], [1], [0, 0, 1, 1], [], []>} : vector<64x64xbf16>, vector<64x8xbf16>, vector<64x8xf32> -> vector<64x8xf32>
    %221 = vector.extract_strided_slice %208 {offsets = [3, 0, 0], sizes = [1, 64, 64], strides = [1, 1, 1]} : vector<4x64x64xbf16> to vector<1x64x64xbf16>
    %222 = vector.shape_cast %221 : vector<1x64x64xbf16> to vector<64x64xbf16>
    %223 = vector.extract_strided_slice %180 {offsets = [0, 88], sizes = [64, 8], strides = [1, 1]} : vector<64x96xbf16> to vector<64x8xbf16>
    %cst_69 = arith.constant dense<0.000000e+00> : vector<64x8xf32>
    %224 = tpu.matmul %222, %223, %cst_69 {dimension_numbers = #tpu.dot_dimension_numbers<[1], [0], [0], [1], [0, 0, 1, 1], [], []>} : vector<64x64xbf16>, vector<64x8xbf16>, vector<64x8xf32> -> vector<64x8xf32>
    %225 = tpu.concatenate %212, %216, %220, %224 in 1 : vector<64x8xf32>, vector<64x8xf32>, vector<64x8xf32>, vector<64x8xf32> -> vector<64x32xf32>
    %226 = tpu.concatenate %179, %225 in 0 : vector<64x32xf32>, vector<64x32xf32> -> vector<128x32xf32>
    %227 = arith.truncf %226 : vector<128x32xf32> to vector<128x32xbf16>
    %c1_70 = arith.constant 1 : index
    %c0_71 = arith.constant 0 : index
    %c0_72 = arith.constant 0 : index
    %228 = vector.load %arg6[%c1_70, %c0_71, %c0_72] : memref<2x32x32xbf16, #tpu.memory_space<vmem>>, vector<1x32x32xbf16>
    %229 = vector.shape_cast %228 : vector<1x32x32xbf16> to vector<32x32xbf16>
    %cst_73 = arith.constant dense<0.000000e+00> : vector<128x32xf32>
    %230 = tpu.matmul %227, %229, %cst_73 {dimension_numbers = #tpu.dot_dimension_numbers<[1], [0], [0], [1], [0, 0, 1, 1], [], []>} : vector<128x32xbf16>, vector<32x32xbf16>, vector<128x32xf32> -> vector<128x32xf32>
    %c1_74 = arith.constant 1 : index
    %c0_75 = arith.constant 0 : index
    %c0_76 = arith.constant 0 : index
    %231 = vector.load %arg7[%c1_74, %c0_75, %c0_76] : memref<2x1x32xf32, #tpu.memory_space<vmem>>, vector<1x1x32xf32>
    %232 = vector.shape_cast %231 : vector<1x1x32xf32> to vector<1x32xf32>
    %233 = vector.broadcast %232 : vector<1x32xf32> to vector<128x32xf32>
    %234 = arith.addf %230, %233 : vector<128x32xf32>
    %235 = arith.addf %234, %124 : vector<128x32xf32>
    %236 = arith.truncf %235 : vector<128x32xf32> to vector<128x32xbf16>
    %c1_77 = arith.constant 1 : index
    %c0_78 = arith.constant 0 : index
    %c0_79 = arith.constant 0 : index
    %237 = vector.load %arg8[%c1_77, %c0_78, %c0_79] : memref<2x32x32xbf16, #tpu.memory_space<vmem>>, vector<1x32x32xbf16>
    %238 = vector.shape_cast %237 : vector<1x32x32xbf16> to vector<32x32xbf16>
    %cst_80 = arith.constant dense<0.000000e+00> : vector<128x32xf32>
    %239 = tpu.matmul %236, %238, %cst_80 {dimension_numbers = #tpu.dot_dimension_numbers<[1], [0], [0], [1], [0, 0, 1, 1], [], []>} : vector<128x32xbf16>, vector<32x32xbf16>, vector<128x32xf32> -> vector<128x32xf32>
    %240 = arith.addf %239, %235 : vector<128x32xf32>
    %241 = vector.shape_cast %240 : vector<128x32xf32> to vector<2x64x32xf32>
    %c0_81 = arith.constant 0 : index
    %c0_82 = arith.constant 0 : index
    %c0_83 = arith.constant 0 : index
    %242 = vector.load %arg9[%c0_81, %c0_82, %c0_83] : memref<2x64x32xf32, #tpu.memory_space<vmem>>, vector<2x64x32xf32>
    tpu.vector_store %arg9[%c0_81, %c0_82, %c0_83], %241 {strides = array<i32>} : memref<2x64x32xf32, #tpu.memory_space<vmem>>, vector<2x64x32xf32>,
    return
  }
  func.func @transform_0(%arg0: i32) -> (i32, i32, i32) {
    %c0_i32 = arith.constant 0 : i32
    %c0_i32_0 = arith.constant 0 : i32
    %c0_i32_1 = arith.constant 0 : i32
    return %arg0, %c0_i32, %c0_i32_0 : i32, i32, i32
  }
  func.func @transform_1(%arg0: i32) -> (i32, i32) {
    %c0_i32 = arith.constant 0 : i32
    %c0_i32_0 = arith.constant 0 : i32
    %c0_i32_1 = arith.constant 0 : i32
    return %c0_i32, %c0_i32_0 : i32, i32
  }
  func.func @transform_2(%arg0: i32) -> (i32, i32) {
    %c0_i32 = arith.constant 0 : i32
    %c0_i32_0 = arith.constant 0 : i32
    %c0_i32_1 = arith.constant 0 : i32
    return %c0_i32, %c0_i32_0 : i32, i32
  }
  func.func @transform_3(%arg0: i32) -> (i32, i32, i32) {
    %c0_i32 = arith.constant 0 : i32
    %c0_i32_0 = arith.constant 0 : i32
    %c0_i32_1 = arith.constant 0 : i32
    %c0_i32_2 = arith.constant 0 : i32
    return %c0_i32, %c0_i32_0, %c0_i32_1 : i32, i32, i32
  }
  func.func @transform_4(%arg0: i32) -> (i32, i32, i32) {
    %c0_i32 = arith.constant 0 : i32
    %c0_i32_0 = arith.constant 0 : i32
    %c0_i32_1 = arith.constant 0 : i32
    %c0_i32_2 = arith.constant 0 : i32
    return %c0_i32, %c0_i32_0, %c0_i32_1 : i32, i32, i32
  }
  func.func @transform_5(%arg0: i32) -> (i32, i32, i32) {
    %c0_i32 = arith.constant 0 : i32
    %c0_i32_0 = arith.constant 0 : i32
    %c0_i32_1 = arith.constant 0 : i32
    %c0_i32_2 = arith.constant 0 : i32
    return %c0_i32, %c0_i32_0, %c0_i32_1 : i32, i32, i32
  }
  func.func @transform_6(%arg0: i32) -> (i32, i32, i32) {
    %c0_i32 = arith.constant 0 : i32
    %c0_i32_0 = arith.constant 0 : i32
    %c0_i32_1 = arith.constant 0 : i32
    %c0_i32_2 = arith.constant 0 : i32
    return %c0_i32, %c0_i32_0, %c0_i32_1 : i32, i32, i32
  }
  func.func @transform_7(%arg0: i32) -> (i32, i32, i32) {
    %c0_i32 = arith.constant 0 : i32
    %c0_i32_0 = arith.constant 0 : i32
    %c0_i32_1 = arith.constant 0 : i32
    %c0_i32_2 = arith.constant 0 : i32
    return %c0_i32, %c0_i32_0, %c0_i32_1 : i32, i32, i32
  }
  func.func @transform_8(%arg0: i32) -> (i32, i32, i32) {
    %c0_i32 = arith.constant 0 : i32
    %c0_i32_0 = arith.constant 0 : i32
    %c0_i32_1 = arith.constant 0 : i32
    return %arg0, %c0_i32, %c0_i32_0 : i32, i32, i32
  }
}

</mosaic_0001>

<llo_original>
// kernel: tpu_custom_call.1
$region0: #{tpu_custom_call.1}
  #allocation0 [shape = 'u32[]', space=smem, size = 0x4, offset = 0x4, fixed_abs, tag = 'smem constant byte address 0x4 - core index']
  #allocation1 [shape = 'u32[144,128]{1,0:T(1,128)}', space=vmem, size = 0x12000, scoped, tag = 'internal scratch']
  %s0 = inlined_call_operand.vmem [shape: f32[2,64,32], index: 0, kind: input, shape index: {}]
  %s1 = inlined_call_operand.vmem [shape: bf16[32,32], index: 1, kind: input, shape index: {}]
  %s2 = inlined_call_operand.vmem [shape: f32[1,32], index: 2, kind: input, shape index: {}]
  %s3 = inlined_call_operand.vmem [shape: bf16[2,32,96], index: 3, kind: input, shape index: {}]
  %s4 = inlined_call_operand.vmem [shape: f32[2,1,96], index: 4, kind: input, shape index: {}]
  %s5 = inlined_call_operand.vmem [shape: bf16[2,32,32], index: 5, kind: input, shape index: {}]
  %s6 = inlined_call_operand.vmem [shape: f32[2,1,32], index: 6, kind: input, shape index: {}]
  %s7 = inlined_call_operand.vmem [shape: bf16[2,32,32], index: 7, kind: input, shape index: {}]
  %s8 = inlined_call_operand.vmem [shape: f32[2,64,32], index: 8, kind: output, shape index: {}]
  %s9 = sld [smem:[#allocation0]]
  $region42: #{tpu_custom_call.1} parent=0
    _
  %s11 = ssub.s32 1, %s9
  %s12 = scalar_select 0, %s11, %s9
  // Predicated region
  $region2: #{tpu_custom_call.1} parent=0 // pred_check
    _
  $region3: #{tpu_custom_call.1} parent=0 // pred_check_branch
    %14 = sbr.rel (0) target = $region5
  $region4: #{tpu_custom_call.1} parent=0 // pred_region
    _
  $region5: #{tpu_custom_call.1} parent=0 // pred_fallthru
    _
  // Predicated region
  $region6: #{tpu_custom_call.1} parent=0 // pred_check
    _
  $region7: #{tpu_custom_call.1} parent=0 // pred_check_branch
    %16 = sbr.rel (0) target = $region9
  $region8: #{tpu_custom_call.1} parent=0 // pred_region
    _
  $region9: #{tpu_custom_call.1} parent=0 // pred_fallthru
    _
  // Predicated region
  $region10: #{tpu_custom_call.1} parent=0 // pred_check
    _
  $region11: #{tpu_custom_call.1} parent=0 // pred_check_branch
    %18 = sbr.rel (0) target = $region13
  $region12: #{tpu_custom_call.1} parent=0 // pred_region
    _
  $region13: #{tpu_custom_call.1} parent=0 // pred_fallthru
    _
  // Predicated region
  $region14: #{tpu_custom_call.1} parent=0 // pred_check
    _
  $region15: #{tpu_custom_call.1} parent=0 // pred_check_branch
    %20 = sbr.rel (0) target = $region17
  $region16: #{tpu_custom_call.1} parent=0 // pred_region
    _
  $region17: #{tpu_custom_call.1} parent=0 // pred_fallthru
    _
  // Predicated region
  $region18: #{tpu_custom_call.1} parent=0 // pred_check
    _
  $region19: #{tpu_custom_call.1} parent=0 // pred_check_branch
    %22 = sbr.rel (0) target = $region21
  $region20: #{tpu_custom_call.1} parent=0 // pred_region
    _
  $region21: #{tpu_custom_call.1} parent=0 // pred_fallthru
    _
  // Predicated region
  $region22: #{tpu_custom_call.1} parent=0 // pred_check
    _
  $region23: #{tpu_custom_call.1} parent=0 // pred_check_branch
    %24 = sbr.rel (0) target = $region25
  $region24: #{tpu_custom_call.1} parent=0 // pred_region
    _
  $region25: #{tpu_custom_call.1} parent=0 // pred_fallthru
    _
  // Predicated region
  $region26: #{tpu_custom_call.1} parent=0 // pred_check
    _
  $region27: #{tpu_custom_call.1} parent=0 // pred_check_branch
    %26 = sbr.rel (0) target = $region29
  $region28: #{tpu_custom_call.1} parent=0 // pred_region
    _
  $region29: #{tpu_custom_call.1} parent=0 // pred_fallthru
    _
  // Predicated region
  $region30: #{tpu_custom_call.1} parent=0 // pred_check
    _
  $region31: #{tpu_custom_call.1} parent=0 // pred_check_branch
    %28 = sbr.rel (0) target = $region33
  $region32: #{tpu_custom_call.1} parent=0 // pred_region
    _
  $region33: #{tpu_custom_call.1} parent=0 // pred_fallthru
    _
  %v30 = vld [vmem:[%s0] sm:$0xff]
  %v31 = vld [vmem:[%s0 + $0x8] sm:$0xff]
  %v32 = vld [vmem:[%s0 + $0x10] sm:$0xff]
  %v33 = vld [vmem:[%s0 + $0x18] sm:$0xff]
  %v34 = vld [vmem:[%s0 + $0x20] sm:$0xff]
  %v35 = vld [vmem:[%s0 + $0x28] sm:$0xff]
  %v36 = vld [vmem:[%s0 + $0x30] sm:$0xff]
  %v37 = vld [vmem:[%s0 + $0x38] sm:$0xff]
  %v38 = vld [vmem:[%s0 + $0x40] sm:$0xff]
  %v39 = vld [vmem:[%s0 + $0x48] sm:$0xff]
  %v40 = vld [vmem:[%s0 + $0x50] sm:$0xff]
  %v41 = vld [vmem:[%s0 + $0x58] sm:$0xff]
  %v42 = vld [vmem:[%s0 + $0x60] sm:$0xff]
  %v43 = vld [vmem:[%s0 + $0x68] sm:$0xff]
  %v44 = vld [vmem:[%s0 + $0x70] sm:$0xff]
  %v45 = vld [vmem:[%s0 + $0x78] sm:$0xff]
  %v46 = vld [vmem:[%s2] sm:$0x1]
  %v48 = vlaneseq
  %v49 = vshrl.u32 %v48, 7
  %v50 = vsub.s32 0, %v49
  %v51 = vrot.slane %v46, %v50
  %v53 = vadd.f32 %v30, %v51
  %v54 = vadd.f32 %v31, %v51
  %v55 = vadd.f32 %v32, %v51
  %v56 = vadd.f32 %v33, %v51
  %v57 = vadd.f32 %v34, %v51
  %v58 = vadd.f32 %v35, %v51
  %v59 = vadd.f32 %v36, %v51
  %v60 = vadd.f32 %v37, %v51
  %v61 = vadd.f32 %v38, %v51
  %v62 = vadd.f32 %v39, %v51
  %v63 = vadd.f32 %v40, %v51
  %v64 = vadd.f32 %v41, %v51
  %v65 = vadd.f32 %v42, %v51
  %v66 = vadd.f32 %v43, %v51
  %v67 = vadd.f32 %v44, %v51
  %v68 = vadd.f32 %v45, %v51
  %v69 = vpack.c.bf16 %v31, %v30
  %v70 = vpack.c.bf16 %v33, %v32
  %v71 = vpack.c.bf16 %v35, %v34
  %v72 = vpack.c.bf16 %v37, %v36
  %v73 = vpack.c.bf16 %v39, %v38
  %v74 = vpack.c.bf16 %v41, %v40
  %v75 = vpack.c.bf16 %v43, %v42
  %v76 = vpack.c.bf16 %v45, %v44
  %v77 = vld [vmem:[%s1] sm:$0xf]
  %v78 = vld [vmem:[%s1 + $0x4] sm:$0xf]
  %v79 = vld [vmem:[%s1 + $0x8] sm:$0xf]
  %v80 = vld [vmem:[%s1 + $0xc] sm:$0xf]
  %v85 = vunpack.c.l.b16 %v77
  %v86 = vunpack.c.l.b16 %v78
  %v87 = vunpack.c.l.b16 %v79
  %v88 = vunpack.c.l.b16 %v80
  %v89 = vpack.c.b16 %v86, %v85
  %v90 = vpack.c.b16 %v88, %v87
  %vm93 = vcmask 261120
  %v95 = vsel %vm93, %v69, 0
  %v98 = vsel %vm93, %v70, 0
  %v101 = vsel %vm93, %v71, 0
  %v104 = vsel %vm93, %v72, 0
  %v107 = vsel %vm93, %v73, 0
  %v110 = vsel %vm93, %v74, 0
  %v113 = vsel %vm93, %v75, 0
  %v116 = vsel %vm93, %v76, 0
  %118 = vmatprep.subr.bf16.mxu0 0
  %119 = vmatpush1.bf16.msra.mxu0 %v89
  %120 = vmatprep.subr.bf16.mxu0 0
  %121 = vmatpush1.bf16.msra.mxu0 %v90
  %122 = vmatprep.subr.bf16.mxu0 0
  %123 = vmatpush1.bf16.msra.mxu0 0
  %124 = vmatprep.subr.bf16.mxu0 0
  %125 = vmatpush1.bf16.msra.mxu0 0
  %126 = vmatprep.subr.bf16.mxu0 0
  %127 = vmatpush1.bf16.msra.mxu0 0
  %128 = vmatprep.subr.bf16.mxu0 0
  %129 = vmatpush1.bf16.msra.mxu0 0
  %130 = vmatprep.subr.bf16.mxu0 0
  %131 = vmatpush1.bf16.msra.mxu0 0
  %132 = vmatprep.subr.bf16.mxu0 0
  %133 = vmatpush1.bf16.msra.mxu0 0
  %134 = vmatprep.subr.bf16.mxu0 0
  %135 = vmatpush1.bf16.msra.mxu0 0
  %136 = vmatprep.subr.bf16.mxu0 0
  %137 = vmatpush1.bf16.msra.mxu0 0
  %138 = vmatprep.subr.bf16.mxu0 0
  %139 = vmatpush1.bf16.msra.mxu0 0
  %140 = vmatprep.subr.bf16.mxu0 0
  %141 = vmatpush1.bf16.msra.mxu0 0
  %142 = vmatprep.subr.bf16.mxu0 0
  %143 = vmatpush1.bf16.msra.mxu0 0
  %144 = vmatprep.subr.bf16.mxu0 0
  %145 = vmatpush1.bf16.msra.mxu0 0
  %146 = vmatprep.subr.bf16.mxu0 0
  %147 = vmatpush1.bf16.msra.mxu0 0
  %148 = vmatprep.subr.bf16.mxu0 0
  %149 = vmatpush1.bf16.msra.mxu0 0
  %150 = vmatprep.mubr.bf16.mxu0 0
  %151 = vmatmul.mubr.bf16.gmra.mrb[0].mxu0 %v95
  %v152 = vpop.f32.mrb[0].mxu0
  %v153 = vadd.f32 0.0, %v152
  %v154 = vpop.f32.mrb[0].mxu0
  %v155 = vpop.f32.mrb[0].mxu0
  %v156 = vadd.f32 0.0, %v155
  %v157 = vpop.f32.mrb[0].mxu0
  %158 = vmatprep.mubr.bf16.mxu0 0
  %159 = vmatmul.mubr.bf16.gmra.mrb[0].mxu0 %v98
  %v160 = vpop.f32.mrb[0].mxu0
  %v161 = vadd.f32 0.0, %v160
  %v162 = vpop.f32.mrb[0].mxu0
  %v163 = vpop.f32.mrb[0].mxu0
  %v164 = vadd.f32 0.0, %v163
  %v165 = vpop.f32.mrb[0].mxu0
  %166 = vmatprep.mubr.bf16.mxu0 0
  %167 = vmatmul.mubr.bf16.gmra.mrb[0].mxu0 %v101
  %v168 = vpop.f32.mrb[0].mxu0
  %v169 = vadd.f32 0.0, %v168
  %v170 = vpop.f32.mrb[0].mxu0
  %v171 = vpop.f32.mrb[0].mxu0
  %v172 = vadd.f32 0.0, %v171
  %v173 = vpop.f32.mrb[0].mxu0
  %174 = vmatprep.mubr.bf16.mxu0 0
  %175 = vmatmul.mubr.bf16.gmra.mrb[0].mxu0 %v104
  %v176 = vpop.f32.mrb[0].mxu0
  %v177 = vadd.f32 0.0, %v176
  %v178 = vpop.f32.mrb[0].mxu0
  %v179 = vpop.f32.mrb[0].mxu0
  %v180 = vadd.f32 0.0, %v179
  %v181 = vpop.f32.mrb[0].mxu0
  %182 = vmatprep.mubr.bf16.mxu0 0
  %183 = vmatmul.mubr.bf16.gmra.mrb[0].mxu0 %v107
  %v184 = vpop.f32.mrb[0].mxu0
  %v185 = vadd.f32 0.0, %v184
  %v186 = vpop.f32.mrb[0].mxu0
  %v187 = vpop.f32.mrb[0].mxu0
  %v188 = vadd.f32 0.0, %v187
  %v189 = vpop.f32.mrb[0].mxu0
  %190 = vmatprep.mubr.bf16.mxu0 0
  %191 = vmatmul.mubr.bf16.gmra.mrb[0].mxu0 %v110
  %v192 = vpop.f32.mrb[0].mxu0
  %v193 = vadd.f32 0.0, %v192
  %v194 = vpop.f32.mrb[0].mxu0
  %v195 = vpop.f32.mrb[0].mxu0
  %v196 = vadd.f32 0.0, %v195
  %v197 = vpop.f32.mrb[0].mxu0
  %198 = vmatprep.mubr.bf16.mxu0 0
  %199 = vmatmul.mubr.bf16.gmra.mrb[0].mxu0 %v113
  %v200 = vpop.f32.mrb[0].mxu0
  %v201 = vadd.f32 0.0, %v200
  %v202 = vpop.f32.mrb[0].mxu0
  %v203 = vpop.f32.mrb[0].mxu0
  %v204 = vadd.f32 0.0, %v203
  %v205 = vpop.f32.mrb[0].mxu0
  %206 = vmatprep.mubr.bf16.mxu0 0
  %207 = vmatmul.mubr.bf16.gmra.mrb[0].mxu0 %v116
  %v208 = vpop.f32.mrb[0].mxu0
  %v209 = vadd.f32 0.0, %v208
  %v210 = vpop.f32.mrb[0].mxu0
  %v211 = vpop.f32.mrb[0].mxu0
  %v212 = vadd.f32 0.0, %v211
  %v213 = vpop.f32.mrb[0].mxu0
  %214 = vdwg.mxu0
  %v215 = vadd.f32 %v53, %v153
  %v216 = vadd.f32 %v54, %v156
  %v217 = vadd.f32 %v55, %v161
  %v218 = vadd.f32 %v56, %v164
  %v219 = vadd.f32 %v57, %v169
  %v220 = vadd.f32 %v58, %v172
  %v221 = vadd.f32 %v59, %v177
  %v222 = vadd.f32 %v60, %v180
  %v223 = vadd.f32 %v61, %v185
  %v224 = vadd.f32 %v62, %v188
  %v225 = vadd.f32 %v63, %v193
  %v226 = vadd.f32 %v64, %v196
  %v227 = vadd.f32 %v65, %v201
  %v228 = vadd.f32 %v66, %v204
  %v229 = vadd.f32 %v67, %v209
  %v230 = vadd.f32 %v68, %v212
  %v231 = vpack.c.bf16 %v216, %v215
  %v232 = vpack.c.bf16 %v218, %v217
  %v233 = vpack.c.bf16 %v220, %v219
  %v234 = vpack.c.bf16 %v222, %v221
  %v235 = vpack.c.bf16 %v224, %v223
  %v236 = vpack.c.bf16 %v226, %v225
  %v237 = vpack.c.bf16 %v228, %v227
  %v238 = vpack.c.bf16 %v230, %v229
  %v239 = vld [vmem:[%s3] sm:$0xf]
  %v240 = vld [vmem:[%s3 + $0x4] sm:$0xf]
  %v241 = vld [vmem:[%s3 + $0x8] sm:$0xf]
  %v242 = vld [vmem:[%s3 + $0xc] sm:$0xf]
  %v243 = vld [vmem:[%s4] sm:$0x1]
  %v245 = vlaneseq
  %v246 = vshrl.u32 %v245, 7
  %v247 = vsub.s32 0, %v246
  %v248 = vrot.slane %v243, %v247
  %v254 = vunpack.c.l.b16 %v239
  %v255 = vunpack.c.l.b16 %v240
  %v256 = vunpack.c.l.b16 %v241
  %v257 = vunpack.c.l.b16 %v242
  %v258 = vpack.c.b16 %v255, %v254
  %v259 = vpack.c.b16 %v257, %v256
  %v263 = vsel %vm93, %v231, 0
  %v266 = vsel %vm93, %v232, 0
  %v269 = vsel %vm93, %v233, 0
  %v272 = vsel %vm93, %v234, 0
  %v275 = vsel %vm93, %v235, 0
  %v278 = vsel %vm93, %v236, 0
  %v281 = vsel %vm93, %v237, 0
  %v284 = vsel %vm93, %v238, 0
  %286 = vmatprep.subr.bf16.mxu0 0
  %287 = vmatpush1.bf16.msra.mxu0 %v258
  %288 = vmatprep.subr.bf16.mxu0 0
  %289 = vmatpush1.bf16.msra.mxu0 %v259
  %290 = vmatprep.subr.bf16.mxu0 0
  %291 = vmatpush1.bf16.msra.mxu0 0
  %292 = vmatprep.subr.bf16.mxu0 0
  %293 = vmatpush1.bf16.msra.mxu0 0
  %294 = vmatprep.subr.bf16.mxu0 0
  %295 = vmatpush1.bf16.msra.mxu0 0
  %296 = vmatprep.subr.bf16.mxu0 0
  %297 = vmatpush1.bf16.msra.mxu0 0
  %298 = vmatprep.subr.bf16.mxu0 0
  %299 = vmatpush1.bf16.msra.mxu0 0
  %300 = vmatprep.subr.bf16.mxu0 0
  %301 = vmatpush1.bf16.msra.mxu0 0
  %302 = vmatprep.subr.bf16.mxu0 0
  %303 = vmatpush1.bf16.msra.mxu0 0
  %304 = vmatprep.subr.bf16.mxu0 0
  %305 = vmatpush1.bf16.msra.mxu0 0
  %306 = vmatprep.subr.bf16.mxu0 0
  %307 = vmatpush1.bf16.msra.mxu0 0
  %308 = vmatprep.subr.bf16.mxu0 0
  %309 = vmatpush1.bf16.msra.mxu0 0
  %310 = vmatprep.subr.bf16.mxu0 0
  %311 = vmatpush1.bf16.msra.mxu0 0
  %312 = vmatprep.subr.bf16.mxu0 0
  %313 = vmatpush1.bf16.msra.mxu0 0
  %314 = vmatprep.subr.bf16.mxu0 0
  %315 = vmatpush1.bf16.msra.mxu0 0
  %316 = vmatprep.subr.bf16.mxu0 0
  %317 = vmatpush1.bf16.msra.mxu0 0
  %318 = vmatprep.mubr.bf16.mxu0 0
  %319 = vmatmul.mubr.bf16.gmra.mrb[0].mxu0 %v263
  %v320 = vpop.f32.mrb[0].mxu0
  %v321 = vadd.f32 %v248, %v320
  %v322 = vpop.f32.mrb[0].mxu0
  %v323 = vpop.f32.mrb[0].mxu0
  %v324 = vadd.f32 %v248, %v323
  %v325 = vpop.f32.mrb[0].mxu0
  %326 = vmatprep.mubr.bf16.mxu0 0
  %327 = vmatmul.mubr.bf16.gmra.mrb[0].mxu0 %v266
  %v328 = vpop.f32.mrb[0].mxu0
  %v329 = vadd.f32 %v248, %v328
  %v330 = vpop.f32.mrb[0].mxu0
  %v331 = vpop.f32.mrb[0].mxu0
  %v332 = vadd.f32 %v248, %v331
  %v333 = vpop.f32.mrb[0].mxu0
  %334 = vmatprep.mubr.bf16.mxu0 0
  %335 = vmatmul.mubr.bf16.gmra.mrb[0].mxu0 %v269
  %v336 = vpop.f32.mrb[0].mxu0
  %v337 = vadd.f32 %v248, %v336
  %v338 = vpop.f32.mrb[0].mxu0
  %v339 = vpop.f32.mrb[0].mxu0
  %v340 = vadd.f32 %v248, %v339
  %v341 = vpop.f32.mrb[0].mxu0
  %342 = vmatprep.mubr.bf16.mxu0 0
  %343 = vmatmul.mubr.bf16.gmra.mrb[0].mxu0 %v272
  %v344 = vpop.f32.mrb[0].mxu0
  %v345 = vadd.f32 %v248, %v344
  %v346 = vpop.f32.mrb[0].mxu0
  %v347 = vpop.f32.mrb[0].mxu0
  %v348 = vadd.f32 %v248, %v347
  %v349 = vpop.f32.mrb[0].mxu0
  %350 = vmatprep.mubr.bf16.mxu0 0
  %351 = vmatmul.mubr.bf16.gmra.mrb[0].mxu0 %v275
  %v352 = vpop.f32.mrb[0].mxu0
  %v353 = vadd.f32 %v248, %v352
  %v354 = vpop.f32.mrb[0].mxu0
  %v355 = vpop.f32.mrb[0].mxu0
  %v356 = vadd.f32 %v248, %v355
  %v357 = vpop.f32.mrb[0].mxu0
  %358 = vmatprep.mubr.bf16.mxu0 0
  %359 = vmatmul.mubr.bf16.gmra.mrb[0].mxu0 %v278
  %v360 = vpop.f32.mrb[0].mxu0
  %v361 = vadd.f32 %v248, %v360
  %v362 = vpop.f32.mrb[0].mxu0
  %v363 = vpop.f32.mrb[0].mxu0
  %v364 = vadd.f32 %v248, %v363
  %v365 = vpop.f32.mrb[0].mxu0
  %366 = vmatprep.mubr.bf16.mxu0 0
  %367 = vmatmul.mubr.bf16.gmra.mrb[0].mxu0 %v281
  %v368 = vpop.f32.mrb[0].mxu0
  %v369 = vadd.f32 %v248, %v368
  %v370 = vpop.f32.mrb[0].mxu0
  %v371 = vpop.f32.mrb[0].mxu0
  %v372 = vadd.f32 %v248, %v371
  %v373 = vpop.f32.mrb[0].mxu0
  %374 = vmatprep.mubr.bf16.mxu0 0
  %375 = vmatmul.mubr.bf16.gmra.mrb[0].mxu0 %v284
  %v376 = vpop.f32.mrb[0].mxu0
  %v377 = vadd.f32 %v248, %v376
  %v378 = vpop.f32.mrb[0].mxu0
  %v379 = vpop.f32.mrb[0].mxu0
  %v380 = vadd.f32 %v248, %v379
  %v381 = vpop.f32.mrb[0].mxu0
  %382 = vdwg.mxu0
  %v383 = vpack.c.bf16 %v324, %v321
  %v384 = vpack.c.bf16 %v332, %v329
  %v385 = vpack.c.bf16 %v340, %v337
  %v386 = vpack.c.bf16 %v348, %v345
  %v387 = vpack.c.bf16 %v356, %v353
  %v388 = vpack.c.bf16 %v364, %v361
  %v389 = vpack.c.bf16 %v372, %v369
  %v390 = vpack.c.bf16 %v380, %v377
  %395 = vrot.lane.b32.xlu0 %v383, 96
  %v396 = vpop.permute.xlu0 %395
  %397 = vrot.lane.b32.xlu0 %v384, 96
  %v398 = vpop.permute.xlu0 %397
  %399 = vrot.lane.b32.xlu0 %v385, 96
  %v400 = vpop.permute.xlu0 %399
  %401 = vrot.lane.b32.xlu0 %v386, 96
  %v402 = vpop.permute.xlu0 %401
  %vm403 = vcmask 64512
  %v405 = vsel %vm403, %v383, 0
  %v408 = vsel %vm403, %v384, 0
  %v411 = vsel %vm403, %v385, 0
  %v414 = vsel %vm403, %v386, 0
  %v417 = vsel %vm403, %v396, 0
  %v420 = vsel %vm403, %v398, 0
  %v423 = vsel %vm403, %v400, 0
  %v426 = vsel %vm403, %v402, 0
  %428 = vmatprep.subr.bf16.mxu0 0
  %429 = vmatpush1.bf16.xpose.msra.mxu0 %v417
  %430 = vmatprep.subr.bf16.mxu0 0
  %431 = vmatpush1.bf16.xpose.msra.mxu0 %v420
  %432 = vmatprep.subr.bf16.mxu0 0
  %433 = vmatpush1.bf16.xpose.msra.mxu0 %v423
  %434 = vmatprep.subr.bf16.mxu0 0
  %435 = vmatpush1.bf16.xpose.msra.mxu0 %v426
  %436 = vmatprep.subr.bf16.mxu0 0
  %437 = vmatpush1.bf16.xpose.msra.mxu0 0
  %438 = vmatprep.subr.bf16.mxu0 0
  %439 = vmatpush1.bf16.xpose.msra.mxu0 0
  %440 = vmatprep.subr.bf16.mxu0 0
  %441 = vmatpush1.bf16.xpose.msra.mxu0 0
  %442 = vmatprep.subr.bf16.mxu0 0
  %443 = vmatpush1.bf16.xpose.msra.mxu0 0
  %444 = vmatprep.subr.bf16.mxu0 0
  %445 = vmatpush1.bf16.xpose.msra.mxu0 0
  %446 = vmatprep.subr.bf16.mxu0 0
  %447 = vmatpush1.bf16.xpose.msra.mxu0 0
  %448 = vmatprep.subr.bf16.mxu0 0
  %449 = vmatpush1.bf16.xpose.msra.mxu0 0
  %450 = vmatprep.subr.bf16.mxu0 0
  %451 = vmatpush1.bf16.xpose.msra.mxu0 0
  %452 = vmatprep.subr.bf16.mxu0 0
  %453 = vmatpush1.bf16.xpose.msra.mxu0 0
  %454 = vmatprep.subr.bf16.mxu0 0
  %455 = vmatpush1.bf16.xpose.msra.mxu0 0
  %456 = vmatprep.subr.bf16.mxu0 0
  %457 = vmatpush1.bf16.xpose.msra.mxu0 0
  %458 = vmatprep.subr.bf16.mxu0 0
  %459 = vmatpush1.bf16.xpose.msra.mxu0 0
  %460 = vmatprep.mubr.bf16.mxu0 0
  %461 = vmatmul.mubr.bf16.gmra.mrb[0].mxu0 %v405
  %v462 = vpop.f32.mrb[0].mxu0
  %v463 = vadd.f32 0.0, %v462
  %v464 = vpop.f32.mrb[0].mxu0
  %v465 = vpop.f32.mrb[0].mxu0
  %v466 = vadd.f32 0.0, %v465
  %v467 = vpop.f32.mrb[0].mxu0
  %468 = vmatprep.mubr.bf16.mxu0 0
  %469 = vmatmul.mubr.bf16.gmra.mrb[0].mxu0 %v408
  %v470 = vpop.f32.mrb[0].mxu0
  %v471 = vadd.f32 0.0, %v470
  %v472 = vpop.f32.mrb[0].mxu0
  %v473 = vpop.f32.mrb[0].mxu0
  %v474 = vadd.f32 0.0, %v473
  %v475 = vpop.f32.mrb[0].mxu0
  %476 = vmatprep.mubr.bf16.mxu0 0
  %477 = vmatmul.mubr.bf16.gmra.mrb[0].mxu0 %v411
  %v478 = vpop.f32.mrb[0].mxu0
  %v479 = vadd.f32 0.0, %v478
  %v480 = vpop.f32.mrb[0].mxu0
  %v481 = vpop.f32.mrb[0].mxu0
  %v482 = vadd.f32 0.0, %v481
  %v483 = vpop.f32.mrb[0].mxu0
  %484 = vmatprep.mubr.bf16.mxu0 0
  %485 = vmatmul.mubr.bf16.gmra.mrb[0].mxu0 %v414
  %v486 = vpop.f32.mrb[0].mxu0
  %v487 = vadd.f32 0.0, %v486
  %v488 = vpop.f32.mrb[0].mxu0
  %v489 = vpop.f32.mrb[0].mxu0
  %v490 = vadd.f32 0.0, %v489
  %v491 = vpop.f32.mrb[0].mxu0
  %492 = vdwg.mxu0
  %493 = vrot.lane.b32.xlu0 %v383, 120
  %v494 = vpop.permute.xlu0 %493
  %495 = vrot.lane.b32.xlu0 %v384, 120
  %v496 = vpop.permute.xlu0 %495
  %497 = vrot.lane.b32.xlu0 %v385, 120
  %v498 = vpop.permute.xlu0 %497
  %499 = vrot.lane.b32.xlu0 %v386, 120
  %v500 = vpop.permute.xlu0 %499
  %501 = vrot.lane.b32.xlu0 %v383, 88
  %v502 = vpop.permute.xlu0 %501
  %503 = vrot.lane.b32.xlu0 %v384, 88
  %v504 = vpop.permute.xlu0 %503
  %505 = vrot.lane.b32.xlu0 %v385, 88
  %v506 = vpop.permute.xlu0 %505
  %507 = vrot.lane.b32.xlu0 %v386, 88
  %v508 = vpop.permute.xlu0 %507
  %v510 = vsel %vm403, %v494, 0
  %v513 = vsel %vm403, %v496, 0
  %v516 = vsel %vm403, %v498, 0
  %v519 = vsel %vm403, %v500, 0
  %v522 = vsel %vm403, %v502, 0
  %v525 = vsel %vm403, %v504, 0
  %v528 = vsel %vm403, %v506, 0
  %v531 = vsel %vm403, %v508, 0
  %533 = vmatprep.subr.bf16.mxu0 0
  %534 = vmatpush1.bf16.xpose.msra.mxu0 %v522
  %535 = vmatprep.subr.bf16.mxu0 0
  %536 = vmatpush1.bf16.xpose.msra.mxu0 %v525
  %537 = vmatprep.subr.bf16.mxu0 0
  %538 = vmatpush1.bf16.xpose.msra.mxu0 %v528
  %539 = vmatprep.subr.bf16.mxu0 0
  %540 = vmatpush1.bf16.xpose.msra.mxu0 %v531
  %541 = vmatprep.subr.bf16.mxu0 0
  %542 = vmatpush1.bf16.xpose.msra.mxu0 0
  %543 = vmatprep.subr.bf16.mxu0 0
  %544 = vmatpush1.bf16.xpose.msra.mxu0 0
  %545 = vmatprep.subr.bf16.mxu0 0
  %546 = vmatpush1.bf16.xpose.msra.mxu0 0
  %547 = vmatprep.subr.bf16.mxu0 0
  %548 = vmatpush1.bf16.xpose.msra.mxu0 0
  %549 = vmatprep.subr.bf16.mxu0 0
  %550 = vmatpush1.bf16.xpose.msra.mxu0 0
  %551 = vmatprep.subr.bf16.mxu0 0
  %552 = vmatpush1.bf16.xpose.msra.mxu0 0
  %553 = vmatprep.subr.bf16.mxu0 0
  %554 = vmatpush1.bf16.xpose.msra.mxu0 0
  %555 = vmatprep.subr.bf16.mxu0 0
  %556 = vmatpush1.bf16.xpose.msra.mxu0 0
  %557 = vmatprep.subr.bf16.mxu0 0
  %558 = vmatpush1.bf16.xpose.msra.mxu0 0
  %559 = vmatprep.subr.bf16.mxu0 0
  %560 = vmatpush1.bf16.xpose.msra.mxu0 0
  %561 = vmatprep.subr.bf16.mxu0 0
  %562 = vmatpush1.bf16.xpose.msra.mxu0 0
  %563 = vmatprep.subr.bf16.mxu0 0
  %564 = vmatpush1.bf16.xpose.msra.mxu0 0
  %565 = vmatprep.mubr.bf16.mxu0 0
  %566 = vmatmul.mubr.bf16.gmra.mrb[0].mxu0 %v510
  %v567 = vpop.f32.mrb[0].mxu0
  %v568 = vadd.f32 0.0, %v567
  %v569 = vpop.f32.mrb[0].mxu0
  %v570 = vpop.f32.mrb[0].mxu0
  %v571 = vadd.f32 0.0, %v570
  %v572 = vpop.f32.mrb[0].mxu0
  %573 = vmatprep.mubr.bf16.mxu0 0
  %574 = vmatmul.mubr.bf16.gmra.mrb[0].mxu0 %v513
  %v575 = vpop.f32.mrb[0].mxu0
  %v576 = vadd.f32 0.0, %v575
  %v577 = vpop.f32.mrb[0].mxu0
  %v578 = vpop.f32.mrb[0].mxu0
  %v579 = vadd.f32 0.0, %v578
  %v580 = vpop.f32.mrb[0].mxu0
  %581 = vmatprep.mubr.bf16.mxu0 0
  %582 = vmatmul.mubr.bf16.gmra.mrb[0].mxu0 %v516
  %v583 = vpop.f32.mrb[0].mxu0
  %v584 = vadd.f32 0.0, %v583
  %v585 = vpop.f32.mrb[0].mxu0
  %v586 = vpop.f32.mrb[0].mxu0
  %v587 = vadd.f32 0.0, %v586
  %v588 = vpop.f32.mrb[0].mxu0
  %589 = vmatprep.mubr.bf16.mxu0 0
  %590 = vmatmul.mubr.bf16.gmra.mrb[0].mxu0 %v519
  %v591 = vpop.f32.mrb[0].mxu0
  %v592 = vadd.f32 0.0, %v591
  %v593 = vpop.f32.mrb[0].mxu0
  %v594 = vpop.f32.mrb[0].mxu0
  %v595 = vadd.f32 0.0, %v594
  %v596 = vpop.f32.mrb[0].mxu0
  %597 = vdwg.mxu0
  %598 = vrot.lane.b32.xlu0 %v383, 112
  %v599 = vpop.permute.xlu0 %598
  %600 = vrot.lane.b32.xlu0 %v384, 112
  %v601 = vpop.permute.xlu0 %600
  %602 = vrot.lane.b32.xlu0 %v385, 112
  %v603 = vpop.permute.xlu0 %602
  %604 = vrot.lane.b32.xlu0 %v386, 112
  %v605 = vpop.permute.xlu0 %604
  %606 = vrot.lane.b32.xlu0 %v383, 80
  %v607 = vpop.permute.xlu0 %606
  %608 = vrot.lane.b32.xlu0 %v384, 80
  %v609 = vpop.permute.xlu0 %608
  %610 = vrot.lane.b32.xlu0 %v385, 80
  %v611 = vpop.permute.xlu0 %610
  %612 = vrot.lane.b32.xlu0 %v386, 80
  %v613 = vpop.permute.xlu0 %612
  %v615 = vsel %vm403, %v599, 0
  %v618 = vsel %vm403, %v601, 0
  %v621 = vsel %vm403, %v603, 0
  %v624 = vsel %vm403, %v605, 0
  %v627 = vsel %vm403, %v607, 0
  %v630 = vsel %vm403, %v609, 0
  %v633 = vsel %vm403, %v611, 0
  %v636 = vsel %vm403, %v613, 0
  %638 = vmatprep.subr.bf16.mxu0 0
  %639 = vmatpush1.bf16.xpose.msra.mxu0 %v627
  %640 = vmatprep.subr.bf16.mxu0 0
  %641 = vmatpush1.bf16.xpose.msra.mxu0 %v630
  %642 = vmatprep.subr.bf16.mxu0 0
  %643 = vmatpush1.bf16.xpose.msra.mxu0 %v633
  %644 = vmatprep.subr.bf16.mxu0 0
  %645 = vmatpush1.bf16.xpose.msra.mxu0 %v636
  %646 = vmatprep.subr.bf16.mxu0 0
  %647 = vmatpush1.bf16.xpose.msra.mxu0 0
  %648 = vmatprep.subr.bf16.mxu0 0
  %649 = vmatpush1.bf16.xpose.msra.mxu0 0
  %650 = vmatprep.subr.bf16.mxu0 0
  %651 = vmatpush1.bf16.xpose.msra.mxu0 0
  %652 = vmatprep.subr.bf16.mxu0 0
  %653 = vmatpush1.bf16.xpose.msra.mxu0 0
  %654 = vmatprep.subr.bf16.mxu0 0
  %655 = vmatpush1.bf16.xpose.msra.mxu0 0
  %656 = vmatprep.subr.bf16.mxu0 0
  %657 = vmatpush1.bf16.xpose.msra.mxu0 0
  %658 = vmatprep.subr.bf16.mxu0 0
  %659 = vmatpush1.bf16.xpose.msra.mxu0 0
  %660 = vmatprep.subr.bf16.mxu0 0
  %661 = vmatpush1.bf16.xpose.msra.mxu0 0
  %662 = vmatprep.subr.bf16.mxu0 0
  %663 = vmatpush1.bf16.xpose.msra.mxu0 0
  %664 = vmatprep.subr.bf16.mxu0 0
  %665 = vmatpush1.bf16.xpose.msra.mxu0 0
  %666 = vmatprep.subr.bf16.mxu0 0
  %667 = vmatpush1.bf16.xpose.msra.mxu0 0
  %668 = vmatprep.subr.bf16.mxu0 0
  %669 = vmatpush1.bf16.xpose.msra.mxu0 0
  %670 = vmatprep.mubr.bf16.mxu0 0
  %671 = vmatmul.mubr.bf16.gmra.mrb[0].mxu0 %v615
  %v672 = vpop.f32.mrb[0].mxu0
  %v673 = vadd.f32 0.0, %v672
  %v674 = vpop.f32.mrb[0].mxu0
  %v675 = vpop.f32.mrb[0].mxu0
  %v676 = vadd.f32 0.0, %v675
  %v677 = vpop.f32.mrb[0].mxu0
  %678 = vmatprep.mubr.bf16.mxu0 0
  %679 = vmatmul.mubr.bf16.gmra.mrb[0].mxu0 %v618
  %v680 = vpop.f32.mrb[0].mxu0
  %v681 = vadd.f32 0.0, %v680
  %v682 = vpop.f32.mrb[0].mxu0
  %v683 = vpop.f32.mrb[0].mxu0
  %v684 = vadd.f32 0.0, %v683
  %v685 = vpop.f32.mrb[0].mxu0
  %686 = vmatprep.mubr.bf16.mxu0 0
  %687 = vmatmul.mubr.bf16.gmra.mrb[0].mxu0 %v621
  %v688 = vpop.f32.mrb[0].mxu0
  %v689 = vadd.f32 0.0, %v688
  %v690 = vpop.f32.mrb[0].mxu0
  %v691 = vpop.f32.mrb[0].mxu0
  %v692 = vadd.f32 0.0, %v691
  %v693 = vpop.f32.mrb[0].mxu0
  %694 = vmatprep.mubr.bf16.mxu0 0
  %695 = vmatmul.mubr.bf16.gmra.mrb[0].mxu0 %v624
  %v696 = vpop.f32.mrb[0].mxu0
  %v697 = vadd.f32 0.0, %v696
  %v698 = vpop.f32.mrb[0].mxu0
  %v699 = vpop.f32.mrb[0].mxu0
  %v700 = vadd.f32 0.0, %v699
  %v701 = vpop.f32.mrb[0].mxu0
  %702 = vdwg.mxu0
  %703 = vrot.lane.b32.xlu0 %v383, 104
  %v704 = vpop.permute.xlu0 %703
  %705 = vrot.lane.b32.xlu0 %v384, 104
  %v706 = vpop.permute.xlu0 %705
  %707 = vrot.lane.b32.xlu0 %v385, 104
  %v708 = vpop.permute.xlu0 %707
  %709 = vrot.lane.b32.xlu0 %v386, 104
  %v710 = vpop.permute.xlu0 %709
  %711 = vrot.lane.b32.xlu0 %v383, 72
  %v712 = vpop.permute.xlu0 %711
  %713 = vrot.lane.b32.xlu0 %v384, 72
  %v714 = vpop.permute.xlu0 %713
  %715 = vrot.lane.b32.xlu0 %v385, 72
  %v716 = vpop.permute.xlu0 %715
  %717 = vrot.lane.b32.xlu0 %v386, 72
  %v718 = vpop.permute.xlu0 %717
  %v720 = vsel %vm403, %v704, 0
  %v723 = vsel %vm403, %v706, 0
  %v726 = vsel %vm403, %v708, 0
  %v729 = vsel %vm403, %v710, 0
  %v732 = vsel %vm403, %v712, 0
  %v735 = vsel %vm403, %v714, 0
  %v738 = vsel %vm403, %v716, 0
  %v741 = vsel %vm403, %v718, 0
  %743 = vmatprep.subr.bf16.mxu0 0
  %744 = vmatpush1.bf16.xpose.msra.mxu0 %v732
  %745 = vmatprep.subr.bf16.mxu0 0
  %746 = vmatpush1.bf16.xpose.msra.mxu0 %v735
  %747 = vmatprep.subr.bf16.mxu0 0
  %748 = vmatpush1.bf16.xpose.msra.mxu0 %v738
  %749 = vmatprep.subr.bf16.mxu0 0
  %750 = vmatpush1.bf16.xpose.msra.mxu0 %v741
  %751 = vmatprep.subr.bf16.mxu0 0
  %752 = vmatpush1.bf16.xpose.msra.mxu0 0
  %753 = vmatprep.subr.bf16.mxu0 0
  %754 = vmatpush1.bf16.xpose.msra.mxu0 0
  %755 = vmatprep.subr.bf16.mxu0 0
  %756 = vmatpush1.bf16.xpose.msra.mxu0 0
  %757 = vmatprep.subr.bf16.mxu0 0
  %758 = vmatpush1.bf16.xpose.msra.mxu0 0
  %759 = vmatprep.subr.bf16.mxu0 0
  %760 = vmatpush1.bf16.xpose.msra.mxu0 0
  %761 = vmatprep.subr.bf16.mxu0 0
  %762 = vmatpush1.bf16.xpose.msra.mxu0 0
  %763 = vmatprep.subr.bf16.mxu0 0
  %764 = vmatpush1.bf16.xpose.msra.mxu0 0
  %765 = vmatprep.subr.bf16.mxu0 0
  %766 = vmatpush1.bf16.xpose.msra.mxu0 0
  %767 = vmatprep.subr.bf16.mxu0 0
  %768 = vmatpush1.bf16.xpose.msra.mxu0 0
  %769 = vmatprep.subr.bf16.mxu0 0
  %770 = vmatpush1.bf16.xpose.msra.mxu0 0
  %771 = vmatprep.subr.bf16.mxu0 0
  %772 = vmatpush1.bf16.xpose.msra.mxu0 0
  %773 = vmatprep.subr.bf16.mxu0 0
  %774 = vmatpush1.bf16.xpose.msra.mxu0 0
  %775 = vmatprep.mubr.bf16.mxu0 0
  %776 = vmatmul.mubr.bf16.gmra.mrb[0].mxu0 %v720
  %v777 = vpop.f32.mrb[0].mxu0
  %v778 = vadd.f32 0.0, %v777
  %v779 = vpop.f32.mrb[0].mxu0
  %v780 = vpop.f32.mrb[0].mxu0
  %v781 = vadd.f32 0.0, %v780
  %v782 = vpop.f32.mrb[0].mxu0
  %783 = vmatprep.mubr.bf16.mxu0 0
  %784 = vmatmul.mubr.bf16.gmra.mrb[0].mxu0 %v723
  %v785 = vpop.f32.mrb[0].mxu0
  %v786 = vadd.f32 0.0, %v785
  %v787 = vpop.f32.mrb[0].mxu0
  %v788 = vpop.f32.mrb[0].mxu0
  %v789 = vadd.f32 0.0, %v788
  %v790 = vpop.f32.mrb[0].mxu0
  %791 = vmatprep.mubr.bf16.mxu0 0
  %792 = vmatmul.mubr.bf16.gmra.mrb[0].mxu0 %v726
  %v793 = vpop.f32.mrb[0].mxu0
  %v794 = vadd.f32 0.0, %v793
  %v795 = vpop.f32.mrb[0].mxu0
  %v796 = vpop.f32.mrb[0].mxu0
  %v797 = vadd.f32 0.0, %v796
  %v798 = vpop.f32.mrb[0].mxu0
  %799 = vmatprep.mubr.bf16.mxu0 0
  %800 = vmatmul.mubr.bf16.gmra.mrb[0].mxu0 %v729
  %v801 = vpop.f32.mrb[0].mxu0
  %v802 = vadd.f32 0.0, %v801
  %v803 = vpop.f32.mrb[0].mxu0
  %v804 = vpop.f32.mrb[0].mxu0
  %v805 = vadd.f32 0.0, %v804
  %v806 = vpop.f32.mrb[0].mxu0
  %807 = vdwg.mxu0
  %vm808 = vcmask 523264
  %v809 = vsel %vm808, %v463, -inf
  %810 = vmax.xlane.f32.xlu0 %v809
  %v811 = vpop.xlane.xlu0 %810
  %v812 = vsel %vm808, %v466, -inf
  %813 = vmax.xlane.f32.xlu0 %v812
  %v814 = vpop.xlane.xlu0 %813
  %v815 = vsel %vm808, %v471, -inf
  %816 = vmax.xlane.f32.xlu0 %v815
  %v817 = vpop.xlane.xlu0 %816
  %v818 = vsel %vm808, %v474, -inf
  %819 = vmax.xlane.f32.xlu0 %v818
  %v820 = vpop.xlane.xlu0 %819
  %v821 = vsel %vm808, %v479, -inf
  %822 = vmax.xlane.f32.xlu0 %v821
  %v823 = vpop.xlane.xlu0 %822
  %v824 = vsel %vm808, %v482, -inf
  %825 = vmax.xlane.f32.xlu0 %v824
  %v826 = vpop.xlane.xlu0 %825
  %v827 = vsel %vm808, %v487, -inf
  %828 = vmax.xlane.f32.xlu0 %v827
  %v829 = vpop.xlane.xlu0 %828
  %v830 = vsel %vm808, %v490, -inf
  %831 = vmax.xlane.f32.xlu0 %v830
  %v832 = vpop.xlane.xlu0 %831
  %v833 = vsel %vm808, %v568, -inf
  %834 = vmax.xlane.f32.xlu0 %v833
  %v835 = vpop.xlane.xlu0 %834
  %v836 = vsel %vm808, %v571, -inf
  %837 = vmax.xlane.f32.xlu0 %v836
  %v838 = vpop.xlane.xlu0 %837
  %v839 = vsel %vm808, %v576, -inf
  %840 = vmax.xlane.f32.xlu0 %v839
  %v841 = vpop.xlane.xlu0 %840
  %v842 = vsel %vm808, %v579, -inf
  %843 = vmax.xlane.f32.xlu0 %v842
  %v844 = vpop.xlane.xlu0 %843
  %v845 = vsel %vm808, %v584, -inf
  %846 = vmax.xlane.f32.xlu0 %v845
  %v847 = vpop.xlane.xlu0 %846
  %v848 = vsel %vm808, %v587, -inf
  %849 = vmax.xlane.f32.xlu0 %v848
  %v850 = vpop.xlane.xlu0 %849
  %v851 = vsel %vm808, %v592, -inf
  %852 = vmax.xlane.f32.xlu0 %v851
  %v853 = vpop.xlane.xlu0 %852
  %v854 = vsel %vm808, %v595, -inf
  %855 = vmax.xlane.f32.xlu0 %v854
  %v856 = vpop.xlane.xlu0 %855
  %v857 = vsel %vm808, %v673, -inf
  %858 = vmax.xlane.f32.xlu0 %v857
  %v859 = vpop.xlane.xlu0 %858
  %v860 = vsel %vm808, %v676, -inf
  %861 = vmax.xlane.f32.xlu0 %v860
  %v862 = vpop.xlane.xlu0 %861
  %v863 = vsel %vm808, %v681, -inf
  %864 = vmax.xlane.f32.xlu0 %v863
  %v865 = vpop.xlane.xlu0 %864
  %v866 = vsel %vm808, %v684, -inf
  %867 = vmax.xlane.f32.xlu0 %v866
  %v868 = vpop.xlane.xlu0 %867
  %v869 = vsel %vm808, %v689, -inf
  %870 = vmax.xlane.f32.xlu0 %v869
  %v871 = vpop.xlane.xlu0 %870
  %v872 = vsel %vm808, %v692, -inf
  %873 = vmax.xlane.f32.xlu0 %v872
  %v874 = vpop.xlane.xlu0 %873
  %v875 = vsel %vm808, %v697, -inf
  %876 = vmax.xlane.f32.xlu0 %v875
  %v877 = vpop.xlane.xlu0 %876
  %v878 = vsel %vm808, %v700, -inf
  %879 = vmax.xlane.f32.xlu0 %v878
  %v880 = vpop.xlane.xlu0 %879
  %v881 = vsel %vm808, %v778, -inf
  %882 = vmax.xlane.f32.xlu0 %v881
  %v883 = vpop.xlane.xlu0 %882
  %v884 = vsel %vm808, %v781, -inf
  %885 = vmax.xlane.f32.xlu0 %v884
  %v886 = vpop.xlane.xlu0 %885
  %v887 = vsel %vm808, %v786, -inf
  %888 = vmax.xlane.f32.xlu0 %v887
  %v889 = vpop.xlane.xlu0 %888
  %v890 = vsel %vm808, %v789, -inf
  %891 = vmax.xlane.f32.xlu0 %v890
  %v892 = vpop.xlane.xlu0 %891
  %v893 = vsel %vm808, %v794, -inf
  %894 = vmax.xlane.f32.xlu0 %v893
  %v895 = vpop.xlane.xlu0 %894
  %v896 = vsel %vm808, %v797, -inf
  %897 = vmax.xlane.f32.xlu0 %v896
  %v898 = vpop.xlane.xlu0 %897
  %v899 = vsel %vm808, %v802, -inf
  %900 = vmax.xlane.f32.xlu0 %v899
  %v901 = vpop.xlane.xlu0 %900
  %v902 = vsel %vm808, %v805, -inf
  %903 = vmax.xlane.f32.xlu0 %v902
  %v904 = vpop.xlane.xlu0 %903
  %v905 = vsub.f32 %v463, %v811
  %v906 = vsub.f32 %v466, %v814
  %v907 = vsub.f32 %v471, %v817
  %v908 = vsub.f32 %v474, %v820
  %v909 = vsub.f32 %v479, %v823
  %v910 = vsub.f32 %v482, %v826
  %v911 = vsub.f32 %v487, %v829
  %v912 = vsub.f32 %v490, %v832
  %v913 = vsub.f32 %v568, %v835
  %v914 = vsub.f32 %v571, %v838
  %v915 = vsub.f32 %v576, %v841
  %v916 = vsub.f32 %v579, %v844
  %v917 = vsub.f32 %v584, %v847
  %v918 = vsub.f32 %v587, %v850
  %v919 = vsub.f32 %v592, %v853
  %v920 = vsub.f32 %v595, %v856
  %v921 = vsub.f32 %v673, %v859
  %v922 = vsub.f32 %v676, %v862
  %v923 = vsub.f32 %v681, %v865
  %v924 = vsub.f32 %v684, %v868
  %v925 = vsub.f32 %v689, %v871
  %v926 = vsub.f32 %v692, %v874
  %v927 = vsub.f32 %v697, %v877
  %v928 = vsub.f32 %v700, %v880
  %v929 = vsub.f32 %v778, %v883
  %v930 = vsub.f32 %v781, %v886
  %v931 = vsub.f32 %v786, %v889
  %v932 = vsub.f32 %v789, %v892
  %v933 = vsub.f32 %v794, %v895
  %v934 = vsub.f32 %v797, %v898
  %v935 = vsub.f32 %v802, %v901
  %v936 = vsub.f32 %v805, %v904
  %v937 = vmul.f32 %v905, 1.442695
  %v938 = vpow.pop %v937
  %v939 = vmul.f32 %v906, 1.442695
  %v940 = vpow.pop %v939
  %v941 = vmul.f32 %v907, 1.442695
  %v942 = vpow.pop %v941
  %v943 = vmul.f32 %v908, 1.442695
  %v944 = vpow.pop %v943
  %v945 = vmul.f32 %v909, 1.442695
  %v946 = vpow.pop %v945
  %v947 = vmul.f32 %v910, 1.442695
  %v948 = vpow.pop %v947
  %v949 = vmul.f32 %v911, 1.442695
  %v950 = vpow.pop %v949
  %v951 = vmul.f32 %v912, 1.442695
  %v952 = vpow.pop %v951
  %v953 = vmul.f32 %v913, 1.442695
  %v954 = vpow.pop %v953
  %v955 = vmul.f32 %v914, 1.442695
  %v956 = vpow.pop %v955
  %v957 = vmul.f32 %v915, 1.442695
  %v958 = vpow.pop %v957
  %v959 = vmul.f32 %v916, 1.442695
  %v960 = vpow.pop %v959
  %v961 = vmul.f32 %v917, 1.442695
  %v962 = vpow.pop %v961
  %v963 = vmul.f32 %v918, 1.442695
  %v964 = vpow.pop %v963
  %v965 = vmul.f32 %v919, 1.442695
  %v966 = vpow.pop %v965
  %v967 = vmul.f32 %v920, 1.442695
  %v968 = vpow.pop %v967
  %v969 = vmul.f32 %v921, 1.442695
  %v970 = vpow.pop %v969
  %v971 = vmul.f32 %v922, 1.442695
  %v972 = vpow.pop %v971
  %v973 = vmul.f32 %v923, 1.442695
  %v974 = vpow.pop %v973
  %v975 = vmul.f32 %v924, 1.442695
  %v976 = vpow.pop %v975
  %v977 = vmul.f32 %v925, 1.442695
  %v978 = vpow.pop %v977
  %v979 = vmul.f32 %v926, 1.442695
  %v980 = vpow.pop %v979
  %v981 = vmul.f32 %v927, 1.442695
  %v982 = vpow.pop %v981
  %v983 = vmul.f32 %v928, 1.442695
  %v984 = vpow.pop %v983
  %v985 = vmul.f32 %v929, 1.442695
  %v986 = vpow.pop %v985
  %v987 = vmul.f32 %v930, 1.442695
  %v988 = vpow.pop %v987
  %v989 = vmul.f32 %v931, 1.442695
  %v990 = vpow.pop %v989
  %v991 = vmul.f32 %v932, 1.442695
  %v992 = vpow.pop %v991
  %v993 = vmul.f32 %v933, 1.442695
  %v994 = vpow.pop %v993
  %v995 = vmul.f32 %v934, 1.442695
  %v996 = vpow.pop %v995
  %v997 = vmul.f32 %v935, 1.442695
  %v998 = vpow.pop %v997
  %v999 = vmul.f32 %v936, 1.442695
  %v1000 = vpow.pop %v999
  %v1001 = vsel %vm808, %v938, 0.0
  %1002 = vadd.xlane.f32.xlu0 %v1001
  %v1003 = vpop.xlane.xlu0 %1002
  %v1004 = vsel %vm808, %v940, 0.0
  %1005 = vadd.xlane.f32.xlu0 %v1004
  %v1006 = vpop.xlane.xlu0 %1005
  %v1007 = vsel %vm808, %v942, 0.0
  %1008 = vadd.xlane.f32.xlu0 %v1007
  %v1009 = vpop.xlane.xlu0 %1008
  %v1010 = vsel %vm808, %v944, 0.0
  %1011 = vadd.xlane.f32.xlu0 %v1010
  %v1012 = vpop.xlane.xlu0 %1011
  %v1013 = vsel %vm808, %v946, 0.0
  %1014 = vadd.xlane.f32.xlu0 %v1013
  %v1015 = vpop.xlane.xlu0 %1014
  %v1016 = vsel %vm808, %v948, 0.0
  %1017 = vadd.xlane.f32.xlu0 %v1016
  %v1018 = vpop.xlane.xlu0 %1017
  %v1019 = vsel %vm808, %v950, 0.0
  %1020 = vadd.xlane.f32.xlu0 %v1019
  %v1021 = vpop.xlane.xlu0 %1020
  %v1022 = vsel %vm808, %v952, 0.0
  %1023 = vadd.xlane.f32.xlu0 %v1022
  %v1024 = vpop.xlane.xlu0 %1023
  %v1025 = vsel %vm808, %v954, 0.0
  %1026 = vadd.xlane.f32.xlu0 %v1025
  %v1027 = vpop.xlane.xlu0 %1026
  %v1028 = vsel %vm808, %v956, 0.0
  %1029 = vadd.xlane.f32.xlu0 %v1028
  %v1030 = vpop.xlane.xlu0 %1029
  %v1031 = vsel %vm808, %v958, 0.0
  %1032 = vadd.xlane.f32.xlu0 %v1031
  %v1033 = vpop.xlane.xlu0 %1032
  %v1034 = vsel %vm808, %v960, 0.0
  %1035 = vadd.xlane.f32.xlu0 %v1034
  %v1036 = vpop.xlane.xlu0 %1035
  %v1037 = vsel %vm808, %v962, 0.0
  %1038 = vadd.xlane.f32.xlu0 %v1037
  %v1039 = vpop.xlane.xlu0 %1038
  %v1040 = vsel %vm808, %v964, 0.0
  %1041 = vadd.xlane.f32.xlu0 %v1040
  %v1042 = vpop.xlane.xlu0 %1041
  %v1043 = vsel %vm808, %v966, 0.0
  %1044 = vadd.xlane.f32.xlu0 %v1043
  %v1045 = vpop.xlane.xlu0 %1044
  %v1046 = vsel %vm808, %v968, 0.0
  %1047 = vadd.xlane.f32.xlu0 %v1046
  %v1048 = vpop.xlane.xlu0 %1047
  %v1049 = vsel %vm808, %v970, 0.0
  %1050 = vadd.xlane.f32.xlu0 %v1049
  %v1051 = vpop.xlane.xlu0 %1050
  %v1052 = vsel %vm808, %v972, 0.0
  %1053 = vadd.xlane.f32.xlu0 %v1052
  %v1054 = vpop.xlane.xlu0 %1053
  %v1055 = vsel %vm808, %v974, 0.0
  %1056 = vadd.xlane.f32.xlu0 %v1055
  %v1057 = vpop.xlane.xlu0 %1056
  %v1058 = vsel %vm808, %v976, 0.0
  %1059 = vadd.xlane.f32.xlu0 %v1058
  %v1060 = vpop.xlane.xlu0 %1059
  %v1061 = vsel %vm808, %v978, 0.0
  %1062 = vadd.xlane.f32.xlu0 %v1061
  %v1063 = vpop.xlane.xlu0 %1062
  %v1064 = vsel %vm808, %v980, 0.0
  %1065 = vadd.xlane.f32.xlu0 %v1064
  %v1066 = vpop.xlane.xlu0 %1065
  %v1067 = vsel %vm808, %v982, 0.0
  %1068 = vadd.xlane.f32.xlu0 %v1067
  %v1069 = vpop.xlane.xlu0 %1068
  %v1070 = vsel %vm808, %v984, 0.0
  %1071 = vadd.xlane.f32.xlu0 %v1070
  %v1072 = vpop.xlane.xlu0 %1071
  %v1073 = vsel %vm808, %v986, 0.0
  %1074 = vadd.xlane.f32.xlu0 %v1073
  %v1075 = vpop.xlane.xlu0 %1074
  %v1076 = vsel %vm808, %v988, 0.0
  %1077 = vadd.xlane.f32.xlu0 %v1076
  %v1078 = vpop.xlane.xlu0 %1077
  %v1079 = vsel %vm808, %v990, 0.0
  %1080 = vadd.xlane.f32.xlu0 %v1079
  %v1081 = vpop.xlane.xlu0 %1080
  %v1082 = vsel %vm808, %v992, 0.0
  %1083 = vadd.xlane.f32.xlu0 %v1082
  %v1084 = vpop.xlane.xlu0 %1083
  %v1085 = vsel %vm808, %v994, 0.0
  %1086 = vadd.xlane.f32.xlu0 %v1085
  %v1087 = vpop.xlane.xlu0 %1086
  %v1088 = vsel %vm808, %v996, 0.0
  %1089 = vadd.xlane.f32.xlu0 %v1088
  %v1090 = vpop.xlane.xlu0 %1089
  %v1091 = vsel %vm808, %v998, 0.0
  %1092 = vadd.xlane.f32.xlu0 %v1091
  %v1093 = vpop.xlane.xlu0 %1092
  %v1094 = vsel %vm808, %v1000, 0.0
  %1095 = vadd.xlane.f32.xlu0 %v1094
  %v1096 = vpop.xlane.xlu0 %1095
  %v1097 = vrcp.pop %v1003
  %v1098 = vrcp.pop %v1006
  %v1099 = vrcp.pop %v1009
  %v1100 = vrcp.pop %v1012
  %v1101 = vrcp.pop %v1015
  %v1102 = vrcp.pop %v1018
  %v1103 = vrcp.pop %v1021
  %v1104 = vrcp.pop %v1024
  %v1105 = vrcp.pop %v1027
  %v1106 = vrcp.pop %v1030
  %v1107 = vrcp.pop %v1033
  %v1108 = vrcp.pop %v1036
  %v1109 = vrcp.pop %v1039
  %v1110 = vrcp.pop %v1042
  %v1111 = vrcp.pop %v1045
  %v1112 = vrcp.pop %v1048
  %v1113 = vrcp.pop %v1051
  %v1114 = vrcp.pop %v1054
  %v1115 = vrcp.pop %v1057
  %v1116 = vrcp.pop %v1060
  %v1117 = vrcp.pop %v1063
  %v1118 = vrcp.pop %v1066
  %v1119 = vrcp.pop %v1069
  %v1120 = vrcp.pop %v1072
  %v1121 = vrcp.pop %v1075
  %v1122 = vrcp.pop %v1078
  %v1123 = vrcp.pop %v1081
  %v1124 = vrcp.pop %v1084
  %v1125 = vrcp.pop %v1087
  %v1126 = vrcp.pop %v1090
  %v1127 = vrcp.pop %v1093
  %v1128 = vrcp.pop %v1096
  %v1129 = vmul.f32 %v938, %v1097
  %v1130 = vmul.f32 %v940, %v1098
  %v1131 = vmul.f32 %v942, %v1099
  %v1132 = vmul.f32 %v944, %v1100
  %v1133 = vmul.f32 %v946, %v1101
  %v1134 = vmul.f32 %v948, %v1102
  %v1135 = vmul.f32 %v950, %v1103
  %v1136 = vmul.f32 %v952, %v1104
  %v1137 = vmul.f32 %v954, %v1105
  %v1138 = vmul.f32 %v956, %v1106
  %v1139 = vmul.f32 %v958, %v1107
  %v1140 = vmul.f32 %v960, %v1108
  %v1141 = vmul.f32 %v962, %v1109
  %v1142 = vmul.f32 %v964, %v1110
  %v1143 = vmul.f32 %v966, %v1111
  %v1144 = vmul.f32 %v968, %v1112
  %v1145 = vmul.f32 %v970, %v1113
  %v1146 = vmul.f32 %v972, %v1114
  %v1147 = vmul.f32 %v974, %v1115
  %v1148 = vmul.f32 %v976, %v1116
  %v1149 = vmul.f32 %v978, %v1117
  %v1150 = vmul.f32 %v980, %v1118
  %v1151 = vmul.f32 %v982, %v1119
  %v1152 = vmul.f32 %v984, %v1120
  %v1153 = vmul.f32 %v986, %v1121
  %v1154 = vmul.f32 %v988, %v1122
  %v1155 = vmul.f32 %v990, %v1123
  %v1156 = vmul.f32 %v992, %v1124
  %v1157 = vmul.f32 %v994, %v1125
  %v1158 = vmul.f32 %v996, %v1126
  %v1159 = vmul.f32 %v998, %v1127
  %v1160 = vmul.f32 %v1000, %v1128
  %v1161 = vpack.c.bf16 %v1130, %v1129
  %v1162 = vpack.c.bf16 %v1132, %v1131
  %v1163 = vpack.c.bf16 %v1134, %v1133
  %v1164 = vpack.c.bf16 %v1136, %v1135
  %v1165 = vpack.c.bf16 %v1138, %v1137
  %v1166 = vpack.c.bf16 %v1140, %v1139
  %v1167 = vpack.c.bf16 %v1142, %v1141
  %v1168 = vpack.c.bf16 %v1144, %v1143
  %v1169 = vpack.c.bf16 %v1146, %v1145
  %v1170 = vpack.c.bf16 %v1148, %v1147
  %v1171 = vpack.c.bf16 %v1150, %v1149
  %v1172 = vpack.c.bf16 %v1152, %v1151
  %v1173 = vpack.c.bf16 %v1154, %v1153
  %v1174 = vpack.c.bf16 %v1156, %v1155
  %v1175 = vpack.c.bf16 %v1158, %v1157
  %v1176 = vpack.c.bf16 %v1160, %v1159
  %1177 = vrot.lane.b32.xlu0 %v383, 64
  %v1178 = vpop.permute.xlu0 %1177
  %1179 = vrot.lane.b32.xlu0 %v384, 64
  %v1180 = vpop.permute.xlu0 %1179
  %1181 = vrot.lane.b32.xlu0 %v385, 64
  %v1182 = vpop.permute.xlu0 %1181
  %1183 = vrot.lane.b32.xlu0 %v386, 64
  %v1184 = vpop.permute.xlu0 %1183
  %v1190 = vsel %vm808, %v1161, 0
  %v1193 = vsel %vm808, %v1162, 0
  %v1196 = vsel %vm808, %v1163, 0
  %v1199 = vsel %vm808, %v1164, 0
  %1201 = vmatprep.subr.bf16.mxu0 0
  %1202 = vmatpush1.bf16.msra.mxu0 %v1178
  %1203 = vmatprep.subr.bf16.mxu0 0
  %1204 = vmatpush1.bf16.msra.mxu0 %v1180
  %1205 = vmatprep.subr.bf16.mxu0 0
  %1206 = vmatpush1.bf16.msra.mxu0 %v1182
  %1207 = vmatprep.subr.bf16.mxu0 0
  %1208 = vmatpush1.bf16.msra.mxu0 %v1184
  %1209 = vmatprep.subr.bf16.mxu0 0
  %1210 = vmatpush1.bf16.msra.mxu0 0
  %1211 = vmatprep.subr.bf16.mxu0 0
  %1212 = vmatpush1.bf16.msra.mxu0 0
  %1213 = vmatprep.subr.bf16.mxu0 0
  %1214 = vmatpush1.bf16.msra.mxu0 0
  %1215 = vmatprep.subr.bf16.mxu0 0
  %1216 = vmatpush1.bf16.msra.mxu0 0
  %1217 = vmatprep.subr.bf16.mxu0 0
  %1218 = vmatpush1.bf16.msra.mxu0 0
  %1219 = vmatprep.subr.bf16.mxu0 0
  %1220 = vmatpush1.bf16.msra.mxu0 0
  %1221 = vmatprep.subr.bf16.mxu0 0
  %1222 = vmatpush1.bf16.msra.mxu0 0
  %1223 = vmatprep.subr.bf16.mxu0 0
  %1224 = vmatpush1.bf16.msra.mxu0 0
  %1225 = vmatprep.subr.bf16.mxu0 0
  %1226 = vmatpush1.bf16.msra.mxu0 0
  %1227 = vmatprep.subr.bf16.mxu0 0
  %1228 = vmatpush1.bf16.msra.mxu0 0
  %1229 = vmatprep.subr.bf16.mxu0 0
  %1230 = vmatpush1.bf16.msra.mxu0 0
  %1231 = vmatprep.subr.bf16.mxu0 0
  %1232 = vmatpush1.bf16.msra.mxu0 0
  %1233 = vmatprep.mubr.bf16.mxu0 0
  %1234 = vmatmul.mubr.bf16.gmra.mrb[0].mxu0 %v1190
  %v1235 = vpop.f32.mrb[0].mxu0
  %v1236 = vadd.f32 0.0, %v1235
  %v1237 = vpop.f32.mrb[0].mxu0
  %v1238 = vpop.f32.mrb[0].mxu0
  %v1239 = vadd.f32 0.0, %v1238
  %v1240 = vpop.f32.mrb[0].mxu0
  %1241 = vmatprep.mubr.bf16.mxu0 0
  %1242 = vmatmul.mubr.bf16.gmra.mrb[0].mxu0 %v1193
  %v1243 = vpop.f32.mrb[0].mxu0
  %v1244 = vadd.f32 0.0, %v1243
  %v1245 = vpop.f32.mrb[0].mxu0
  %v1246 = vpop.f32.mrb[0].mxu0
  %v1247 = vadd.f32 0.0, %v1246
  %v1248 = vpop.f32.mrb[0].mxu0
  %1249 = vmatprep.mubr.bf16.mxu0 0
  %1250 = vmatmul.mubr.bf16.gmra.mrb[0].mxu0 %v1196
  %v1251 = vpop.f32.mrb[0].mxu0
  %v1252 = vadd.f32 0.0, %v1251
  %v1253 = vpop.f32.mrb[0].mxu0
  %v1254 = vpop.f32.mrb[0].mxu0
  %v1255 = vadd.f32 0.0, %v1254
  %v1256 = vpop.f32.mrb[0].mxu0
  %1257 = vmatprep.mubr.bf16.mxu0 0
  %1258 = vmatmul.mubr.bf16.gmra.mrb[0].mxu0 %v1199
  %v1259 = vpop.f32.mrb[0].mxu0
  %v1260 = vadd.f32 0.0, %v1259
  %v1261 = vpop.f32.mrb[0].mxu0
  %v1262 = vpop.f32.mrb[0].mxu0
  %v1263 = vadd.f32 0.0, %v1262
  %v1264 = vpop.f32.mrb[0].mxu0
  %1265 = vdwg.mxu0
  %1266 = vrot.lane.b32.xlu0 %v383, 56
  %v1267 = vpop.permute.xlu0 %1266
  %1268 = vrot.lane.b32.xlu0 %v384, 56
  %v1269 = vpop.permute.xlu0 %1268
  %1270 = vrot.lane.b32.xlu0 %v385, 56
  %v1271 = vpop.permute.xlu0 %1270
  %1272 = vrot.lane.b32.xlu0 %v386, 56
  %v1273 = vpop.permute.xlu0 %1272
  %v1279 = vsel %vm808, %v1165, 0
  %v1282 = vsel %vm808, %v1166, 0
  %v1285 = vsel %vm808, %v1167, 0
  %v1288 = vsel %vm808, %v1168, 0
  %1290 = vmatprep.subr.bf16.mxu0 0
  %1291 = vmatpush1.bf16.msra.mxu0 %v1267
  %1292 = vmatprep.subr.bf16.mxu0 0
  %1293 = vmatpush1.bf16.msra.mxu0 %v1269
  %1294 = vmatprep.subr.bf16.mxu0 0
  %1295 = vmatpush1.bf16.msra.mxu0 %v1271
  %1296 = vmatprep.subr.bf16.mxu0 0
  %1297 = vmatpush1.bf16.msra.mxu0 %v1273
  %1298 = vmatprep.subr.bf16.mxu0 0
  %1299 = vmatpush1.bf16.msra.mxu0 0
  %1300 = vmatprep.subr.bf16.mxu0 0
  %1301 = vmatpush1.bf16.msra.mxu0 0
  %1302 = vmatprep.subr.bf16.mxu0 0
  %1303 = vmatpush1.bf16.msra.mxu0 0
  %1304 = vmatprep.subr.bf16.mxu0 0
  %1305 = vmatpush1.bf16.msra.mxu0 0
  %1306 = vmatprep.subr.bf16.mxu0 0
  %1307 = vmatpush1.bf16.msra.mxu0 0
  %1308 = vmatprep.subr.bf16.mxu0 0
  %1309 = vmatpush1.bf16.msra.mxu0 0
  %1310 = vmatprep.subr.bf16.mxu0 0
  %1311 = vmatpush1.bf16.msra.mxu0 0
  %1312 = vmatprep.subr.bf16.mxu0 0
  %1313 = vmatpush1.bf16.msra.mxu0 0
  %1314 = vmatprep.subr.bf16.mxu0 0
  %1315 = vmatpush1.bf16.msra.mxu0 0
  %1316 = vmatprep.subr.bf16.mxu0 0
  %1317 = vmatpush1.bf16.msra.mxu0 0
  %1318 = vmatprep.subr.bf16.mxu0 0
  %1319 = vmatpush1.bf16.msra.mxu0 0
  %1320 = vmatprep.subr.bf16.mxu0 0
  %1321 = vmatpush1.bf16.msra.mxu0 0
  %1322 = vmatprep.mubr.bf16.mxu0 0
  %1323 = vmatmul.mubr.bf16.gmra.mrb[0].mxu0 %v1279
  %v1324 = vpop.f32.mrb[0].mxu0
  %v1325 = vadd.f32 0.0, %v1324
  %v1326 = vpop.f32.mrb[0].mxu0
  %v1327 = vpop.f32.mrb[0].mxu0
  %v1328 = vadd.f32 0.0, %v1327
  %v1329 = vpop.f32.mrb[0].mxu0
  %1330 = vmatprep.mubr.bf16.mxu0 0
  %1331 = vmatmul.mubr.bf16.gmra.mrb[0].mxu0 %v1282
  %v1332 = vpop.f32.mrb[0].mxu0
  %v1333 = vadd.f32 0.0, %v1332
  %v1334 = vpop.f32.mrb[0].mxu0
  %v1335 = vpop.f32.mrb[0].mxu0
  %v1336 = vadd.f32 0.0, %v1335
  %v1337 = vpop.f32.mrb[0].mxu0
  %1338 = vmatprep.mubr.bf16.mxu0 0
  %1339 = vmatmul.mubr.bf16.gmra.mrb[0].mxu0 %v1285
  %v1340 = vpop.f32.mrb[0].mxu0
  %v1341 = vadd.f32 0.0, %v1340
  %v1342 = vpop.f32.mrb[0].mxu0
  %v1343 = vpop.f32.mrb[0].mxu0
  %v1344 = vadd.f32 0.0, %v1343
  %v1345 = vpop.f32.mrb[0].mxu0
  %1346 = vmatprep.mubr.bf16.mxu0 0
  %1347 = vmatmul.mubr.bf16.gmra.mrb[0].mxu0 %v1288
  %v1348 = vpop.f32.mrb[0].mxu0
  %v1349 = vadd.f32 0.0, %v1348
  %v1350 = vpop.f32.mrb[0].mxu0
  %v1351 = vpop.f32.mrb[0].mxu0
  %v1352 = vadd.f32 0.0, %v1351
  %v1353 = vpop.f32.mrb[0].mxu0
  %1354 = vdwg.mxu0
  %1355 = vrot.lane.b32.xlu0 %v383, 48
  %v1356 = vpop.permute.xlu0 %1355
  %1357 = vrot.lane.b32.xlu0 %v384, 48
  %v1358 = vpop.permute.xlu0 %1357
  %1359 = vrot.lane.b32.xlu0 %v385, 48
  %v1360 = vpop.permute.xlu0 %1359
  %1361 = vrot.lane.b32.xlu0 %v386, 48
  %v1362 = vpop.permute.xlu0 %1361
  %v1368 = vsel %vm808, %v1169, 0
  %v1371 = vsel %vm808, %v1170, 0
  %v1374 = vsel %vm808, %v1171, 0
  %v1377 = vsel %vm808, %v1172, 0
  %1379 = vmatprep.subr.bf16.mxu0 0
  %1380 = vmatpush1.bf16.msra.mxu0 %v1356
  %1381 = vmatprep.subr.bf16.mxu0 0
  %1382 = vmatpush1.bf16.msra.mxu0 %v1358
  %1383 = vmatprep.subr.bf16.mxu0 0
  %1384 = vmatpush1.bf16.msra.mxu0 %v1360
  %1385 = vmatprep.subr.bf16.mxu0 0
  %1386 = vmatpush1.bf16.msra.mxu0 %v1362
  %1387 = vmatprep.subr.bf16.mxu0 0
  %1388 = vmatpush1.bf16.msra.mxu0 0
  %1389 = vmatprep.subr.bf16.mxu0 0
  %1390 = vmatpush1.bf16.msra.mxu0 0
  %1391 = vmatprep.subr.bf16.mxu0 0
  %1392 = vmatpush1.bf16.msra.mxu0 0
  %1393 = vmatprep.subr.bf16.mxu0 0
  %1394 = vmatpush1.bf16.msra.mxu0 0
  %1395 = vmatprep.subr.bf16.mxu0 0
  %1396 = vmatpush1.bf16.msra.mxu0 0
  %1397 = vmatprep.subr.bf16.mxu0 0
  %1398 = vmatpush1.bf16.msra.mxu0 0
  %1399 = vmatprep.subr.bf16.mxu0 0
  %1400 = vmatpush1.bf16.msra.mxu0 0
  %1401 = vmatprep.subr.bf16.mxu0 0
  %1402 = vmatpush1.bf16.msra.mxu0 0
  %1403 = vmatprep.subr.bf16.mxu0 0
  %1404 = vmatpush1.bf16.msra.mxu0 0
  %1405 = vmatprep.subr.bf16.mxu0 0
  %1406 = vmatpush1.bf16.msra.mxu0 0
  %1407 = vmatprep.subr.bf16.mxu0 0
  %1408 = vmatpush1.bf16.msra.mxu0 0
  %1409 = vmatprep.subr.bf16.mxu0 0
  %1410 = vmatpush1.bf16.msra.mxu0 0
  %1411 = vmatprep.mubr.bf16.mxu0 0
  %1412 = vmatmul.mubr.bf16.gmra.mrb[0].mxu0 %v1368
  %v1413 = vpop.f32.mrb[0].mxu0
  %v1414 = vadd.f32 0.0, %v1413
  %v1415 = vpop.f32.mrb[0].mxu0
  %v1416 = vpop.f32.mrb[0].mxu0
  %v1417 = vadd.f32 0.0, %v1416
  %v1418 = vpop.f32.mrb[0].mxu0
  %1419 = vmatprep.mubr.bf16.mxu0 0
  %1420 = vmatmul.mubr.bf16.gmra.mrb[0].mxu0 %v1371
  %v1421 = vpop.f32.mrb[0].mxu0
  %v1422 = vadd.f32 0.0, %v1421
  %v1423 = vpop.f32.mrb[0].mxu0
  %v1424 = vpop.f32.mrb[0].mxu0
  %v1425 = vadd.f32 0.0, %v1424
  %v1426 = vpop.f32.mrb[0].mxu0
  %1427 = vmatprep.mubr.bf16.mxu0 0
  %1428 = vmatmul.mubr.bf16.gmra.mrb[0].mxu0 %v1374
  %v1429 = vpop.f32.mrb[0].mxu0
  %v1430 = vadd.f32 0.0, %v1429
  %v1431 = vpop.f32.mrb[0].mxu0
  %v1432 = vpop.f32.mrb[0].mxu0
  %v1433 = vadd.f32 0.0, %v1432
  %v1434 = vpop.f32.mrb[0].mxu0
  %1435 = vmatprep.mubr.bf16.mxu0 0
  %1436 = vmatmul.mubr.bf16.gmra.mrb[0].mxu0 %v1377
  %v1437 = vpop.f32.mrb[0].mxu0
  %v1438 = vadd.f32 0.0, %v1437
  %v1439 = vpop.f32.mrb[0].mxu0
  %v1440 = vpop.f32.mrb[0].mxu0
  %v1441 = vadd.f32 0.0, %v1440
  %v1442 = vpop.f32.mrb[0].mxu0
  %1443 = vdwg.mxu0
  %1444 = vrot.lane.b32.xlu0 %v383, 40
  %v1445 = vpop.permute.xlu0 %1444
  %1446 = vrot.lane.b32.xlu0 %v384, 40
  %v1447 = vpop.permute.xlu0 %1446
  %1448 = vrot.lane.b32.xlu0 %v385, 40
  %v1449 = vpop.permute.xlu0 %1448
  %1450 = vrot.lane.b32.xlu0 %v386, 40
  %v1451 = vpop.permute.xlu0 %1450
  %v1457 = vsel %vm808, %v1173, 0
  %v1460 = vsel %vm808, %v1174, 0
  %v1463 = vsel %vm808, %v1175, 0
  %v1466 = vsel %vm808, %v1176, 0
  %1468 = vmatprep.subr.bf16.mxu0 0
  %1469 = vmatpush1.bf16.msra.mxu0 %v1445
  %1470 = vmatprep.subr.bf16.mxu0 0
  %1471 = vmatpush1.bf16.msra.mxu0 %v1447
  %1472 = vmatprep.subr.bf16.mxu0 0
  %1473 = vmatpush1.bf16.msra.mxu0 %v1449
  %1474 = vmatprep.subr.bf16.mxu0 0
  %1475 = vmatpush1.bf16.msra.mxu0 %v1451
  %1476 = vmatprep.subr.bf16.mxu0 0
  %1477 = vmatpush1.bf16.msra.mxu0 0
  %1478 = vmatprep.subr.bf16.mxu0 0
  %1479 = vmatpush1.bf16.msra.mxu0 0
  %1480 = vmatprep.subr.bf16.mxu0 0
  %1481 = vmatpush1.bf16.msra.mxu0 0
  %1482 = vmatprep.subr.bf16.mxu0 0
  %1483 = vmatpush1.bf16.msra.mxu0 0
  %1484 = vmatprep.subr.bf16.mxu0 0
  %1485 = vmatpush1.bf16.msra.mxu0 0
  %1486 = vmatprep.subr.bf16.mxu0 0
  %1487 = vmatpush1.bf16.msra.mxu0 0
  %1488 = vmatprep.subr.bf16.mxu0 0
  %1489 = vmatpush1.bf16.msra.mxu0 0
  %1490 = vmatprep.subr.bf16.mxu0 0
  %1491 = vmatpush1.bf16.msra.mxu0 0
  %1492 = vmatprep.subr.bf16.mxu0 0
  %1493 = vmatpush1.bf16.msra.mxu0 0
  %1494 = vmatprep.subr.bf16.mxu0 0
  %1495 = vmatpush1.bf16.msra.mxu0 0
  %1496 = vmatprep.subr.bf16.mxu0 0
  %1497 = vmatpush1.bf16.msra.mxu0 0
  %1498 = vmatprep.subr.bf16.mxu0 0
  %1499 = vmatpush1.bf16.msra.mxu0 0
  %1500 = vmatprep.mubr.bf16.mxu0 0
  %1501 = vmatmul.mubr.bf16.gmra.mrb[0].mxu0 %v1457
  %v1502 = vpop.f32.mrb[0].mxu0
  %v1503 = vadd.f32 0.0, %v1502
  %v1504 = vpop.f32.mrb[0].mxu0
  %v1505 = vpop.f32.mrb[0].mxu0
  %v1506 = vadd.f32 0.0, %v1505
  %v1507 = vpop.f32.mrb[0].mxu0
  %1508 = vmatprep.mubr.bf16.mxu0 0
  %1509 = vmatmul.mubr.bf16.gmra.mrb[0].mxu0 %v1460
  %v1510 = vpop.f32.mrb[0].mxu0
  %v1511 = vadd.f32 0.0, %v1510
  %v1512 = vpop.f32.mrb[0].mxu0
  %v1513 = vpop.f32.mrb[0].mxu0
  %v1514 = vadd.f32 0.0, %v1513
  %v1515 = vpop.f32.mrb[0].mxu0
  %1516 = vmatprep.mubr.bf16.mxu0 0
  %1517 = vmatmul.mubr.bf16.gmra.mrb[0].mxu0 %v1463
  %v1518 = vpop.f32.mrb[0].mxu0
  %v1519 = vadd.f32 0.0, %v1518
  %v1520 = vpop.f32.mrb[0].mxu0
  %v1521 = vpop.f32.mrb[0].mxu0
  %v1522 = vadd.f32 0.0, %v1521
  %v1523 = vpop.f32.mrb[0].mxu0
  %1524 = vmatprep.mubr.bf16.mxu0 0
  %1525 = vmatmul.mubr.bf16.gmra.mrb[0].mxu0 %v1466
  %v1526 = vpop.f32.mrb[0].mxu0
  %v1527 = vadd.f32 0.0, %v1526
  %v1528 = vpop.f32.mrb[0].mxu0
  %v1529 = vpop.f32.mrb[0].mxu0
  %v1530 = vadd.f32 0.0, %v1529
  %v1531 = vpop.f32.mrb[0].mxu0
  %1532 = vdwg.mxu0
  %1541 = vrot.lane.b32.xlu0 %v1325, 8
  %v1542 = vpop.permute.xlu0 %1541
  %1543 = vrot.lane.b32.xlu0 %v1328, 8
  %v1544 = vpop.permute.xlu0 %1543
  %1545 = vrot.lane.b32.xlu0 %v1333, 8
  %v1546 = vpop.permute.xlu0 %1545
  %1547 = vrot.lane.b32.xlu0 %v1336, 8
  %v1548 = vpop.permute.xlu0 %1547
  %1549 = vrot.lane.b32.xlu0 %v1341, 8
  %v1550 = vpop.permute.xlu0 %1549
  %1551 = vrot.lane.b32.xlu0 %v1344, 8
  %v1552 = vpop.permute.xlu0 %1551
  %1553 = vrot.lane.b32.xlu0 %v1349, 8
  %v1554 = vpop.permute.xlu0 %1553
  %1555 = vrot.lane.b32.xlu0 %v1352, 8
  %v1556 = vpop.permute.xlu0 %1555
  %1573 = vrot.lane.b32.xlu0 %v1414, 16
  %v1574 = vpop.permute.xlu0 %1573
  %1575 = vrot.lane.b32.xlu0 %v1417, 16
  %v1576 = vpop.permute.xlu0 %1575
  %1577 = vrot.lane.b32.xlu0 %v1422, 16
  %v1578 = vpop.permute.xlu0 %1577
  %1579 = vrot.lane.b32.xlu0 %v1425, 16
  %v1580 = vpop.permute.xlu0 %1579
  %1581 = vrot.lane.b32.xlu0 %v1430, 16
  %v1582 = vpop.permute.xlu0 %1581
  %1583 = vrot.lane.b32.xlu0 %v1433, 16
  %v1584 = vpop.permute.xlu0 %1583
  %1585 = vrot.lane.b32.xlu0 %v1438, 16
  %v1586 = vpop.permute.xlu0 %1585
  %1587 = vrot.lane.b32.xlu0 %v1441, 16
  %v1588 = vpop.permute.xlu0 %1587
  %1605 = vrot.lane.b32.xlu0 %v1503, 24
  %v1606 = vpop.permute.xlu0 %1605
  %1607 = vrot.lane.b32.xlu0 %v1506, 24
  %v1608 = vpop.permute.xlu0 %1607
  %1609 = vrot.lane.b32.xlu0 %v1511, 24
  %v1610 = vpop.permute.xlu0 %1609
  %1611 = vrot.lane.b32.xlu0 %v1514, 24
  %v1612 = vpop.permute.xlu0 %1611
  %1613 = vrot.lane.b32.xlu0 %v1519, 24
  %v1614 = vpop.permute.xlu0 %1613
  %1615 = vrot.lane.b32.xlu0 %v1522, 24
  %v1616 = vpop.permute.xlu0 %1615
  %1617 = vrot.lane.b32.xlu0 %v1527, 24
  %v1618 = vpop.permute.xlu0 %1617
  %1619 = vrot.lane.b32.xlu0 %v1530, 24
  %v1620 = vpop.permute.xlu0 %1619
  %v1629 = vsel %vm403, %v1236, %v1542
  %v1630 = vsel %vm403, %v1239, %v1544
  %v1631 = vsel %vm403, %v1244, %v1546
  %v1632 = vsel %vm403, %v1247, %v1548
  %v1633 = vsel %vm403, %v1252, %v1550
  %v1634 = vsel %vm403, %v1255, %v1552
  %v1635 = vsel %vm403, %v1260, %v1554
  %v1636 = vsel %vm403, %v1263, %v1556
  %vm1637 = vcmask 130048
  %v1638 = vsel %vm1637, %v1629, %v1574
  %v1639 = vsel %vm1637, %v1630, %v1576
  %v1640 = vsel %vm1637, %v1631, %v1578
  %v1641 = vsel %vm1637, %v1632, %v1580
  %v1642 = vsel %vm1637, %v1633, %v1582
  %v1643 = vsel %vm1637, %v1634, %v1584
  %v1644 = vsel %vm1637, %v1635, %v1586
  %v1645 = vsel %vm1637, %v1636, %v1588
  %vm1646 = vcmask 195584
  %v1647 = vsel %vm1646, %v1638, %v1606
  %v1648 = vsel %vm1646, %v1639, %v1608
  %v1649 = vsel %vm1646, %v1640, %v1610
  %v1650 = vsel %vm1646, %v1641, %v1612
  %v1651 = vsel %vm1646, %v1642, %v1614
  %v1652 = vsel %vm1646, %v1643, %v1616
  %v1653 = vsel %vm1646, %v1644, %v1618
  %v1654 = vsel %vm1646, %v1645, %v1620
  %1659 = vrot.lane.b32.xlu0 %v387, 96
  %v1660 = vpop.permute.xlu0 %1659
  %1661 = vrot.lane.b32.xlu0 %v388, 96
  %v1662 = vpop.permute.xlu0 %1661
  %1663 = vrot.lane.b32.xlu0 %v389, 96
  %v1664 = vpop.permute.xlu0 %1663
  %1665 = vrot.lane.b32.xlu0 %v390, 96
  %v1666 = vpop.permute.xlu0 %1665
  %v1668 = vsel %vm403, %v387, 0
  %v1671 = vsel %vm403, %v388, 0
  %v1674 = vsel %vm403, %v389, 0
  %v1677 = vsel %vm403, %v390, 0
  %v1680 = vsel %vm403, %v1660, 0
  %v1683 = vsel %vm403, %v1662, 0
  %v1686 = vsel %vm403, %v1664, 0
  %v1689 = vsel %vm403, %v1666, 0
  %1691 = vmatprep.subr.bf16.mxu0 0
  %1692 = vmatpush1.bf16.xpose.msra.mxu0 %v1680
  %1693 = vmatprep.subr.bf16.mxu0 0
  %1694 = vmatpush1.bf16.xpose.msra.mxu0 %v1683
  %1695 = vmatprep.subr.bf16.mxu0 0
  %1696 = vmatpush1.bf16.xpose.msra.mxu0 %v1686
  %1697 = vmatprep.subr.bf16.mxu0 0
  %1698 = vmatpush1.bf16.xpose.msra.mxu0 %v1689
  %1699 = vmatprep.subr.bf16.mxu0 0
  %1700 = vmatpush1.bf16.xpose.msra.mxu0 0
  %1701 = vmatprep.subr.bf16.mxu0 0
  %1702 = vmatpush1.bf16.xpose.msra.mxu0 0
  %1703 = vmatprep.subr.bf16.mxu0 0
  %1704 = vmatpush1.bf16.xpose.msra.mxu0 0
  %1705 = vmatprep.subr.bf16.mxu0 0
  %1706 = vmatpush1.bf16.xpose.msra.mxu0 0
  %1707 = vmatprep.subr.bf16.mxu0 0
  %1708 = vmatpush1.bf16.xpose.msra.mxu0 0
  %1709 = vmatprep.subr.bf16.mxu0 0
  %1710 = vmatpush1.bf16.xpose.msra.mxu0 0
  %1711 = vmatprep.subr.bf16.mxu0 0
  %1712 = vmatpush1.bf16.xpose.msra.mxu0 0
  %1713 = vmatprep.subr.bf16.mxu0 0
  %1714 = vmatpush1.bf16.xpose.msra.mxu0 0
  %1715 = vmatprep.subr.bf16.mxu0 0
  %1716 = vmatpush1.bf16.xpose.msra.mxu0 0
  %1717 = vmatprep.subr.bf16.mxu0 0
  %1718 = vmatpush1.bf16.xpose.msra.mxu0 0
  %1719 = vmatprep.subr.bf16.mxu0 0
  %1720 = vmatpush1.bf16.xpose.msra.mxu0 0
  %1721 = vmatprep.subr.bf16.mxu0 0
  %1722 = vmatpush1.bf16.xpose.msra.mxu0 0
  %1723 = vmatprep.mubr.bf16.mxu0 0
  %1724 = vmatmul.mubr.bf16.gmra.mrb[0].mxu0 %v1668
  %v1725 = vpop.f32.mrb[0].mxu0
  %v1726 = vadd.f32 0.0, %v1725
  %v1727 = vpop.f32.mrb[0].mxu0
  %v1728 = vpop.f32.mrb[0].mxu0
  %v1729 = vadd.f32 0.0, %v1728
  %v1730 = vpop.f32.mrb[0].mxu0
  %1731 = vmatprep.mubr.bf16.mxu0 0
  %1732 = vmatmul.mubr.bf16.gmra.mrb[0].mxu0 %v1671
  %v1733 = vpop.f32.mrb[0].mxu0
  %v1734 = vadd.f32 0.0, %v1733
  %v1735 = vpop.f32.mrb[0].mxu0
  %v1736 = vpop.f32.mrb[0].mxu0
  %v1737 = vadd.f32 0.0, %v1736
  %v1738 = vpop.f32.mrb[0].mxu0
  %1739 = vmatprep.mubr.bf16.mxu0 0
  %1740 = vmatmul.mubr.bf16.gmra.mrb[0].mxu0 %v1674
  %v1741 = vpop.f32.mrb[0].mxu0
  %v1742 = vadd.f32 0.0, %v1741
  %v1743 = vpop.f32.mrb[0].mxu0
  %v1744 = vpop.f32.mrb[0].mxu0
  %v1745 = vadd.f32 0.0, %v1744
  %v1746 = vpop.f32.mrb[0].mxu0
  %1747 = vmatprep.mubr.bf16.mxu0 0
  %1748 = vmatmul.mubr.bf16.gmra.mrb[0].mxu0 %v1677
  %v1749 = vpop.f32.mrb[0].mxu0
  %v1750 = vadd.f32 0.0, %v1749
  %v1751 = vpop.f32.mrb[0].mxu0
  %v1752 = vpop.f32.mrb[0].mxu0
  %v1753 = vadd.f32 0.0, %v1752
  %v1754 = vpop.f32.mrb[0].mxu0
  %1755 = vdwg.mxu0
  %1756 = vrot.lane.b32.xlu0 %v387, 120
  %v1757 = vpop.permute.xlu0 %1756
  %1758 = vrot.lane.b32.xlu0 %v388, 120
  %v1759 = vpop.permute.xlu0 %1758
  %1760 = vrot.lane.b32.xlu0 %v389, 120
  %v1761 = vpop.permute.xlu0 %1760
  %1762 = vrot.lane.b32.xlu0 %v390, 120
  %v1763 = vpop.permute.xlu0 %1762
  %1764 = vrot.lane.b32.xlu0 %v387, 88
  %v1765 = vpop.permute.xlu0 %1764
  %1766 = vrot.lane.b32.xlu0 %v388, 88
  %v1767 = vpop.permute.xlu0 %1766
  %1768 = vrot.lane.b32.xlu0 %v389, 88
  %v1769 = vpop.permute.xlu0 %1768
  %1770 = vrot.lane.b32.xlu0 %v390, 88
  %v1771 = vpop.permute.xlu0 %1770
  %v1773 = vsel %vm403, %v1757, 0
  %v1776 = vsel %vm403, %v1759, 0
  %v1779 = vsel %vm403, %v1761, 0
  %v1782 = vsel %vm403, %v1763, 0
  %v1785 = vsel %vm403, %v1765, 0
  %v1788 = vsel %vm403, %v1767, 0
  %v1791 = vsel %vm403, %v1769, 0
  %v1794 = vsel %vm403, %v1771, 0
  %1796 = vmatprep.subr.bf16.mxu0 0
  %1797 = vmatpush1.bf16.xpose.msra.mxu0 %v1785
  %1798 = vmatprep.subr.bf16.mxu0 0
  %1799 = vmatpush1.bf16.xpose.msra.mxu0 %v1788
  %1800 = vmatprep.subr.bf16.mxu0 0
  %1801 = vmatpush1.bf16.xpose.msra.mxu0 %v1791
  %1802 = vmatprep.subr.bf16.mxu0 0
  %1803 = vmatpush1.bf16.xpose.msra.mxu0 %v1794
  %1804 = vmatprep.subr.bf16.mxu0 0
  %1805 = vmatpush1.bf16.xpose.msra.mxu0 0
  %1806 = vmatprep.subr.bf16.mxu0 0
  %1807 = vmatpush1.bf16.xpose.msra.mxu0 0
  %1808 = vmatprep.subr.bf16.mxu0 0
  %1809 = vmatpush1.bf16.xpose.msra.mxu0 0
  %1810 = vmatprep.subr.bf16.mxu0 0
  %1811 = vmatpush1.bf16.xpose.msra.mxu0 0
  %1812 = vmatprep.subr.bf16.mxu0 0
  %1813 = vmatpush1.bf16.xpose.msra.mxu0 0
  %1814 = vmatprep.subr.bf16.mxu0 0
  %1815 = vmatpush1.bf16.xpose.msra.mxu0 0
  %1816 = vmatprep.subr.bf16.mxu0 0
  %1817 = vmatpush1.bf16.xpose.msra.mxu0 0
  %1818 = vmatprep.subr.bf16.mxu0 0
  %1819 = vmatpush1.bf16.xpose.msra.mxu0 0
  %1820 = vmatprep.subr.bf16.mxu0 0
  %1821 = vmatpush1.bf16.xpose.msra.mxu0 0
  %1822 = vmatprep.subr.bf16.mxu0 0
  %1823 = vmatpush1.bf16.xpose.msra.mxu0 0
  %1824 = vmatprep.subr.bf16.mxu0 0
  %1825 = vmatpush1.bf16.xpose.msra.mxu0 0
  %1826 = vmatprep.subr.bf16.mxu0 0
  %1827 = vmatpush1.bf16.xpose.msra.mxu0 0
  %1828 = vmatprep.mubr.bf16.mxu0 0
  %1829 = vmatmul.mubr.bf16.gmra.mrb[0].mxu0 %v1773
  %v1830 = vpop.f32.mrb[0].mxu0
  %v1831 = vadd.f32 0.0, %v1830
  %v1832 = vpop.f32.mrb[0].mxu0
  %v1833 = vpop.f32.mrb[0].mxu0
  %v1834 = vadd.f32 0.0, %v1833
  %v1835 = vpop.f32.mrb[0].mxu0
  %1836 = vmatprep.mubr.bf16.mxu0 0
  %1837 = vmatmul.mubr.bf16.gmra.mrb[0].mxu0 %v1776
  %v1838 = vpop.f32.mrb[0].mxu0
  %v1839 = vadd.f32 0.0, %v1838
  %v1840 = vpop.f32.mrb[0].mxu0
  %v1841 = vpop.f32.mrb[0].mxu0
  %v1842 = vadd.f32 0.0, %v1841
  %v1843 = vpop.f32.mrb[0].mxu0
  %1844 = vmatprep.mubr.bf16.mxu0 0
  %1845 = vmatmul.mubr.bf16.gmra.mrb[0].mxu0 %v1779
  %v1846 = vpop.f32.mrb[0].mxu0
  %v1847 = vadd.f32 0.0, %v1846
  %v1848 = vpop.f32.mrb[0].mxu0
  %v1849 = vpop.f32.mrb[0].mxu0
  %v1850 = vadd.f32 0.0, %v1849
  %v1851 = vpop.f32.mrb[0].mxu0
  %1852 = vmatprep.mubr.bf16.mxu0 0
  %1853 = vmatmul.mubr.bf16.gmra.mrb[0].mxu0 %v1782
  %v1854 = vpop.f32.mrb[0].mxu0
  %v1855 = vadd.f32 0.0, %v1854
  %v1856 = vpop.f32.mrb[0].mxu0
  %v1857 = vpop.f32.mrb[0].mxu0
  %v1858 = vadd.f32 0.0, %v1857
  %v1859 = vpop.f32.mrb[0].mxu0
  %1860 = vdwg.mxu0
  %1861 = vrot.lane.b32.xlu0 %v387, 112
  %v1862 = vpop.permute.xlu0 %1861
  %1863 = vrot.lane.b32.xlu0 %v388, 112
  %v1864 = vpop.permute.xlu0 %1863
  %1865 = vrot.lane.b32.xlu0 %v389, 112
  %v1866 = vpop.permute.xlu0 %1865
  %1867 = vrot.lane.b32.xlu0 %v390, 112
  %v1868 = vpop.permute.xlu0 %1867
  %1869 = vrot.lane.b32.xlu0 %v387, 80
  %v1870 = vpop.permute.xlu0 %1869
  %1871 = vrot.lane.b32.xlu0 %v388, 80
  %v1872 = vpop.permute.xlu0 %1871
  %1873 = vrot.lane.b32.xlu0 %v389, 80
  %v1874 = vpop.permute.xlu0 %1873
  %1875 = vrot.lane.b32.xlu0 %v390, 80
  %v1876 = vpop.permute.xlu0 %1875
  %v1878 = vsel %vm403, %v1862, 0
  %v1881 = vsel %vm403, %v1864, 0
  %v1884 = vsel %vm403, %v1866, 0
  %v1887 = vsel %vm403, %v1868, 0
  %v1890 = vsel %vm403, %v1870, 0
  %v1893 = vsel %vm403, %v1872, 0
  %v1896 = vsel %vm403, %v1874, 0
  %v1899 = vsel %vm403, %v1876, 0
  %1901 = vmatprep.subr.bf16.mxu0 0
  %1902 = vmatpush1.bf16.xpose.msra.mxu0 %v1890
  %1903 = vmatprep.subr.bf16.mxu0 0
  %1904 = vmatpush1.bf16.xpose.msra.mxu0 %v1893
  %1905 = vmatprep.subr.bf16.mxu0 0
  %1906 = vmatpush1.bf16.xpose.msra.mxu0 %v1896
  %1907 = vmatprep.subr.bf16.mxu0 0
  %1908 = vmatpush1.bf16.xpose.msra.mxu0 %v1899
  %1909 = vmatprep.subr.bf16.mxu0 0
  %1910 = vmatpush1.bf16.xpose.msra.mxu0 0
  %1911 = vmatprep.subr.bf16.mxu0 0
  %1912 = vmatpush1.bf16.xpose.msra.mxu0 0
  %1913 = vmatprep.subr.bf16.mxu0 0
  %1914 = vmatpush1.bf16.xpose.msra.mxu0 0
  %1915 = vmatprep.subr.bf16.mxu0 0
  %1916 = vmatpush1.bf16.xpose.msra.mxu0 0
  %1917 = vmatprep.subr.bf16.mxu0 0
  %1918 = vmatpush1.bf16.xpose.msra.mxu0 0
  %1919 = vmatprep.subr.bf16.mxu0 0
  %1920 = vmatpush1.bf16.xpose.msra.mxu0 0
  %1921 = vmatprep.subr.bf16.mxu0 0
  %1922 = vmatpush1.bf16.xpose.msra.mxu0 0
  %1923 = vmatprep.subr.bf16.mxu0 0
  %1924 = vmatpush1.bf16.xpose.msra.mxu0 0
  %1925 = vmatprep.subr.bf16.mxu0 0
  %1926 = vmatpush1.bf16.xpose.msra.mxu0 0
  %1927 = vmatprep.subr.bf16.mxu0 0
  %1928 = vmatpush1.bf16.xpose.msra.mxu0 0
  %1929 = vmatprep.subr.bf16.mxu0 0
  %1930 = vmatpush1.bf16.xpose.msra.mxu0 0
  %1931 = vmatprep.subr.bf16.mxu0 0
  %1932 = vmatpush1.bf16.xpose.msra.mxu0 0
  %1933 = vmatprep.mubr.bf16.mxu0 0
  %1934 = vmatmul.mubr.bf16.gmra.mrb[0].mxu0 %v1878
  %v1935 = vpop.f32.mrb[0].mxu0
  %v1936 = vadd.f32 0.0, %v1935
  %v1937 = vpop.f32.mrb[0].mxu0
  %v1938 = vpop.f32.mrb[0].mxu0
  %v1939 = vadd.f32 0.0, %v1938
  %v1940 = vpop.f32.mrb[0].mxu0
  %1941 = vmatprep.mubr.bf16.mxu0 0
  %1942 = vmatmul.mubr.bf16.gmra.mrb[0].mxu0 %v1881
  %v1943 = vpop.f32.mrb[0].mxu0
  %v1944 = vadd.f32 0.0, %v1943
  %v1945 = vpop.f32.mrb[0].mxu0
  %v1946 = vpop.f32.mrb[0].mxu0
  %v1947 = vadd.f32 0.0, %v1946
  %v1948 = vpop.f32.mrb[0].mxu0
  %1949 = vmatprep.mubr.bf16.mxu0 0
  %1950 = vmatmul.mubr.bf16.gmra.mrb[0].mxu0 %v1884
  %v1951 = vpop.f32.mrb[0].mxu0
  %v1952 = vadd.f32 0.0, %v1951
  %v1953 = vpop.f32.mrb[0].mxu0
  %v1954 = vpop.f32.mrb[0].mxu0
  %v1955 = vadd.f32 0.0, %v1954
  %v1956 = vpop.f32.mrb[0].mxu0
  %1957 = vmatprep.mubr.bf16.mxu0 0
  %1958 = vmatmul.mubr.bf16.gmra.mrb[0].mxu0 %v1887
  %v1959 = vpop.f32.mrb[0].mxu0
  %v1960 = vadd.f32 0.0, %v1959
  %v1961 = vpop.f32.mrb[0].mxu0
  %v1962 = vpop.f32.mrb[0].mxu0
  %v1963 = vadd.f32 0.0, %v1962
  %v1964 = vpop.f32.mrb[0].mxu0
  %1965 = vdwg.mxu0
  %1966 = vrot.lane.b32.xlu0 %v387, 104
  %v1967 = vpop.permute.xlu0 %1966
  %1968 = vrot.lane.b32.xlu0 %v388, 104
  %v1969 = vpop.permute.xlu0 %1968
  %1970 = vrot.lane.b32.xlu0 %v389, 104
  %v1971 = vpop.permute.xlu0 %1970
  %1972 = vrot.lane.b32.xlu0 %v390, 104
  %v1973 = vpop.permute.xlu0 %1972
  %1974 = vrot.lane.b32.xlu0 %v387, 72
  %v1975 = vpop.permute.xlu0 %1974
  %1976 = vrot.lane.b32.xlu0 %v388, 72
  %v1977 = vpop.permute.xlu0 %1976
  %1978 = vrot.lane.b32.xlu0 %v389, 72
  %v1979 = vpop.permute.xlu0 %1978
  %1980 = vrot.lane.b32.xlu0 %v390, 72
  %v1981 = vpop.permute.xlu0 %1980
  %v1983 = vsel %vm403, %v1967, 0
  %v1986 = vsel %vm403, %v1969, 0
  %v1989 = vsel %vm403, %v1971, 0
  %v1992 = vsel %vm403, %v1973, 0
  %v1995 = vsel %vm403, %v1975, 0
  %v1998 = vsel %vm403, %v1977, 0
  %v2001 = vsel %vm403, %v1979, 0
  %v2004 = vsel %vm403, %v1981, 0
  %2006 = vmatprep.subr.bf16.mxu0 0
  %2007 = vmatpush1.bf16.xpose.msra.mxu0 %v1995
  %2008 = vmatprep.subr.bf16.mxu0 0
  %2009 = vmatpush1.bf16.xpose.msra.mxu0 %v1998
  %2010 = vmatprep.subr.bf16.mxu0 0
  %2011 = vmatpush1.bf16.xpose.msra.mxu0 %v2001
  %2012 = vmatprep.subr.bf16.mxu0 0
  %2013 = vmatpush1.bf16.xpose.msra.mxu0 %v2004
  %2014 = vmatprep.subr.bf16.mxu0 0
  %2015 = vmatpush1.bf16.xpose.msra.mxu0 0
  %2016 = vmatprep.subr.bf16.mxu0 0
  %2017 = vmatpush1.bf16.xpose.msra.mxu0 0
  %2018 = vmatprep.subr.bf16.mxu0 0
  %2019 = vmatpush1.bf16.xpose.msra.mxu0 0
  %2020 = vmatprep.subr.bf16.mxu0 0
  %2021 = vmatpush1.bf16.xpose.msra.mxu0 0
  %2022 = vmatprep.subr.bf16.mxu0 0
  %2023 = vmatpush1.bf16.xpose.msra.mxu0 0
  %2024 = vmatprep.subr.bf16.mxu0 0
  %2025 = vmatpush1.bf16.xpose.msra.mxu0 0
  %2026 = vmatprep.subr.bf16.mxu0 0
  %2027 = vmatpush1.bf16.xpose.msra.mxu0 0
  %2028 = vmatprep.subr.bf16.mxu0 0
  %2029 = vmatpush1.bf16.xpose.msra.mxu0 0
  %2030 = vmatprep.subr.bf16.mxu0 0
  %2031 = vmatpush1.bf16.xpose.msra.mxu0 0
  %2032 = vmatprep.subr.bf16.mxu0 0
  %2033 = vmatpush1.bf16.xpose.msra.mxu0 0
  %2034 = vmatprep.subr.bf16.mxu0 0
  %2035 = vmatpush1.bf16.xpose.msra.mxu0 0
  %2036 = vmatprep.subr.bf16.mxu0 0
  %2037 = vmatpush1.bf16.xpose.msra.mxu0 0
  %2038 = vmatprep.mubr.bf16.mxu0 0
  %2039 = vmatmul.mubr.bf16.gmra.mrb[0].mxu0 %v1983
  %v2040 = vpop.f32.mrb[0].mxu0
  %v2041 = vadd.f32 0.0, %v2040
  %v2042 = vpop.f32.mrb[0].mxu0
  %v2043 = vpop.f32.mrb[0].mxu0
  %v2044 = vadd.f32 0.0, %v2043
  %v2045 = vpop.f32.mrb[0].mxu0
  %2046 = vmatprep.mubr.bf16.mxu0 0
  %2047 = vmatmul.mubr.bf16.gmra.mrb[0].mxu0 %v1986
  %v2048 = vpop.f32.mrb[0].mxu0
  %v2049 = vadd.f32 0.0, %v2048
  %v2050 = vpop.f32.mrb[0].mxu0
  %v2051 = vpop.f32.mrb[0].mxu0
  %v2052 = vadd.f32 0.0, %v2051
  %v2053 = vpop.f32.mrb[0].mxu0
  %2054 = vmatprep.mubr.bf16.mxu0 0
  %2055 = vmatmul.mubr.bf16.gmra.mrb[0].mxu0 %v1989
  %v2056 = vpop.f32.mrb[0].mxu0
  %v2057 = vadd.f32 0.0, %v2056
  %v2058 = vpop.f32.mrb[0].mxu0
  %v2059 = vpop.f32.mrb[0].mxu0
  %v2060 = vadd.f32 0.0, %v2059
  %v2061 = vpop.f32.mrb[0].mxu0
  %2062 = vmatprep.mubr.bf16.mxu0 0
  %2063 = vmatmul.mubr.bf16.gmra.mrb[0].mxu0 %v1992
  %v2064 = vpop.f32.mrb[0].mxu0
  %v2065 = vadd.f32 0.0, %v2064
  %v2066 = vpop.f32.mrb[0].mxu0
  %v2067 = vpop.f32.mrb[0].mxu0
  %v2068 = vadd.f32 0.0, %v2067
  %v2069 = vpop.f32.mrb[0].mxu0
  %2070 = vdwg.mxu0
  %v2071 = vsel %vm808, %v1726, -inf
  %2072 = vmax.xlane.f32.xlu0 %v2071
  %v2073 = vpop.xlane.xlu0 %2072
  %v2074 = vsel %vm808, %v1729, -inf
  %2075 = vmax.xlane.f32.xlu0 %v2074
  %v2076 = vpop.xlane.xlu0 %2075
  %v2077 = vsel %vm808, %v1734, -inf
  %2078 = vmax.xlane.f32.xlu0 %v2077
  %v2079 = vpop.xlane.xlu0 %2078
  %v2080 = vsel %vm808, %v1737, -inf
  %2081 = vmax.xlane.f32.xlu0 %v2080
  %v2082 = vpop.xlane.xlu0 %2081
  %v2083 = vsel %vm808, %v1742, -inf
  %2084 = vmax.xlane.f32.xlu0 %v2083
  %v2085 = vpop.xlane.xlu0 %2084
  %v2086 = vsel %vm808, %v1745, -inf
  %2087 = vmax.xlane.f32.xlu0 %v2086
  %v2088 = vpop.xlane.xlu0 %2087
  %v2089 = vsel %vm808, %v1750, -inf
  %2090 = vmax.xlane.f32.xlu0 %v2089
  %v2091 = vpop.xlane.xlu0 %2090
  %v2092 = vsel %vm808, %v1753, -inf
  %2093 = vmax.xlane.f32.xlu0 %v2092
  %v2094 = vpop.xlane.xlu0 %2093
  %v2095 = vsel %vm808, %v1831, -inf
  %2096 = vmax.xlane.f32.xlu0 %v2095
  %v2097 = vpop.xlane.xlu0 %2096
  %v2098 = vsel %vm808, %v1834, -inf
  %2099 = vmax.xlane.f32.xlu0 %v2098
  %v2100 = vpop.xlane.xlu0 %2099
  %v2101 = vsel %vm808, %v1839, -inf
  %2102 = vmax.xlane.f32.xlu0 %v2101
  %v2103 = vpop.xlane.xlu0 %2102
  %v2104 = vsel %vm808, %v1842, -inf
  %2105 = vmax.xlane.f32.xlu0 %v2104
  %v2106 = vpop.xlane.xlu0 %2105
  %v2107 = vsel %vm808, %v1847, -inf
  %2108 = vmax.xlane.f32.xlu0 %v2107
  %v2109 = vpop.xlane.xlu0 %2108
  %v2110 = vsel %vm808, %v1850, -inf
  %2111 = vmax.xlane.f32.xlu0 %v2110
  %v2112 = vpop.xlane.xlu0 %2111
  %v2113 = vsel %vm808, %v1855, -inf
  %2114 = vmax.xlane.f32.xlu0 %v2113
  %v2115 = vpop.xlane.xlu0 %2114
  %v2116 = vsel %vm808, %v1858, -inf
  %2117 = vmax.xlane.f32.xlu0 %v2116
  %v2118 = vpop.xlane.xlu0 %2117
  %v2119 = vsel %vm808, %v1936, -inf
  %2120 = vmax.xlane.f32.xlu0 %v2119
  %v2121 = vpop.xlane.xlu0 %2120
  %v2122 = vsel %vm808, %v1939, -inf
  %2123 = vmax.xlane.f32.xlu0 %v2122
  %v2124 = vpop.xlane.xlu0 %2123
  %v2125 = vsel %vm808, %v1944, -inf
  %2126 = vmax.xlane.f32.xlu0 %v2125
  %v2127 = vpop.xlane.xlu0 %2126
  %v2128 = vsel %vm808, %v1947, -inf
  %2129 = vmax.xlane.f32.xlu0 %v2128
  %v2130 = vpop.xlane.xlu0 %2129
  %v2131 = vsel %vm808, %v1952, -inf
  %2132 = vmax.xlane.f32.xlu0 %v2131
  %v2133 = vpop.xlane.xlu0 %2132
  %v2134 = vsel %vm808, %v1955, -inf
  %2135 = vmax.xlane.f32.xlu0 %v2134
  %v2136 = vpop.xlane.xlu0 %2135
  %v2137 = vsel %vm808, %v1960, -inf
  %2138 = vmax.xlane.f32.xlu0 %v2137
  %v2139 = vpop.xlane.xlu0 %2138
  %v2140 = vsel %vm808, %v1963, -inf
  %2141 = vmax.xlane.f32.xlu0 %v2140
  %v2142 = vpop.xlane.xlu0 %2141
  %v2143 = vsel %vm808, %v2041, -inf
  %2144 = vmax.xlane.f32.xlu0 %v2143
  %v2145 = vpop.xlane.xlu0 %2144
  %v2146 = vsel %vm808, %v2044, -inf
  %2147 = vmax.xlane.f32.xlu0 %v2146
  %v2148 = vpop.xlane.xlu0 %2147
  %v2149 = vsel %vm808, %v2049, -inf
  %2150 = vmax.xlane.f32.xlu0 %v2149
  %v2151 = vpop.xlane.xlu0 %2150
  %v2152 = vsel %vm808, %v2052, -inf
  %2153 = vmax.xlane.f32.xlu0 %v2152
  %v2154 = vpop.xlane.xlu0 %2153
  %v2155 = vsel %vm808, %v2057, -inf
  %2156 = vmax.xlane.f32.xlu0 %v2155
  %v2157 = vpop.xlane.xlu0 %2156
  %v2158 = vsel %vm808, %v2060, -inf
  %2159 = vmax.xlane.f32.xlu0 %v2158
  %v2160 = vpop.xlane.xlu0 %2159
  %v2161 = vsel %vm808, %v2065, -inf
  %2162 = vmax.xlane.f32.xlu0 %v2161
  %v2163 = vpop.xlane.xlu0 %2162
  %v2164 = vsel %vm808, %v2068, -inf
  %2165 = vmax.xlane.f32.xlu0 %v2164
  %v2166 = vpop.xlane.xlu0 %2165
  %v2167 = vsub.f32 %v1726, %v2073
  %v2168 = vsub.f32 %v1729, %v2076
  %v2169 = vsub.f32 %v1734, %v2079
  %v2170 = vsub.f32 %v1737, %v2082
  %v2171 = vsub.f32 %v1742, %v2085
  %v2172 = vsub.f32 %v1745, %v2088
  %v2173 = vsub.f32 %v1750, %v2091
  %v2174 = vsub.f32 %v1753, %v2094
  %v2175 = vsub.f32 %v1831, %v2097
  %v2176 = vsub.f32 %v1834, %v2100
  %v2177 = vsub.f32 %v1839, %v2103
  %v2178 = vsub.f32 %v1842, %v2106
  %v2179 = vsub.f32 %v1847, %v2109
  %v2180 = vsub.f32 %v1850, %v2112
  %v2181 = vsub.f32 %v1855, %v2115
  %v2182 = vsub.f32 %v1858, %v2118
  %v2183 = vsub.f32 %v1936, %v2121
  %v2184 = vsub.f32 %v1939, %v2124
  %v2185 = vsub.f32 %v1944, %v2127
  %v2186 = vsub.f32 %v1947, %v2130
  %v2187 = vsub.f32 %v1952, %v2133
  %v2188 = vsub.f32 %v1955, %v2136
  %v2189 = vsub.f32 %v1960, %v2139
  %v2190 = vsub.f32 %v1963, %v2142
  %v2191 = vsub.f32 %v2041, %v2145
  %v2192 = vsub.f32 %v2044, %v2148
  %v2193 = vsub.f32 %v2049, %v2151
  %v2194 = vsub.f32 %v2052, %v2154
  %v2195 = vsub.f32 %v2057, %v2157
  %v2196 = vsub.f32 %v2060, %v2160
  %v2197 = vsub.f32 %v2065, %v2163
  %v2198 = vsub.f32 %v2068, %v2166
  %v2199 = vmul.f32 %v2167, 1.442695
  %v2200 = vpow.pop %v2199
  %v2201 = vmul.f32 %v2168, 1.442695
  %v2202 = vpow.pop %v2201
  %v2203 = vmul.f32 %v2169, 1.442695
  %v2204 = vpow.pop %v2203
  %v2205 = vmul.f32 %v2170, 1.442695
  %v2206 = vpow.pop %v2205
  %v2207 = vmul.f32 %v2171, 1.442695
  %v2208 = vpow.pop %v2207
  %v2209 = vmul.f32 %v2172, 1.442695
  %v2210 = vpow.pop %v2209
  %v2211 = vmul.f32 %v2173, 1.442695
  %v2212 = vpow.pop %v2211
  %v2213 = vmul.f32 %v2174, 1.442695
  %v2214 = vpow.pop %v2213
  %v2215 = vmul.f32 %v2175, 1.442695
  %v2216 = vpow.pop %v2215
  %v2217 = vmul.f32 %v2176, 1.442695
  %v2218 = vpow.pop %v2217
  %v2219 = vmul.f32 %v2177, 1.442695
  %v2220 = vpow.pop %v2219
  %v2221 = vmul.f32 %v2178, 1.442695
  %v2222 = vpow.pop %v2221
  %v2223 = vmul.f32 %v2179, 1.442695
  %v2224 = vpow.pop %v2223
  %v2225 = vmul.f32 %v2180, 1.442695
  %v2226 = vpow.pop %v2225
  %v2227 = vmul.f32 %v2181, 1.442695
  %v2228 = vpow.pop %v2227
  %v2229 = vmul.f32 %v2182, 1.442695
  %v2230 = vpow.pop %v2229
  %v2231 = vmul.f32 %v2183, 1.442695
  %v2232 = vpow.pop %v2231
  %v2233 = vmul.f32 %v2184, 1.442695
  %v2234 = vpow.pop %v2233
  %v2235 = vmul.f32 %v2185, 1.442695
  %v2236 = vpow.pop %v2235
  %v2237 = vmul.f32 %v2186, 1.442695
  %v2238 = vpow.pop %v2237
  %v2239 = vmul.f32 %v2187, 1.442695
  %v2240 = vpow.pop %v2239
  %v2241 = vmul.f32 %v2188, 1.442695
  %v2242 = vpow.pop %v2241
  %v2243 = vmul.f32 %v2189, 1.442695
  %v2244 = vpow.pop %v2243
  %v2245 = vmul.f32 %v2190, 1.442695
  %v2246 = vpow.pop %v2245
  %v2247 = vmul.f32 %v2191, 1.442695
  %v2248 = vpow.pop %v2247
  %v2249 = vmul.f32 %v2192, 1.442695
  %v2250 = vpow.pop %v2249
  %v2251 = vmul.f32 %v2193, 1.442695
  %v2252 = vpow.pop %v2251
  %v2253 = vmul.f32 %v2194, 1.442695
  %v2254 = vpow.pop %v2253
  %v2255 = vmul.f32 %v2195, 1.442695
  %v2256 = vpow.pop %v2255
  %v2257 = vmul.f32 %v2196, 1.442695
  %v2258 = vpow.pop %v2257
  %v2259 = vmul.f32 %v2197, 1.442695
  %v2260 = vpow.pop %v2259
  %v2261 = vmul.f32 %v2198, 1.442695
  %v2262 = vpow.pop %v2261
  %v2263 = vsel %vm808, %v2200, 0.0
  %2264 = vadd.xlane.f32.xlu0 %v2263
  %v2265 = vpop.xlane.xlu0 %2264
  %v2266 = vsel %vm808, %v2202, 0.0
  %2267 = vadd.xlane.f32.xlu0 %v2266
  %v2268 = vpop.xlane.xlu0 %2267
  %v2269 = vsel %vm808, %v2204, 0.0
  %2270 = vadd.xlane.f32.xlu0 %v2269
  %v2271 = vpop.xlane.xlu0 %2270
  %v2272 = vsel %vm808, %v2206, 0.0
  %2273 = vadd.xlane.f32.xlu0 %v2272
  %v2274 = vpop.xlane.xlu0 %2273
  %v2275 = vsel %vm808, %v2208, 0.0
  %2276 = vadd.xlane.f32.xlu0 %v2275
  %v2277 = vpop.xlane.xlu0 %2276
  %v2278 = vsel %vm808, %v2210, 0.0
  %2279 = vadd.xlane.f32.xlu0 %v2278
  %v2280 = vpop.xlane.xlu0 %2279
  %v2281 = vsel %vm808, %v2212, 0.0
  %2282 = vadd.xlane.f32.xlu0 %v2281
  %v2283 = vpop.xlane.xlu0 %2282
  %v2284 = vsel %vm808, %v2214, 0.0
  %2285 = vadd.xlane.f32.xlu0 %v2284
  %v2286 = vpop.xlane.xlu0 %2285
  %v2287 = vsel %vm808, %v2216, 0.0
  %2288 = vadd.xlane.f32.xlu0 %v2287
  %v2289 = vpop.xlane.xlu0 %2288
  %v2290 = vsel %vm808, %v2218, 0.0
  %2291 = vadd.xlane.f32.xlu0 %v2290
  %v2292 = vpop.xlane.xlu0 %2291
  %v2293 = vsel %vm808, %v2220, 0.0
  %2294 = vadd.xlane.f32.xlu0 %v2293
  %v2295 = vpop.xlane.xlu0 %2294
  %v2296 = vsel %vm808, %v2222, 0.0
  %2297 = vadd.xlane.f32.xlu0 %v2296
  %v2298 = vpop.xlane.xlu0 %2297
  %v2299 = vsel %vm808, %v2224, 0.0
  %2300 = vadd.xlane.f32.xlu0 %v2299
  %v2301 = vpop.xlane.xlu0 %2300
  %v2302 = vsel %vm808, %v2226, 0.0
  %2303 = vadd.xlane.f32.xlu0 %v2302
  %v2304 = vpop.xlane.xlu0 %2303
  %v2305 = vsel %vm808, %v2228, 0.0
  %2306 = vadd.xlane.f32.xlu0 %v2305
  %v2307 = vpop.xlane.xlu0 %2306
  %v2308 = vsel %vm808, %v2230, 0.0
  %2309 = vadd.xlane.f32.xlu0 %v2308
  %v2310 = vpop.xlane.xlu0 %2309
  %v2311 = vsel %vm808, %v2232, 0.0
  %2312 = vadd.xlane.f32.xlu0 %v2311
  %v2313 = vpop.xlane.xlu0 %2312
  %v2314 = vsel %vm808, %v2234, 0.0
  %2315 = vadd.xlane.f32.xlu0 %v2314
  %v2316 = vpop.xlane.xlu0 %2315
  %v2317 = vsel %vm808, %v2236, 0.0
  %2318 = vadd.xlane.f32.xlu0 %v2317
  %v2319 = vpop.xlane.xlu0 %2318
  %v2320 = vsel %vm808, %v2238, 0.0
  %2321 = vadd.xlane.f32.xlu0 %v2320
  %v2322 = vpop.xlane.xlu0 %2321
  %v2323 = vsel %vm808, %v2240, 0.0
  %2324 = vadd.xlane.f32.xlu0 %v2323
  %v2325 = vpop.xlane.xlu0 %2324
  %v2326 = vsel %vm808, %v2242, 0.0
  %2327 = vadd.xlane.f32.xlu0 %v2326
  %v2328 = vpop.xlane.xlu0 %2327
  %v2329 = vsel %vm808, %v2244, 0.0
  %2330 = vadd.xlane.f32.xlu0 %v2329
  %v2331 = vpop.xlane.xlu0 %2330
  %v2332 = vsel %vm808, %v2246, 0.0
  %2333 = vadd.xlane.f32.xlu0 %v2332
  %v2334 = vpop.xlane.xlu0 %2333
  %v2335 = vsel %vm808, %v2248, 0.0
  %2336 = vadd.xlane.f32.xlu0 %v2335
  %v2337 = vpop.xlane.xlu0 %2336
  %v2338 = vsel %vm808, %v2250, 0.0
  %2339 = vadd.xlane.f32.xlu0 %v2338
  %v2340 = vpop.xlane.xlu0 %2339
  %v2341 = vsel %vm808, %v2252, 0.0
  %2342 = vadd.xlane.f32.xlu0 %v2341
  %v2343 = vpop.xlane.xlu0 %2342
  %v2344 = vsel %vm808, %v2254, 0.0
  %2345 = vadd.xlane.f32.xlu0 %v2344
  %v2346 = vpop.xlane.xlu0 %2345
  %v2347 = vsel %vm808, %v2256, 0.0
  %2348 = vadd.xlane.f32.xlu0 %v2347
  %v2349 = vpop.xlane.xlu0 %2348
  %v2350 = vsel %vm808, %v2258, 0.0
  %2351 = vadd.xlane.f32.xlu0 %v2350
  %v2352 = vpop.xlane.xlu0 %2351
  %v2353 = vsel %vm808, %v2260, 0.0
  %2354 = vadd.xlane.f32.xlu0 %v2353
  %v2355 = vpop.xlane.xlu0 %2354
  %v2356 = vsel %vm808, %v2262, 0.0
  %2357 = vadd.xlane.f32.xlu0 %v2356
  %v2358 = vpop.xlane.xlu0 %2357
  %v2359 = vrcp.pop %v2265
  %v2360 = vrcp.pop %v2268
  %v2361 = vrcp.pop %v2271
  %v2362 = vrcp.pop %v2274
  %v2363 = vrcp.pop %v2277
  %v2364 = vrcp.pop %v2280
  %v2365 = vrcp.pop %v2283
  %v2366 = vrcp.pop %v2286
  %v2367 = vrcp.pop %v2289
  %v2368 = vrcp.pop %v2292
  %v2369 = vrcp.pop %v2295
  %v2370 = vrcp.pop %v2298
  %v2371 = vrcp.pop %v2301
  %v2372 = vrcp.pop %v2304
  %v2373 = vrcp.pop %v2307
  %v2374 = vrcp.pop %v2310
  %v2375 = vrcp.pop %v2313
  %v2376 = vrcp.pop %v2316
  %v2377 = vrcp.pop %v2319
  %v2378 = vrcp.pop %v2322
  %v2379 = vrcp.pop %v2325
  %v2380 = vrcp.pop %v2328
  %v2381 = vrcp.pop %v2331
  %v2382 = vrcp.pop %v2334
  %v2383 = vrcp.pop %v2337
  %v2384 = vrcp.pop %v2340
  %v2385 = vrcp.pop %v2343
  %v2386 = vrcp.pop %v2346
  %v2387 = vrcp.pop %v2349
  %v2388 = vrcp.pop %v2352
  %v2389 = vrcp.pop %v2355
  %v2390 = vrcp.pop %v2358
  %v2391 = vmul.f32 %v2200, %v2359
  %v2392 = vmul.f32 %v2202, %v2360
  %v2393 = vmul.f32 %v2204, %v2361
  %v2394 = vmul.f32 %v2206, %v2362
  %v2395 = vmul.f32 %v2208, %v2363
  %v2396 = vmul.f32 %v2210, %v2364
  %v2397 = vmul.f32 %v2212, %v2365
  %v2398 = vmul.f32 %v2214, %v2366
  %v2399 = vmul.f32 %v2216, %v2367
  %v2400 = vmul.f32 %v2218, %v2368
  %v2401 = vmul.f32 %v2220, %v2369
  %v2402 = vmul.f32 %v2222, %v2370
  %v2403 = vmul.f32 %v2224, %v2371
  %v2404 = vmul.f32 %v2226, %v2372
  %v2405 = vmul.f32 %v2228, %v2373
  %v2406 = vmul.f32 %v2230, %v2374
  %v2407 = vmul.f32 %v2232, %v2375
  %v2408 = vmul.f32 %v2234, %v2376
  %v2409 = vmul.f32 %v2236, %v2377
  %v2410 = vmul.f32 %v2238, %v2378
  %v2411 = vmul.f32 %v2240, %v2379
  %v2412 = vmul.f32 %v2242, %v2380
  %v2413 = vmul.f32 %v2244, %v2381
  %v2414 = vmul.f32 %v2246, %v2382
  %v2415 = vmul.f32 %v2248, %v2383
  %v2416 = vmul.f32 %v2250, %v2384
  %v2417 = vmul.f32 %v2252, %v2385
  %v2418 = vmul.f32 %v2254, %v2386
  %v2419 = vmul.f32 %v2256, %v2387
  %v2420 = vmul.f32 %v2258, %v2388
  %v2421 = vmul.f32 %v2260, %v2389
  %v2422 = vmul.f32 %v2262, %v2390
  %v2423 = vpack.c.bf16 %v2392, %v2391
  %v2424 = vpack.c.bf16 %v2394, %v2393
  %v2425 = vpack.c.bf16 %v2396, %v2395
  %v2426 = vpack.c.bf16 %v2398, %v2397
  %v2427 = vpack.c.bf16 %v2400, %v2399
  %v2428 = vpack.c.bf16 %v2402, %v2401
  %v2429 = vpack.c.bf16 %v2404, %v2403
  %v2430 = vpack.c.bf16 %v2406, %v2405
  %v2431 = vpack.c.bf16 %v2408, %v2407
  %v2432 = vpack.c.bf16 %v2410, %v2409
  %v2433 = vpack.c.bf16 %v2412, %v2411
  %v2434 = vpack.c.bf16 %v2414, %v2413
  %v2435 = vpack.c.bf16 %v2416, %v2415
  %v2436 = vpack.c.bf16 %v2418, %v2417
  %v2437 = vpack.c.bf16 %v2420, %v2419
  %v2438 = vpack.c.bf16 %v2422, %v2421
  %2439 = vrot.lane.b32.xlu0 %v387, 64
  %v2440 = vpop.permute.xlu0 %2439
  %2441 = vrot.lane.b32.xlu0 %v388, 64
  %v2442 = vpop.permute.xlu0 %2441
  %2443 = vrot.lane.b32.xlu0 %v389, 64
  %v2444 = vpop.permute.xlu0 %2443
  %2445 = vrot.lane.b32.xlu0 %v390, 64
  %v2446 = vpop.permute.xlu0 %2445
  %v2452 = vsel %vm808, %v2423, 0
  %v2455 = vsel %vm808, %v2424, 0
  %v2458 = vsel %vm808, %v2425, 0
  %v2461 = vsel %vm808, %v2426, 0
  %2463 = vmatprep.subr.bf16.mxu0 0
  %2464 = vmatpush1.bf16.msra.mxu0 %v2440
  %2465 = vmatprep.subr.bf16.mxu0 0
  %2466 = vmatpush1.bf16.msra.mxu0 %v2442
  %2467 = vmatprep.subr.bf16.mxu0 0
  %2468 = vmatpush1.bf16.msra.mxu0 %v2444
  %2469 = vmatprep.subr.bf16.mxu0 0
  %2470 = vmatpush1.bf16.msra.mxu0 %v2446
  %2471 = vmatprep.subr.bf16.mxu0 0
  %2472 = vmatpush1.bf16.msra.mxu0 0
  %2473 = vmatprep.subr.bf16.mxu0 0
  %2474 = vmatpush1.bf16.msra.mxu0 0
  %2475 = vmatprep.subr.bf16.mxu0 0
  %2476 = vmatpush1.bf16.msra.mxu0 0
  %2477 = vmatprep.subr.bf16.mxu0 0
  %2478 = vmatpush1.bf16.msra.mxu0 0
  %2479 = vmatprep.subr.bf16.mxu0 0
  %2480 = vmatpush1.bf16.msra.mxu0 0
  %2481 = vmatprep.subr.bf16.mxu0 0
  %2482 = vmatpush1.bf16.msra.mxu0 0
  %2483 = vmatprep.subr.bf16.mxu0 0
  %2484 = vmatpush1.bf16.msra.mxu0 0
  %2485 = vmatprep.subr.bf16.mxu0 0
  %2486 = vmatpush1.bf16.msra.mxu0 0
  %2487 = vmatprep.subr.bf16.mxu0 0
  %2488 = vmatpush1.bf16.msra.mxu0 0
  %2489 = vmatprep.subr.bf16.mxu0 0
  %2490 = vmatpush1.bf16.msra.mxu0 0
  %2491 = vmatprep.subr.bf16.mxu0 0
  %2492 = vmatpush1.bf16.msra.mxu0 0
  %2493 = vmatprep.subr.bf16.mxu0 0
  %2494 = vmatpush1.bf16.msra.mxu0 0
  %2495 = vmatprep.mubr.bf16.mxu0 0
  %2496 = vmatmul.mubr.bf16.gmra.mrb[0].mxu0 %v2452
  %v2497 = vpop.f32.mrb[0].mxu0
  %v2498 = vadd.f32 0.0, %v2497
  %v2499 = vpop.f32.mrb[0].mxu0
  %v2500 = vpop.f32.mrb[0].mxu0
  %v2501 = vadd.f32 0.0, %v2500
  %v2502 = vpop.f32.mrb[0].mxu0
  %2503 = vmatprep.mubr.bf16.mxu0 0
  %2504 = vmatmul.mubr.bf16.gmra.mrb[0].mxu0 %v2455
  %v2505 = vpop.f32.mrb[0].mxu0
  %v2506 = vadd.f32 0.0, %v2505
  %v2507 = vpop.f32.mrb[0].mxu0
  %v2508 = vpop.f32.mrb[0].mxu0
  %v2509 = vadd.f32 0.0, %v2508
  %v2510 = vpop.f32.mrb[0].mxu0
  %2511 = vmatprep.mubr.bf16.mxu0 0
  %2512 = vmatmul.mubr.bf16.gmra.mrb[0].mxu0 %v2458
  %v2513 = vpop.f32.mrb[0].mxu0
  %v2514 = vadd.f32 0.0, %v2513
  %v2515 = vpop.f32.mrb[0].mxu0
  %v2516 = vpop.f32.mrb[0].mxu0
  %v2517 = vadd.f32 0.0, %v2516
  %v2518 = vpop.f32.mrb[0].mxu0
  %2519 = vmatprep.mubr.bf16.mxu0 0
  %2520 = vmatmul.mubr.bf16.gmra.mrb[0].mxu0 %v2461
  %v2521 = vpop.f32.mrb[0].mxu0
  %v2522 = vadd.f32 0.0, %v2521
  %v2523 = vpop.f32.mrb[0].mxu0
  %v2524 = vpop.f32.mrb[0].mxu0
  %v2525 = vadd.f32 0.0, %v2524
  %v2526 = vpop.f32.mrb[0].mxu0
  %2527 = vdwg.mxu0
  %2528 = vrot.lane.b32.xlu0 %v387, 56
  %v2529 = vpop.permute.xlu0 %2528
  %2530 = vrot.lane.b32.xlu0 %v388, 56
  %v2531 = vpop.permute.xlu0 %2530
  %2532 = vrot.lane.b32.xlu0 %v389, 56
  %v2533 = vpop.permute.xlu0 %2532
  %2534 = vrot.lane.b32.xlu0 %v390, 56
  %v2535 = vpop.permute.xlu0 %2534
  %v2541 = vsel %vm808, %v2427, 0
  %v2544 = vsel %vm808, %v2428, 0
  %v2547 = vsel %vm808, %v2429, 0
  %v2550 = vsel %vm808, %v2430, 0
  %2552 = vmatprep.subr.bf16.mxu0 0
  %2553 = vmatpush1.bf16.msra.mxu0 %v2529
  %2554 = vmatprep.subr.bf16.mxu0 0
  %2555 = vmatpush1.bf16.msra.mxu0 %v2531
  %2556 = vmatprep.subr.bf16.mxu0 0
  %2557 = vmatpush1.bf16.msra.mxu0 %v2533
  %2558 = vmatprep.subr.bf16.mxu0 0
  %2559 = vmatpush1.bf16.msra.mxu0 %v2535
  %2560 = vmatprep.subr.bf16.mxu0 0
  %2561 = vmatpush1.bf16.msra.mxu0 0
  %2562 = vmatprep.subr.bf16.mxu0 0
  %2563 = vmatpush1.bf16.msra.mxu0 0
  %2564 = vmatprep.subr.bf16.mxu0 0
  %2565 = vmatpush1.bf16.msra.mxu0 0
  %2566 = vmatprep.subr.bf16.mxu0 0
  %2567 = vmatpush1.bf16.msra.mxu0 0
  %2568 = vmatprep.subr.bf16.mxu0 0
  %2569 = vmatpush1.bf16.msra.mxu0 0
  %2570 = vmatprep.subr.bf16.mxu0 0
  %2571 = vmatpush1.bf16.msra.mxu0 0
  %2572 = vmatprep.subr.bf16.mxu0 0
  %2573 = vmatpush1.bf16.msra.mxu0 0
  %2574 = vmatprep.subr.bf16.mxu0 0
  %2575 = vmatpush1.bf16.msra.mxu0 0
  %2576 = vmatprep.subr.bf16.mxu0 0
  %2577 = vmatpush1.bf16.msra.mxu0 0
  %2578 = vmatprep.subr.bf16.mxu0 0
  %2579 = vmatpush1.bf16.msra.mxu0 0
  %2580 = vmatprep.subr.bf16.mxu0 0
  %2581 = vmatpush1.bf16.msra.mxu0 0
  %2582 = vmatprep.subr.bf16.mxu0 0
  %2583 = vmatpush1.bf16.msra.mxu0 0
  %2584 = vmatprep.mubr.bf16.mxu0 0
  %2585 = vmatmul.mubr.bf16.gmra.mrb[0].mxu0 %v2541
  %v2586 = vpop.f32.mrb[0].mxu0
  %v2587 = vadd.f32 0.0, %v2586
  %v2588 = vpop.f32.mrb[0].mxu0
  %v2589 = vpop.f32.mrb[0].mxu0
  %v2590 = vadd.f32 0.0, %v2589
  %v2591 = vpop.f32.mrb[0].mxu0
  %2592 = vmatprep.mubr.bf16.mxu0 0
  %2593 = vmatmul.mubr.bf16.gmra.mrb[0].mxu0 %v2544
  %v2594 = vpop.f32.mrb[0].mxu0
  %v2595 = vadd.f32 0.0, %v2594
  %v2596 = vpop.f32.mrb[0].mxu0
  %v2597 = vpop.f32.mrb[0].mxu0
  %v2598 = vadd.f32 0.0, %v2597
  %v2599 = vpop.f32.mrb[0].mxu0
  %2600 = vmatprep.mubr.bf16.mxu0 0
  %2601 = vmatmul.mubr.bf16.gmra.mrb[0].mxu0 %v2547
  %v2602 = vpop.f32.mrb[0].mxu0
  %v2603 = vadd.f32 0.0, %v2602
  %v2604 = vpop.f32.mrb[0].mxu0
  %v2605 = vpop.f32.mrb[0].mxu0
  %v2606 = vadd.f32 0.0, %v2605
  %v2607 = vpop.f32.mrb[0].mxu0
  %2608 = vmatprep.mubr.bf16.mxu0 0
  %2609 = vmatmul.mubr.bf16.gmra.mrb[0].mxu0 %v2550
  %v2610 = vpop.f32.mrb[0].mxu0
  %v2611 = vadd.f32 0.0, %v2610
  %v2612 = vpop.f32.mrb[0].mxu0
  %v2613 = vpop.f32.mrb[0].mxu0
  %v2614 = vadd.f32 0.0, %v2613
  %v2615 = vpop.f32.mrb[0].mxu0
  %2616 = vdwg.mxu0
  %2617 = vrot.lane.b32.xlu0 %v387, 48
  %v2618 = vpop.permute.xlu0 %2617
  %2619 = vrot.lane.b32.xlu0 %v388, 48
  %v2620 = vpop.permute.xlu0 %2619
  %2621 = vrot.lane.b32.xlu0 %v389, 48
  %v2622 = vpop.permute.xlu0 %2621
  %2623 = vrot.lane.b32.xlu0 %v390, 48
  %v2624 = vpop.permute.xlu0 %2623
  %v2630 = vsel %vm808, %v2431, 0
  %v2633 = vsel %vm808, %v2432, 0
  %v2636 = vsel %vm808, %v2433, 0
  %v2639 = vsel %vm808, %v2434, 0
  %2641 = vmatprep.subr.bf16.mxu0 0
  %2642 = vmatpush1.bf16.msra.mxu0 %v2618
  %2643 = vmatprep.subr.bf16.mxu0 0
  %2644 = vmatpush1.bf16.msra.mxu0 %v2620
  %2645 = vmatprep.subr.bf16.mxu0 0
  %2646 = vmatpush1.bf16.msra.mxu0 %v2622
  %2647 = vmatprep.subr.bf16.mxu0 0
  %2648 = vmatpush1.bf16.msra.mxu0 %v2624
  %2649 = vmatprep.subr.bf16.mxu0 0
  %2650 = vmatpush1.bf16.msra.mxu0 0
  %2651 = vmatprep.subr.bf16.mxu0 0
  %2652 = vmatpush1.bf16.msra.mxu0 0
  %2653 = vmatprep.subr.bf16.mxu0 0
  %2654 = vmatpush1.bf16.msra.mxu0 0
  %2655 = vmatprep.subr.bf16.mxu0 0
  %2656 = vmatpush1.bf16.msra.mxu0 0
  %2657 = vmatprep.subr.bf16.mxu0 0
  %2658 = vmatpush1.bf16.msra.mxu0 0
  %2659 = vmatprep.subr.bf16.mxu0 0
  %2660 = vmatpush1.bf16.msra.mxu0 0
  %2661 = vmatprep.subr.bf16.mxu0 0
  %2662 = vmatpush1.bf16.msra.mxu0 0
  %2663 = vmatprep.subr.bf16.mxu0 0
  %2664 = vmatpush1.bf16.msra.mxu0 0
  %2665 = vmatprep.subr.bf16.mxu0 0
  %2666 = vmatpush1.bf16.msra.mxu0 0
  %2667 = vmatprep.subr.bf16.mxu0 0
  %2668 = vmatpush1.bf16.msra.mxu0 0
  %2669 = vmatprep.subr.bf16.mxu0 0
  %2670 = vmatpush1.bf16.msra.mxu0 0
  %2671 = vmatprep.subr.bf16.mxu0 0
  %2672 = vmatpush1.bf16.msra.mxu0 0
  %2673 = vmatprep.mubr.bf16.mxu0 0
  %2674 = vmatmul.mubr.bf16.gmra.mrb[0].mxu0 %v2630
  %v2675 = vpop.f32.mrb[0].mxu0
  %v2676 = vadd.f32 0.0, %v2675
  %v2677 = vpop.f32.mrb[0].mxu0
  %v2678 = vpop.f32.mrb[0].mxu0
  %v2679 = vadd.f32 0.0, %v2678
  %v2680 = vpop.f32.mrb[0].mxu0
  %2681 = vmatprep.mubr.bf16.mxu0 0
  %2682 = vmatmul.mubr.bf16.gmra.mrb[0].mxu0 %v2633
  %v2683 = vpop.f32.mrb[0].mxu0
  %v2684 = vadd.f32 0.0, %v2683
  %v2685 = vpop.f32.mrb[0].mxu0
  %v2686 = vpop.f32.mrb[0].mxu0
  %v2687 = vadd.f32 0.0, %v2686
  %v2688 = vpop.f32.mrb[0].mxu0
  %2689 = vmatprep.mubr.bf16.mxu0 0
  %2690 = vmatmul.mubr.bf16.gmra.mrb[0].mxu0 %v2636
  %v2691 = vpop.f32.mrb[0].mxu0
  %v2692 = vadd.f32 0.0, %v2691
  %v2693 = vpop.f32.mrb[0].mxu0
  %v2694 = vpop.f32.mrb[0].mxu0
  %v2695 = vadd.f32 0.0, %v2694
  %v2696 = vpop.f32.mrb[0].mxu0
  %2697 = vmatprep.mubr.bf16.mxu0 0
  %2698 = vmatmul.mubr.bf16.gmra.mrb[0].mxu0 %v2639
  %v2699 = vpop.f32.mrb[0].mxu0
  %v2700 = vadd.f32 0.0, %v2699
  %v2701 = vpop.f32.mrb[0].mxu0
  %v2702 = vpop.f32.mrb[0].mxu0
  %v2703 = vadd.f32 0.0, %v2702
  %v2704 = vpop.f32.mrb[0].mxu0
  %2705 = vdwg.mxu0
  %2706 = vrot.lane.b32.xlu0 %v387, 40
  %v2707 = vpop.permute.xlu0 %2706
  %2708 = vrot.lane.b32.xlu0 %v388, 40
  %v2709 = vpop.permute.xlu0 %2708
  %2710 = vrot.lane.b32.xlu0 %v389, 40
  %v2711 = vpop.permute.xlu0 %2710
  %2712 = vrot.lane.b32.xlu0 %v390, 40
  %v2713 = vpop.permute.xlu0 %2712
  %v2719 = vsel %vm808, %v2435, 0
  %v2722 = vsel %vm808, %v2436, 0
  %v2725 = vsel %vm808, %v2437, 0
  %v2728 = vsel %vm808, %v2438, 0
  %2730 = vmatprep.subr.bf16.mxu0 0
  %2731 = vmatpush1.bf16.msra.mxu0 %v2707
  %2732 = vmatprep.subr.bf16.mxu0 0
  %2733 = vmatpush1.bf16.msra.mxu0 %v2709
  %2734 = vmatprep.subr.bf16.mxu0 0
  %2735 = vmatpush1.bf16.msra.mxu0 %v2711
  %2736 = vmatprep.subr.bf16.mxu0 0
  %2737 = vmatpush1.bf16.msra.mxu0 %v2713
  %2738 = vmatprep.subr.bf16.mxu0 0
  %2739 = vmatpush1.bf16.msra.mxu0 0
  %2740 = vmatprep.subr.bf16.mxu0 0
  %2741 = vmatpush1.bf16.msra.mxu0 0
  %2742 = vmatprep.subr.bf16.mxu0 0
  %2743 = vmatpush1.bf16.msra.mxu0 0
  %2744 = vmatprep.subr.bf16.mxu0 0
  %2745 = vmatpush1.bf16.msra.mxu0 0
  %2746 = vmatprep.subr.bf16.mxu0 0
  %2747 = vmatpush1.bf16.msra.mxu0 0
  %2748 = vmatprep.subr.bf16.mxu0 0
  %2749 = vmatpush1.bf16.msra.mxu0 0
  %2750 = vmatprep.subr.bf16.mxu0 0
  %2751 = vmatpush1.bf16.msra.mxu0 0
  %2752 = vmatprep.subr.bf16.mxu0 0
  %2753 = vmatpush1.bf16.msra.mxu0 0
  %2754 = vmatprep.subr.bf16.mxu0 0
  %2755 = vmatpush1.bf16.msra.mxu0 0
  %2756 = vmatprep.subr.bf16.mxu0 0
  %2757 = vmatpush1.bf16.msra.mxu0 0
  %2758 = vmatprep.subr.bf16.mxu0 0
  %2759 = vmatpush1.bf16.msra.mxu0 0
  %2760 = vmatprep.subr.bf16.mxu0 0
  %2761 = vmatpush1.bf16.msra.mxu0 0
  %2762 = vmatprep.mubr.bf16.mxu0 0
  %2763 = vmatmul.mubr.bf16.gmra.mrb[0].mxu0 %v2719
  %v2764 = vpop.f32.mrb[0].mxu0
  %v2765 = vadd.f32 0.0, %v2764
  %v2766 = vpop.f32.mrb[0].mxu0
  %v2767 = vpop.f32.mrb[0].mxu0
  %v2768 = vadd.f32 0.0, %v2767
  %v2769 = vpop.f32.mrb[0].mxu0
  %2770 = vmatprep.mubr.bf16.mxu0 0
  %2771 = vmatmul.mubr.bf16.gmra.mrb[0].mxu0 %v2722
  %v2772 = vpop.f32.mrb[0].mxu0
  %v2773 = vadd.f32 0.0, %v2772
  %v2774 = vpop.f32.mrb[0].mxu0
  %v2775 = vpop.f32.mrb[0].mxu0
  %v2776 = vadd.f32 0.0, %v2775
  %v2777 = vpop.f32.mrb[0].mxu0
  %2778 = vmatprep.mubr.bf16.mxu0 0
  %2779 = vmatmul.mubr.bf16.gmra.mrb[0].mxu0 %v2725
  %v2780 = vpop.f32.mrb[0].mxu0
  %v2781 = vadd.f32 0.0, %v2780
  %v2782 = vpop.f32.mrb[0].mxu0
  %v2783 = vpop.f32.mrb[0].mxu0
  %v2784 = vadd.f32 0.0, %v2783
  %v2785 = vpop.f32.mrb[0].mxu0
  %2786 = vmatprep.mubr.bf16.mxu0 0
  %2787 = vmatmul.mubr.bf16.gmra.mrb[0].mxu0 %v2728
  %v2788 = vpop.f32.mrb[0].mxu0
  %v2789 = vadd.f32 0.0, %v2788
  %v2790 = vpop.f32.mrb[0].mxu0
  %v2791 = vpop.f32.mrb[0].mxu0
  %v2792 = vadd.f32 0.0, %v2791
  %v2793 = vpop.f32.mrb[0].mxu0
  %2794 = vdwg.mxu0
  %2803 = vrot.lane.b32.xlu0 %v2587, 8
  %v2804 = vpop.permute.xlu0 %2803
  %2805 = vrot.lane.b32.xlu0 %v2590, 8
  %v2806 = vpop.permute.xlu0 %2805
  %2807 = vrot.lane.b32.xlu0 %v2595, 8
  %v2808 = vpop.permute.xlu0 %2807
  %2809 = vrot.lane.b32.xlu0 %v2598, 8
  %v2810 = vpop.permute.xlu0 %2809
  %2811 = vrot.lane.b32.xlu0 %v2603, 8
  %v2812 = vpop.permute.xlu0 %2811
  %2813 = vrot.lane.b32.xlu0 %v2606, 8
  %v2814 = vpop.permute.xlu0 %2813
  %2815 = vrot.lane.b32.xlu0 %v2611, 8
  %v2816 = vpop.permute.xlu0 %2815
  %2817 = vrot.lane.b32.xlu0 %v2614, 8
  %v2818 = vpop.permute.xlu0 %2817
  %2835 = vrot.lane.b32.xlu0 %v2676, 16
  %v2836 = vpop.permute.xlu0 %2835
  %2837 = vrot.lane.b32.xlu0 %v2679, 16
  %v2838 = vpop.permute.xlu0 %2837
  %2839 = vrot.lane.b32.xlu0 %v2684, 16
  %v2840 = vpop.permute.xlu0 %2839
  %2841 = vrot.lane.b32.xlu0 %v2687, 16
  %v2842 = vpop.permute.xlu0 %2841
  %2843 = vrot.lane.b32.xlu0 %v2692, 16
  %v2844 = vpop.permute.xlu0 %2843
  %2845 = vrot.lane.b32.xlu0 %v2695, 16
  %v2846 = vpop.permute.xlu0 %2845
  %2847 = vrot.lane.b32.xlu0 %v2700, 16
  %v2848 = vpop.permute.xlu0 %2847
  %2849 = vrot.lane.b32.xlu0 %v2703, 16
  %v2850 = vpop.permute.xlu0 %2849
  %2867 = vrot.lane.b32.xlu0 %v2765, 24
  %v2868 = vpop.permute.xlu0 %2867
  %2869 = vrot.lane.b32.xlu0 %v2768, 24
  %v2870 = vpop.permute.xlu0 %2869
  %2871 = vrot.lane.b32.xlu0 %v2773, 24
  %v2872 = vpop.permute.xlu0 %2871
  %2873 = vrot.lane.b32.xlu0 %v2776, 24
  %v2874 = vpop.permute.xlu0 %2873
  %2875 = vrot.lane.b32.xlu0 %v2781, 24
  %v2876 = vpop.permute.xlu0 %2875
  %2877 = vrot.lane.b32.xlu0 %v2784, 24
  %v2878 = vpop.permute.xlu0 %2877
  %2879 = vrot.lane.b32.xlu0 %v2789, 24
  %v2880 = vpop.permute.xlu0 %2879
  %2881 = vrot.lane.b32.xlu0 %v2792, 24
  %v2882 = vpop.permute.xlu0 %2881
  %v2891 = vsel %vm403, %v2498, %v2804
  %v2892 = vsel %vm403, %v2501, %v2806
  %v2893 = vsel %vm403, %v2506, %v2808
  %v2894 = vsel %vm403, %v2509, %v2810
  %v2895 = vsel %vm403, %v2514, %v2812
  %v2896 = vsel %vm403, %v2517, %v2814
  %v2897 = vsel %vm403, %v2522, %v2816
  %v2898 = vsel %vm403, %v2525, %v2818
  %v2899 = vsel %vm1637, %v2891, %v2836
  %v2900 = vsel %vm1637, %v2892, %v2838
  %v2901 = vsel %vm1637, %v2893, %v2840
  %v2902 = vsel %vm1637, %v2894, %v2842
  %v2903 = vsel %vm1637, %v2895, %v2844
  %v2904 = vsel %vm1637, %v2896, %v2846
  %v2905 = vsel %vm1637, %v2897, %v2848
  %v2906 = vsel %vm1637, %v2898, %v2850
  %v2907 = vsel %vm1646, %v2899, %v2868
  %v2908 = vsel %vm1646, %v2900, %v2870
  %v2909 = vsel %vm1646, %v2901, %v2872
  %v2910 = vsel %vm1646, %v2902, %v2874
  %v2911 = vsel %vm1646, %v2903, %v2876
  %v2912 = vsel %vm1646, %v2904, %v2878
  %v2913 = vsel %vm1646, %v2905, %v2880
  %v2914 = vsel %vm1646, %v2906, %v2882
  %v2915 = vpack.c.bf16 %v1648, %v1647
  %v2916 = vpack.c.bf16 %v1650, %v1649
  %v2917 = vpack.c.bf16 %v1652, %v1651
  %v2918 = vpack.c.bf16 %v1654, %v1653
  %v2919 = vpack.c.bf16 %v2908, %v2907
  %v2920 = vpack.c.bf16 %v2910, %v2909
  %v2921 = vpack.c.bf16 %v2912, %v2911
  %v2922 = vpack.c.bf16 %v2914, %v2913
  %v2923 = vld [vmem:[%s5] sm:$0xf]
  %v2924 = vld [vmem:[%s5 + $0x4] sm:$0xf]
  %v2925 = vld [vmem:[%s5 + $0x8] sm:$0xf]
  %v2926 = vld [vmem:[%s5 + $0xc] sm:$0xf]
  %v2927 = vld [vmem:[%s6] sm:$0x1]
  %v2929 = vlaneseq
  %v2930 = vshrl.u32 %v2929, 7
  %v2931 = vsub.s32 0, %v2930
  %v2932 = vrot.slane %v2927, %v2931
  %v2938 = vunpack.c.l.b16 %v2923
  %v2939 = vunpack.c.l.b16 %v2924
  %v2940 = vunpack.c.l.b16 %v2925
  %v2941 = vunpack.c.l.b16 %v2926
  %v2942 = vpack.c.b16 %v2939, %v2938
  %v2943 = vpack.c.b16 %v2941, %v2940
  %v2947 = vsel %vm93, %v2915, 0
  %v2950 = vsel %vm93, %v2916, 0
  %v2953 = vsel %vm93, %v2917, 0
  %v2956 = vsel %vm93, %v2918, 0
  %v2959 = vsel %vm93, %v2919, 0
  %v2962 = vsel %vm93, %v2920, 0
  %v2965 = vsel %vm93, %v2921, 0
  %v2968 = vsel %vm93, %v2922, 0
  %2970 = vmatprep.subr.bf16.mxu0 0
  %2971 = vmatpush1.bf16.msra.mxu0 %v2942
  %2972 = vmatprep.subr.bf16.mxu0 0
  %2973 = vmatpush1.bf16.msra.mxu0 %v2943
  %2974 = vmatprep.subr.bf16.mxu0 0
  %2975 = vmatpush1.bf16.msra.mxu0 0
  %2976 = vmatprep.subr.bf16.mxu0 0
  %2977 = vmatpush1.bf16.msra.mxu0 0
  %2978 = vmatprep.subr.bf16.mxu0 0
  %2979 = vmatpush1.bf16.msra.mxu0 0
  %2980 = vmatprep.subr.bf16.mxu0 0
  %2981 = vmatpush1.bf16.msra.mxu0 0
  %2982 = vmatprep.subr.bf16.mxu0 0
  %2983 = vmatpush1.bf16.msra.mxu0 0
  %2984 = vmatprep.subr.bf16.mxu0 0
  %2985 = vmatpush1.bf16.msra.mxu0 0
  %2986 = vmatprep.subr.bf16.mxu0 0
  %2987 = vmatpush1.bf16.msra.mxu0 0
  %2988 = vmatprep.subr.bf16.mxu0 0
  %2989 = vmatpush1.bf16.msra.mxu0 0
  %2990 = vmatprep.subr.bf16.mxu0 0
  %2991 = vmatpush1.bf16.msra.mxu0 0
  %2992 = vmatprep.subr.bf16.mxu0 0
  %2993 = vmatpush1.bf16.msra.mxu0 0
  %2994 = vmatprep.subr.bf16.mxu0 0
  %2995 = vmatpush1.bf16.msra.mxu0 0
  %2996 = vmatprep.subr.bf16.mxu0 0
  %2997 = vmatpush1.bf16.msra.mxu0 0
  %2998 = vmatprep.subr.bf16.mxu0 0
  %2999 = vmatpush1.bf16.msra.mxu0 0
  %3000 = vmatprep.subr.bf16.mxu0 0
  %3001 = vmatpush1.bf16.msra.mxu0 0
  %3002 = vmatprep.mubr.bf16.mxu0 0
  %3003 = vmatmul.mubr.bf16.gmra.mrb[0].mxu0 %v2947
  %v3004 = vpop.f32.mrb[0].mxu0
  %v3005 = vadd.f32 %v2932, %v3004
  %v3006 = vpop.f32.mrb[0].mxu0
  %v3007 = vpop.f32.mrb[0].mxu0
  %v3008 = vadd.f32 %v2932, %v3007
  %v3009 = vpop.f32.mrb[0].mxu0
  %3010 = vmatprep.mubr.bf16.mxu0 0
  %3011 = vmatmul.mubr.bf16.gmra.mrb[0].mxu0 %v2950
  %v3012 = vpop.f32.mrb[0].mxu0
  %v3013 = vadd.f32 %v2932, %v3012
  %v3014 = vpop.f32.mrb[0].mxu0
  %v3015 = vpop.f32.mrb[0].mxu0
  %v3016 = vadd.f32 %v2932, %v3015
  %v3017 = vpop.f32.mrb[0].mxu0
  %3018 = vmatprep.mubr.bf16.mxu0 0
  %3019 = vmatmul.mubr.bf16.gmra.mrb[0].mxu0 %v2953
  %v3020 = vpop.f32.mrb[0].mxu0
  %v3021 = vadd.f32 %v2932, %v3020
  %v3022 = vpop.f32.mrb[0].mxu0
  %v3023 = vpop.f32.mrb[0].mxu0
  %v3024 = vadd.f32 %v2932, %v3023
  %v3025 = vpop.f32.mrb[0].mxu0
  %3026 = vmatprep.mubr.bf16.mxu0 0
  %3027 = vmatmul.mubr.bf16.gmra.mrb[0].mxu0 %v2956
  %v3028 = vpop.f32.mrb[0].mxu0
  %v3029 = vadd.f32 %v2932, %v3028
  %v3030 = vpop.f32.mrb[0].mxu0
  %v3031 = vpop.f32.mrb[0].mxu0
  %v3032 = vadd.f32 %v2932, %v3031
  %v3033 = vpop.f32.mrb[0].mxu0
  %3034 = vmatprep.mubr.bf16.mxu0 0
  %3035 = vmatmul.mubr.bf16.gmra.mrb[0].mxu0 %v2959
  %v3036 = vpop.f32.mrb[0].mxu0
  %v3037 = vadd.f32 %v2932, %v3036
  %v3038 = vpop.f32.mrb[0].mxu0
  %v3039 = vpop.f32.mrb[0].mxu0
  %v3040 = vadd.f32 %v2932, %v3039
  %v3041 = vpop.f32.mrb[0].mxu0
  %3042 = vmatprep.mubr.bf16.mxu0 0
  %3043 = vmatmul.mubr.bf16.gmra.mrb[0].mxu0 %v2962
  %v3044 = vpop.f32.mrb[0].mxu0
  %v3045 = vadd.f32 %v2932, %v3044
  %v3046 = vpop.f32.mrb[0].mxu0
  %v3047 = vpop.f32.mrb[0].mxu0
  %v3048 = vadd.f32 %v2932, %v3047
  %v3049 = vpop.f32.mrb[0].mxu0
  %3050 = vmatprep.mubr.bf16.mxu0 0
  %3051 = vmatmul.mubr.bf16.gmra.mrb[0].mxu0 %v2965
  %v3052 = vpop.f32.mrb[0].mxu0
  %v3053 = vadd.f32 %v2932, %v3052
  %v3054 = vpop.f32.mrb[0].mxu0
  %v3055 = vpop.f32.mrb[0].mxu0
  %v3056 = vadd.f32 %v2932, %v3055
  %v3057 = vpop.f32.mrb[0].mxu0
  %3058 = vmatprep.mubr.bf16.mxu0 0
  %3059 = vmatmul.mubr.bf16.gmra.mrb[0].mxu0 %v2968
  %v3060 = vpop.f32.mrb[0].mxu0
  %v3061 = vadd.f32 %v2932, %v3060
  %v3062 = vpop.f32.mrb[0].mxu0
  %v3063 = vpop.f32.mrb[0].mxu0
  %v3064 = vadd.f32 %v2932, %v3063
  %v3065 = vpop.f32.mrb[0].mxu0
  %3066 = vdwg.mxu0
  %v3067 = vadd.f32 %v3005, %v215
  %v3068 = vadd.f32 %v3008, %v216
  %v3069 = vadd.f32 %v3013, %v217
  %v3070 = vadd.f32 %v3016, %v218
  %v3071 = vadd.f32 %v3021, %v219
  %v3072 = vadd.f32 %v3024, %v220
  %v3073 = vadd.f32 %v3029, %v221
  %v3074 = vadd.f32 %v3032, %v222
  %v3075 = vadd.f32 %v3037, %v223
  %v3076 = vadd.f32 %v3040, %v224
  %v3077 = vadd.f32 %v3045, %v225
  %v3078 = vadd.f32 %v3048, %v226
  %v3079 = vadd.f32 %v3053, %v227
  %v3080 = vadd.f32 %v3056, %v228
  %v3081 = vadd.f32 %v3061, %v229
  %v3082 = vadd.f32 %v3064, %v230
  %v3083 = vpack.c.bf16 %v3068, %v3067
  %v3084 = vpack.c.bf16 %v3070, %v3069
  %v3085 = vpack.c.bf16 %v3072, %v3071
  %v3086 = vpack.c.bf16 %v3074, %v3073
  %v3087 = vpack.c.bf16 %v3076, %v3075
  %v3088 = vpack.c.bf16 %v3078, %v3077
  %v3089 = vpack.c.bf16 %v3080, %v3079
  %v3090 = vpack.c.bf16 %v3082, %v3081
  %v3091 = vld [vmem:[%s7] sm:$0xf]
  %v3092 = vld [vmem:[%s7 + $0x4] sm:$0xf]
  %v3093 = vld [vmem:[%s7 + $0x8] sm:$0xf]
  %v3094 = vld [vmem:[%s7 + $0xc] sm:$0xf]
  %v3099 = vunpack.c.l.b16 %v3091
  %v3100 = vunpack.c.l.b16 %v3092
  %v3101 = vunpack.c.l.b16 %v3093
  %v3102 = vunpack.c.l.b16 %v3094
  %v3103 = vpack.c.b16 %v3100, %v3099
  %v3104 = vpack.c.b16 %v3102, %v3101
  %v3108 = vsel %vm93, %v3083, 0
  %v3111 = vsel %vm93, %v3084, 0
  %v3114 = vsel %vm93, %v3085, 0
  %v3117 = vsel %vm93, %v3086, 0
  %v3120 = vsel %vm93, %v3087, 0
  %v3123 = vsel %vm93, %v3088, 0
  %v3126 = vsel %vm93, %v3089, 0
  %v3129 = vsel %vm93, %v3090, 0
  %3131 = vmatprep.subr.bf16.mxu0 0
  %3132 = vmatpush1.bf16.msra.mxu0 %v3103
  %3133 = vmatprep.subr.bf16.mxu0 0
  %3134 = vmatpush1.bf16.msra.mxu0 %v3104
  %3135 = vmatprep.subr.bf16.mxu0 0
  %3136 = vmatpush1.bf16.msra.mxu0 0
  %3137 = vmatprep.subr.bf16.mxu0 0
  %3138 = vmatpush1.bf16.msra.mxu0 0
  %3139 = vmatprep.subr.bf16.mxu0 0
  %3140 = vmatpush1.bf16.msra.mxu0 0
  %3141 = vmatprep.subr.bf16.mxu0 0
  %3142 = vmatpush1.bf16.msra.mxu0 0
  %3143 = vmatprep.subr.bf16.mxu0 0
  %3144 = vmatpush1.bf16.msra.mxu0 0
  %3145 = vmatprep.subr.bf16.mxu0 0
  %3146 = vmatpush1.bf16.msra.mxu0 0
  %3147 = vmatprep.subr.bf16.mxu0 0
  %3148 = vmatpush1.bf16.msra.mxu0 0
  %3149 = vmatprep.subr.bf16.mxu0 0
  %3150 = vmatpush1.bf16.msra.mxu0 0
  %3151 = vmatprep.subr.bf16.mxu0 0
  %3152 = vmatpush1.bf16.msra.mxu0 0
  %3153 = vmatprep.subr.bf16.mxu0 0
  %3154 = vmatpush1.bf16.msra.mxu0 0
  %3155 = vmatprep.subr.bf16.mxu0 0
  %3156 = vmatpush1.bf16.msra.mxu0 0
  %3157 = vmatprep.subr.bf16.mxu0 0
  %3158 = vmatpush1.bf16.msra.mxu0 0
  %3159 = vmatprep.subr.bf16.mxu0 0
  %3160 = vmatpush1.bf16.msra.mxu0 0
  %3161 = vmatprep.subr.bf16.mxu0 0
  %3162 = vmatpush1.bf16.msra.mxu0 0
  %3163 = vmatprep.mubr.bf16.mxu0 0
  %3164 = vmatmul.mubr.bf16.gmra.mrb[0].mxu0 %v3108
  %v3165 = vpop.f32.mrb[0].mxu0
  %v3166 = vadd.f32 %v3067, %v3165
  %v3167 = vpop.f32.mrb[0].mxu0
  %v3168 = vpop.f32.mrb[0].mxu0
  %v3169 = vadd.f32 %v3068, %v3168
  %v3170 = vpop.f32.mrb[0].mxu0
  %3171 = vmatprep.mubr.bf16.mxu0 0
  %3172 = vmatmul.mubr.bf16.gmra.mrb[0].mxu0 %v3111
  %v3173 = vpop.f32.mrb[0].mxu0
  %v3174 = vadd.f32 %v3069, %v3173
  %v3175 = vpop.f32.mrb[0].mxu0
  %v3176 = vpop.f32.mrb[0].mxu0
  %v3177 = vadd.f32 %v3070, %v3176
  %v3178 = vpop.f32.mrb[0].mxu0
  %3179 = vmatprep.mubr.bf16.mxu0 0
  %3180 = vmatmul.mubr.bf16.gmra.mrb[0].mxu0 %v3114
  %v3181 = vpop.f32.mrb[0].mxu0
  %v3182 = vadd.f32 %v3071, %v3181
  %v3183 = vpop.f32.mrb[0].mxu0
  %v3184 = vpop.f32.mrb[0].mxu0
  %v3185 = vadd.f32 %v3072, %v3184
  %v3186 = vpop.f32.mrb[0].mxu0
  %3187 = vmatprep.mubr.bf16.mxu0 0
  %3188 = vmatmul.mubr.bf16.gmra.mrb[0].mxu0 %v3117
  %v3189 = vpop.f32.mrb[0].mxu0
  %v3190 = vadd.f32 %v3073, %v3189
  %v3191 = vpop.f32.mrb[0].mxu0
  %v3192 = vpop.f32.mrb[0].mxu0
  %v3193 = vadd.f32 %v3074, %v3192
  %v3194 = vpop.f32.mrb[0].mxu0
  %3195 = vmatprep.mubr.bf16.mxu0 0
  %3196 = vmatmul.mubr.bf16.gmra.mrb[0].mxu0 %v3120
  %v3197 = vpop.f32.mrb[0].mxu0
  %v3198 = vadd.f32 %v3075, %v3197
  %v3199 = vpop.f32.mrb[0].mxu0
  %v3200 = vpop.f32.mrb[0].mxu0
  %v3201 = vadd.f32 %v3076, %v3200
  %v3202 = vpop.f32.mrb[0].mxu0
  %3203 = vmatprep.mubr.bf16.mxu0 0
  %3204 = vmatmul.mubr.bf16.gmra.mrb[0].mxu0 %v3123
  %v3205 = vpop.f32.mrb[0].mxu0
  %v3206 = vadd.f32 %v3077, %v3205
  %v3207 = vpop.f32.mrb[0].mxu0
  %v3208 = vpop.f32.mrb[0].mxu0
  %v3209 = vadd.f32 %v3078, %v3208
  %v3210 = vpop.f32.mrb[0].mxu0
  %3211 = vmatprep.mubr.bf16.mxu0 0
  %3212 = vmatmul.mubr.bf16.gmra.mrb[0].mxu0 %v3126
  %v3213 = vpop.f32.mrb[0].mxu0
  %v3214 = vadd.f32 %v3079, %v3213
  %v3215 = vpop.f32.mrb[0].mxu0
  %v3216 = vpop.f32.mrb[0].mxu0
  %v3217 = vadd.f32 %v3080, %v3216
  %v3218 = vpop.f32.mrb[0].mxu0
  %3219 = vmatprep.mubr.bf16.mxu0 0
  %3220 = vmatmul.mubr.bf16.gmra.mrb[0].mxu0 %v3129
  %v3221 = vpop.f32.mrb[0].mxu0
  %v3222 = vadd.f32 %v3081, %v3221
  %v3223 = vpop.f32.mrb[0].mxu0
  %v3224 = vpop.f32.mrb[0].mxu0
  %v3225 = vadd.f32 %v3082, %v3224
  %v3226 = vpop.f32.mrb[0].mxu0
  %3227 = vdwg.mxu0
  %v3228 = vpack.c.bf16 %v3169, %v3166
  %v3229 = vpack.c.bf16 %v3177, %v3174
  %v3230 = vpack.c.bf16 %v3185, %v3182
  %v3231 = vpack.c.bf16 %v3193, %v3190
  %v3232 = vpack.c.bf16 %v3201, %v3198
  %v3233 = vpack.c.bf16 %v3209, %v3206
  %v3234 = vpack.c.bf16 %v3217, %v3214
  %v3235 = vpack.c.bf16 %v3225, %v3222
  %s3236 = scalar_lea.vmem %s3, 16
  %v3237 = vld [vmem:[%s3236] sm:$0xf]
  %v3238 = vld [vmem:[%s3236 + $0x4] sm:$0xf]
  %v3239 = vld [vmem:[%s3236 + $0x8] sm:$0xf]
  %v3240 = vld [vmem:[%s3236 + $0xc] sm:$0xf]
  %s3241 = scalar_lea.vmem %s4, 1
  %v3242 = vld [vmem:[%s3241] sm:$0x1]
  %v3244 = vlaneseq
  %v3245 = vshrl.u32 %v3244, 7
  %v3246 = vsub.s32 0, %v3245
  %v3247 = vrot.slane %v3242, %v3246
  %v3253 = vunpack.c.l.b16 %v3237
  %v3254 = vunpack.c.l.b16 %v3238
  %v3255 = vunpack.c.l.b16 %v3239
  %v3256 = vunpack.c.l.b16 %v3240
  %v3257 = vpack.c.b16 %v3254, %v3253
  %v3258 = vpack.c.b16 %v3256, %v3255
  %v3262 = vsel %vm93, %v3228, 0
  %v3265 = vsel %vm93, %v3229, 0
  %v3268 = vsel %vm93, %v3230, 0
  %v3271 = vsel %vm93, %v3231, 0
  %v3274 = vsel %vm93, %v3232, 0
  %v3277 = vsel %vm93, %v3233, 0
  %v3280 = vsel %vm93, %v3234, 0
  %v3283 = vsel %vm93, %v3235, 0
  %3285 = vmatprep.subr.bf16.mxu0 0
  %3286 = vmatpush1.bf16.msra.mxu0 %v3257
  %3287 = vmatprep.subr.bf16.mxu0 0
  %3288 = vmatpush1.bf16.msra.mxu0 %v3258
  %3289 = vmatprep.subr.bf16.mxu0 0
  %3290 = vmatpush1.bf16.msra.mxu0 0
  %3291 = vmatprep.subr.bf16.mxu0 0
  %3292 = vmatpush1.bf16.msra.mxu0 0
  %3293 = vmatprep.subr.bf16.mxu0 0
  %3294 = vmatpush1.bf16.msra.mxu0 0
  %3295 = vmatprep.subr.bf16.mxu0 0
  %3296 = vmatpush1.bf16.msra.mxu0 0
  %3297 = vmatprep.subr.bf16.mxu0 0
  %3298 = vmatpush1.bf16.msra.mxu0 0
  %3299 = vmatprep.subr.bf16.mxu0 0
  %3300 = vmatpush1.bf16.msra.mxu0 0
  %3301 = vmatprep.subr.bf16.mxu0 0
  %3302 = vmatpush1.bf16.msra.mxu0 0
  %3303 = vmatprep.subr.bf16.mxu0 0
  %3304 = vmatpush1.bf16.msra.mxu0 0
  %3305 = vmatprep.subr.bf16.mxu0 0
  %3306 = vmatpush1.bf16.msra.mxu0 0
  %3307 = vmatprep.subr.bf16.mxu0 0
  %3308 = vmatpush1.bf16.msra.mxu0 0
  %3309 = vmatprep.subr.bf16.mxu0 0
  %3310 = vmatpush1.bf16.msra.mxu0 0
  %3311 = vmatprep.subr.bf16.mxu0 0
  %3312 = vmatpush1.bf16.msra.mxu0 0
  %3313 = vmatprep.subr.bf16.mxu0 0
  %3314 = vmatpush1.bf16.msra.mxu0 0
  %3315 = vmatprep.subr.bf16.mxu0 0
  %3316 = vmatpush1.bf16.msra.mxu0 0
  %3317 = vmatprep.mubr.bf16.mxu0 0
  %3318 = vmatmul.mubr.bf16.gmra.mrb[0].mxu0 %v3262
  %v3319 = vpop.f32.mrb[0].mxu0
  %v3320 = vadd.f32 %v3247, %v3319
  %v3321 = vpop.f32.mrb[0].mxu0
  %v3322 = vpop.f32.mrb[0].mxu0
  %v3323 = vadd.f32 %v3247, %v3322
  %v3324 = vpop.f32.mrb[0].mxu0
  %3325 = vmatprep.mubr.bf16.mxu0 0
  %3326 = vmatmul.mubr.bf16.gmra.mrb[0].mxu0 %v3265
  %v3327 = vpop.f32.mrb[0].mxu0
  %v3328 = vadd.f32 %v3247, %v3327
  %v3329 = vpop.f32.mrb[0].mxu0
  %v3330 = vpop.f32.mrb[0].mxu0
  %v3331 = vadd.f32 %v3247, %v3330
  %v3332 = vpop.f32.mrb[0].mxu0
  %3333 = vmatprep.mubr.bf16.mxu0 0
  %3334 = vmatmul.mubr.bf16.gmra.mrb[0].mxu0 %v3268
  %v3335 = vpop.f32.mrb[0].mxu0
  %v3336 = vadd.f32 %v3247, %v3335
  %v3337 = vpop.f32.mrb[0].mxu0
  %v3338 = vpop.f32.mrb[0].mxu0
  %v3339 = vadd.f32 %v3247, %v3338
  %v3340 = vpop.f32.mrb[0].mxu0
  %3341 = vmatprep.mubr.bf16.mxu0 0
  %3342 = vmatmul.mubr.bf16.gmra.mrb[0].mxu0 %v3271
  %v3343 = vpop.f32.mrb[0].mxu0
  %v3344 = vadd.f32 %v3247, %v3343
  %v3345 = vpop.f32.mrb[0].mxu0
  %v3346 = vpop.f32.mrb[0].mxu0
  %v3347 = vadd.f32 %v3247, %v3346
  %v3348 = vpop.f32.mrb[0].mxu0
  %3349 = vmatprep.mubr.bf16.mxu0 0
  %3350 = vmatmul.mubr.bf16.gmra.mrb[0].mxu0 %v3274
  %v3351 = vpop.f32.mrb[0].mxu0
  %v3352 = vadd.f32 %v3247, %v3351
  %v3353 = vpop.f32.mrb[0].mxu0
  %v3354 = vpop.f32.mrb[0].mxu0
  %v3355 = vadd.f32 %v3247, %v3354
  %v3356 = vpop.f32.mrb[0].mxu0
  %3357 = vmatprep.mubr.bf16.mxu0 0
  %3358 = vmatmul.mubr.bf16.gmra.mrb[0].mxu0 %v3277
  %v3359 = vpop.f32.mrb[0].mxu0
  %v3360 = vadd.f32 %v3247, %v3359
  %v3361 = vpop.f32.mrb[0].mxu0
  %v3362 = vpop.f32.mrb[0].mxu0
  %v3363 = vadd.f32 %v3247, %v3362
  %v3364 = vpop.f32.mrb[0].mxu0
  %3365 = vmatprep.mubr.bf16.mxu0 0
  %3366 = vmatmul.mubr.bf16.gmra.mrb[0].mxu0 %v3280
  %v3367 = vpop.f32.mrb[0].mxu0
  %v3368 = vadd.f32 %v3247, %v3367
  %v3369 = vpop.f32.mrb[0].mxu0
  %v3370 = vpop.f32.mrb[0].mxu0
  %v3371 = vadd.f32 %v3247, %v3370
  %v3372 = vpop.f32.mrb[0].mxu0
  %3373 = vmatprep.mubr.bf16.mxu0 0
  %3374 = vmatmul.mubr.bf16.gmra.mrb[0].mxu0 %v3283
  %v3375 = vpop.f32.mrb[0].mxu0
  %v3376 = vadd.f32 %v3247, %v3375
  %v3377 = vpop.f32.mrb[0].mxu0
  %v3378 = vpop.f32.mrb[0].mxu0
  %v3379 = vadd.f32 %v3247, %v3378
  %v3380 = vpop.f32.mrb[0].mxu0
  %3381 = vdwg.mxu0
  %v3382 = vpack.c.bf16 %v3323, %v3320
  %v3383 = vpack.c.bf16 %v3331, %v3328
  %v3384 = vpack.c.bf16 %v3339, %v3336
  %v3385 = vpack.c.bf16 %v3347, %v3344
  %v3386 = vpack.c.bf16 %v3355, %v3352
  %v3387 = vpack.c.bf16 %v3363, %v3360
  %v3388 = vpack.c.bf16 %v3371, %v3368
  %v3389 = vpack.c.bf16 %v3379, %v3376
  %3394 = vrot.lane.b32.xlu0 %v3382, 96
  %v3395 = vpop.permute.xlu0 %3394
  %3396 = vrot.lane.b32.xlu0 %v3383, 96
  %v3397 = vpop.permute.xlu0 %3396
  %3398 = vrot.lane.b32.xlu0 %v3384, 96
  %v3399 = vpop.permute.xlu0 %3398
  %3400 = vrot.lane.b32.xlu0 %v3385, 96
  %v3401 = vpop.permute.xlu0 %3400
  %v3403 = vsel %vm403, %v3382, 0
  %v3406 = vsel %vm403, %v3383, 0
  %v3409 = vsel %vm403, %v3384, 0
  %v3412 = vsel %vm403, %v3385, 0
  %v3415 = vsel %vm403, %v3395, 0
  %v3418 = vsel %vm403, %v3397, 0
  %v3421 = vsel %vm403, %v3399, 0
  %v3424 = vsel %vm403, %v3401, 0
  %3426 = vmatprep.subr.bf16.mxu0 0
  %3427 = vmatpush1.bf16.xpose.msra.mxu0 %v3415
  %3428 = vmatprep.subr.bf16.mxu0 0
  %3429 = vmatpush1.bf16.xpose.msra.mxu0 %v3418
  %3430 = vmatprep.subr.bf16.mxu0 0
  %3431 = vmatpush1.bf16.xpose.msra.mxu0 %v3421
  %3432 = vmatprep.subr.bf16.mxu0 0
  %3433 = vmatpush1.bf16.xpose.msra.mxu0 %v3424
  %3434 = vmatprep.subr.bf16.mxu0 0
  %3435 = vmatpush1.bf16.xpose.msra.mxu0 0
  %3436 = vmatprep.subr.bf16.mxu0 0
  %3437 = vmatpush1.bf16.xpose.msra.mxu0 0
  %3438 = vmatprep.subr.bf16.mxu0 0
  %3439 = vmatpush1.bf16.xpose.msra.mxu0 0
  %3440 = vmatprep.subr.bf16.mxu0 0
  %3441 = vmatpush1.bf16.xpose.msra.mxu0 0
  %3442 = vmatprep.subr.bf16.mxu0 0
  %3443 = vmatpush1.bf16.xpose.msra.mxu0 0
  %3444 = vmatprep.subr.bf16.mxu0 0
  %3445 = vmatpush1.bf16.xpose.msra.mxu0 0
  %3446 = vmatprep.subr.bf16.mxu0 0
  %3447 = vmatpush1.bf16.xpose.msra.mxu0 0
  %3448 = vmatprep.subr.bf16.mxu0 0
  %3449 = vmatpush1.bf16.xpose.msra.mxu0 0
  %3450 = vmatprep.subr.bf16.mxu0 0
  %3451 = vmatpush1.bf16.xpose.msra.mxu0 0
  %3452 = vmatprep.subr.bf16.mxu0 0
  %3453 = vmatpush1.bf16.xpose.msra.mxu0 0
  %3454 = vmatprep.subr.bf16.mxu0 0
  %3455 = vmatpush1.bf16.xpose.msra.mxu0 0
  %3456 = vmatprep.subr.bf16.mxu0 0
  %3457 = vmatpush1.bf16.xpose.msra.mxu0 0
  %3458 = vmatprep.mubr.bf16.mxu0 0
  %3459 = vmatmul.mubr.bf16.gmra.mrb[0].mxu0 %v3403
  %v3460 = vpop.f32.mrb[0].mxu0
  %v3461 = vadd.f32 0.0, %v3460
  %v3462 = vpop.f32.mrb[0].mxu0
  %v3463 = vpop.f32.mrb[0].mxu0
  %v3464 = vadd.f32 0.0, %v3463
  %v3465 = vpop.f32.mrb[0].mxu0
  %3466 = vmatprep.mubr.bf16.mxu0 0
  %3467 = vmatmul.mubr.bf16.gmra.mrb[0].mxu0 %v3406
  %v3468 = vpop.f32.mrb[0].mxu0
  %v3469 = vadd.f32 0.0, %v3468
  %v3470 = vpop.f32.mrb[0].mxu0
  %v3471 = vpop.f32.mrb[0].mxu0
  %v3472 = vadd.f32 0.0, %v3471
  %v3473 = vpop.f32.mrb[0].mxu0
  %3474 = vmatprep.mubr.bf16.mxu0 0
  %3475 = vmatmul.mubr.bf16.gmra.mrb[0].mxu0 %v3409
  %v3476 = vpop.f32.mrb[0].mxu0
  %v3477 = vadd.f32 0.0, %v3476
  %v3478 = vpop.f32.mrb[0].mxu0
  %v3479 = vpop.f32.mrb[0].mxu0
  %v3480 = vadd.f32 0.0, %v3479
  %v3481 = vpop.f32.mrb[0].mxu0
  %3482 = vmatprep.mubr.bf16.mxu0 0
  %3483 = vmatmul.mubr.bf16.gmra.mrb[0].mxu0 %v3412
  %v3484 = vpop.f32.mrb[0].mxu0
  %v3485 = vadd.f32 0.0, %v3484
  %v3486 = vpop.f32.mrb[0].mxu0
  %v3487 = vpop.f32.mrb[0].mxu0
  %v3488 = vadd.f32 0.0, %v3487
  %v3489 = vpop.f32.mrb[0].mxu0
  %3490 = vdwg.mxu0
  %3491 = vrot.lane.b32.xlu0 %v3382, 120
  %v3492 = vpop.permute.xlu0 %3491
  %3493 = vrot.lane.b32.xlu0 %v3383, 120
  %v3494 = vpop.permute.xlu0 %3493
  %3495 = vrot.lane.b32.xlu0 %v3384, 120
  %v3496 = vpop.permute.xlu0 %3495
  %3497 = vrot.lane.b32.xlu0 %v3385, 120
  %v3498 = vpop.permute.xlu0 %3497
  %3499 = vrot.lane.b32.xlu0 %v3382, 88
  %v3500 = vpop.permute.xlu0 %3499
  %3501 = vrot.lane.b32.xlu0 %v3383, 88
  %v3502 = vpop.permute.xlu0 %3501
  %3503 = vrot.lane.b32.xlu0 %v3384, 88
  %v3504 = vpop.permute.xlu0 %3503
  %3505 = vrot.lane.b32.xlu0 %v3385, 88
  %v3506 = vpop.permute.xlu0 %3505
  %v3508 = vsel %vm403, %v3492, 0
  %v3511 = vsel %vm403, %v3494, 0
  %v3514 = vsel %vm403, %v3496, 0
  %v3517 = vsel %vm403, %v3498, 0
  %v3520 = vsel %vm403, %v3500, 0
  %v3523 = vsel %vm403, %v3502, 0
  %v3526 = vsel %vm403, %v3504, 0
  %v3529 = vsel %vm403, %v3506, 0
  %3531 = vmatprep.subr.bf16.mxu0 0
  %3532 = vmatpush1.bf16.xpose.msra.mxu0 %v3520
  %3533 = vmatprep.subr.bf16.mxu0 0
  %3534 = vmatpush1.bf16.xpose.msra.mxu0 %v3523
  %3535 = vmatprep.subr.bf16.mxu0 0
  %3536 = vmatpush1.bf16.xpose.msra.mxu0 %v3526
  %3537 = vmatprep.subr.bf16.mxu0 0
  %3538 = vmatpush1.bf16.xpose.msra.mxu0 %v3529
  %3539 = vmatprep.subr.bf16.mxu0 0
  %3540 = vmatpush1.bf16.xpose.msra.mxu0 0
  %3541 = vmatprep.subr.bf16.mxu0 0
  %3542 = vmatpush1.bf16.xpose.msra.mxu0 0
  %3543 = vmatprep.subr.bf16.mxu0 0
  %3544 = vmatpush1.bf16.xpose.msra.mxu0 0
  %3545 = vmatprep.subr.bf16.mxu0 0
  %3546 = vmatpush1.bf16.xpose.msra.mxu0 0
  %3547 = vmatprep.subr.bf16.mxu0 0
  %3548 = vmatpush1.bf16.xpose.msra.mxu0 0
  %3549 = vmatprep.subr.bf16.mxu0 0
  %3550 = vmatpush1.bf16.xpose.msra.mxu0 0
  %3551 = vmatprep.subr.bf16.mxu0 0
  %3552 = vmatpush1.bf16.xpose.msra.mxu0 0
  %3553 = vmatprep.subr.bf16.mxu0 0
  %3554 = vmatpush1.bf16.xpose.msra.mxu0 0
  %3555 = vmatprep.subr.bf16.mxu0 0
  %3556 = vmatpush1.bf16.xpose.msra.mxu0 0
  %3557 = vmatprep.subr.bf16.mxu0 0
  %3558 = vmatpush1.bf16.xpose.msra.mxu0 0
  %3559 = vmatprep.subr.bf16.mxu0 0
  %3560 = vmatpush1.bf16.xpose.msra.mxu0 0
  %3561 = vmatprep.subr.bf16.mxu0 0
  %3562 = vmatpush1.bf16.xpose.msra.mxu0 0
  %3563 = vmatprep.mubr.bf16.mxu0 0
  %3564 = vmatmul.mubr.bf16.gmra.mrb[0].mxu0 %v3508
  %v3565 = vpop.f32.mrb[0].mxu0
  %v3566 = vadd.f32 0.0, %v3565
  %v3567 = vpop.f32.mrb[0].mxu0
  %v3568 = vpop.f32.mrb[0].mxu0
  %v3569 = vadd.f32 0.0, %v3568
  %v3570 = vpop.f32.mrb[0].mxu0
  %3571 = vmatprep.mubr.bf16.mxu0 0
  %3572 = vmatmul.mubr.bf16.gmra.mrb[0].mxu0 %v3511
  %v3573 = vpop.f32.mrb[0].mxu0
  %v3574 = vadd.f32 0.0, %v3573
  %v3575 = vpop.f32.mrb[0].mxu0
  %v3576 = vpop.f32.mrb[0].mxu0
  %v3577 = vadd.f32 0.0, %v3576
  %v3578 = vpop.f32.mrb[0].mxu0
  %3579 = vmatprep.mubr.bf16.mxu0 0
  %3580 = vmatmul.mubr.bf16.gmra.mrb[0].mxu0 %v3514
  %v3581 = vpop.f32.mrb[0].mxu0
  %v3582 = vadd.f32 0.0, %v3581
  %v3583 = vpop.f32.mrb[0].mxu0
  %v3584 = vpop.f32.mrb[0].mxu0
  %v3585 = vadd.f32 0.0, %v3584
  %v3586 = vpop.f32.mrb[0].mxu0
  %3587 = vmatprep.mubr.bf16.mxu0 0
  %3588 = vmatmul.mubr.bf16.gmra.mrb[0].mxu0 %v3517
  %v3589 = vpop.f32.mrb[0].mxu0
  %v3590 = vadd.f32 0.0, %v3589
  %v3591 = vpop.f32.mrb[0].mxu0
  %v3592 = vpop.f32.mrb[0].mxu0
  %v3593 = vadd.f32 0.0, %v3592
  %v3594 = vpop.f32.mrb[0].mxu0
  %3595 = vdwg.mxu0
  %3596 = vrot.lane.b32.xlu0 %v3382, 112
  %v3597 = vpop.permute.xlu0 %3596
  %3598 = vrot.lane.b32.xlu0 %v3383, 112
  %v3599 = vpop.permute.xlu0 %3598
  %3600 = vrot.lane.b32.xlu0 %v3384, 112
  %v3601 = vpop.permute.xlu0 %3600
  %3602 = vrot.lane.b32.xlu0 %v3385, 112
  %v3603 = vpop.permute.xlu0 %3602
  %3604 = vrot.lane.b32.xlu0 %v3382, 80
  %v3605 = vpop.permute.xlu0 %3604
  %3606 = vrot.lane.b32.xlu0 %v3383, 80
  %v3607 = vpop.permute.xlu0 %3606
  %3608 = vrot.lane.b32.xlu0 %v3384, 80
  %v3609 = vpop.permute.xlu0 %3608
  %3610 = vrot.lane.b32.xlu0 %v3385, 80
  %v3611 = vpop.permute.xlu0 %3610
  %v3613 = vsel %vm403, %v3597, 0
  %v3616 = vsel %vm403, %v3599, 0
  %v3619 = vsel %vm403, %v3601, 0
  %v3622 = vsel %vm403, %v3603, 0
  %v3625 = vsel %vm403, %v3605, 0
  %v3628 = vsel %vm403, %v3607, 0
  %v3631 = vsel %vm403, %v3609, 0
  %v3634 = vsel %vm403, %v3611, 0
  %3636 = vmatprep.subr.bf16.mxu0 0
  %3637 = vmatpush1.bf16.xpose.msra.mxu0 %v3625
  %3638 = vmatprep.subr.bf16.mxu0 0
  %3639 = vmatpush1.bf16.xpose.msra.mxu0 %v3628
  %3640 = vmatprep.subr.bf16.mxu0 0
  %3641 = vmatpush1.bf16.xpose.msra.mxu0 %v3631
  %3642 = vmatprep.subr.bf16.mxu0 0
  %3643 = vmatpush1.bf16.xpose.msra.mxu0 %v3634
  %3644 = vmatprep.subr.bf16.mxu0 0
  %3645 = vmatpush1.bf16.xpose.msra.mxu0 0
  %3646 = vmatprep.subr.bf16.mxu0 0
  %3647 = vmatpush1.bf16.xpose.msra.mxu0 0
  %3648 = vmatprep.subr.bf16.mxu0 0
  %3649 = vmatpush1.bf16.xpose.msra.mxu0 0
  %3650 = vmatprep.subr.bf16.mxu0 0
  %3651 = vmatpush1.bf16.xpose.msra.mxu0 0
  %3652 = vmatprep.subr.bf16.mxu0 0
  %3653 = vmatpush1.bf16.xpose.msra.mxu0 0
  %3654 = vmatprep.subr.bf16.mxu0 0
  %3655 = vmatpush1.bf16.xpose.msra.mxu0 0
  %3656 = vmatprep.subr.bf16.mxu0 0
  %3657 = vmatpush1.bf16.xpose.msra.mxu0 0
  %3658 = vmatprep.subr.bf16.mxu0 0
  %3659 = vmatpush1.bf16.xpose.msra.mxu0 0
  %3660 = vmatprep.subr.bf16.mxu0 0
  %3661 = vmatpush1.bf16.xpose.msra.mxu0 0
  %3662 = vmatprep.subr.bf16.mxu0 0
  %3663 = vmatpush1.bf16.xpose.msra.mxu0 0
  %3664 = vmatprep.subr.bf16.mxu0 0
  %3665 = vmatpush1.bf16.xpose.msra.mxu0 0
  %3666 = vmatprep.subr.bf16.mxu0 0
  %3667 = vmatpush1.bf16.xpose.msra.mxu0 0
  %3668 = vmatprep.mubr.bf16.mxu0 0
  %3669 = vmatmul.mubr.bf16.gmra.mrb[0].mxu0 %v3613
  %v3670 = vpop.f32.mrb[0].mxu0
  %v3671 = vadd.f32 0.0, %v3670
  %v3672 = vpop.f32.mrb[0].mxu0
  %v3673 = vpop.f32.mrb[0].mxu0
  %v3674 = vadd.f32 0.0, %v3673
  %v3675 = vpop.f32.mrb[0].mxu0
  %3676 = vmatprep.mubr.bf16.mxu0 0
  %3677 = vmatmul.mubr.bf16.gmra.mrb[0].mxu0 %v3616
  %v3678 = vpop.f32.mrb[0].mxu0
  %v3679 = vadd.f32 0.0, %v3678
  %v3680 = vpop.f32.mrb[0].mxu0
  %v3681 = vpop.f32.mrb[0].mxu0
  %v3682 = vadd.f32 0.0, %v3681
  %v3683 = vpop.f32.mrb[0].mxu0
  %3684 = vmatprep.mubr.bf16.mxu0 0
  %3685 = vmatmul.mubr.bf16.gmra.mrb[0].mxu0 %v3619
  %v3686 = vpop.f32.mrb[0].mxu0
  %v3687 = vadd.f32 0.0, %v3686
  %v3688 = vpop.f32.mrb[0].mxu0
  %v3689 = vpop.f32.mrb[0].mxu0
  %v3690 = vadd.f32 0.0, %v3689
  %v3691 = vpop.f32.mrb[0].mxu0
  %3692 = vmatprep.mubr.bf16.mxu0 0
  %3693 = vmatmul.mubr.bf16.gmra.mrb[0].mxu0 %v3622
  %v3694 = vpop.f32.mrb[0].mxu0
  %v3695 = vadd.f32 0.0, %v3694
  %v3696 = vpop.f32.mrb[0].mxu0
  %v3697 = vpop.f32.mrb[0].mxu0
  %v3698 = vadd.f32 0.0, %v3697
  %v3699 = vpop.f32.mrb[0].mxu0
  %3700 = vdwg.mxu0
  %3701 = vrot.lane.b32.xlu0 %v3382, 104
  %v3702 = vpop.permute.xlu0 %3701
  %3703 = vrot.lane.b32.xlu0 %v3383, 104
  %v3704 = vpop.permute.xlu0 %3703
  %3705 = vrot.lane.b32.xlu0 %v3384, 104
  %v3706 = vpop.permute.xlu0 %3705
  %3707 = vrot.lane.b32.xlu0 %v3385, 104
  %v3708 = vpop.permute.xlu0 %3707
  %3709 = vrot.lane.b32.xlu0 %v3382, 72
  %v3710 = vpop.permute.xlu0 %3709
  %3711 = vrot.lane.b32.xlu0 %v3383, 72
  %v3712 = vpop.permute.xlu0 %3711
  %3713 = vrot.lane.b32.xlu0 %v3384, 72
  %v3714 = vpop.permute.xlu0 %3713
  %3715 = vrot.lane.b32.xlu0 %v3385, 72
  %v3716 = vpop.permute.xlu0 %3715
  %v3718 = vsel %vm403, %v3702, 0
  %v3721 = vsel %vm403, %v3704, 0
  %v3724 = vsel %vm403, %v3706, 0
  %v3727 = vsel %vm403, %v3708, 0
  %v3730 = vsel %vm403, %v3710, 0
  %v3733 = vsel %vm403, %v3712, 0
  %v3736 = vsel %vm403, %v3714, 0
  %v3739 = vsel %vm403, %v3716, 0
  %3741 = vmatprep.subr.bf16.mxu0 0
  %3742 = vmatpush1.bf16.xpose.msra.mxu0 %v3730
  %3743 = vmatprep.subr.bf16.mxu0 0
  %3744 = vmatpush1.bf16.xpose.msra.mxu0 %v3733
  %3745 = vmatprep.subr.bf16.mxu0 0
  %3746 = vmatpush1.bf16.xpose.msra.mxu0 %v3736
  %3747 = vmatprep.subr.bf16.mxu0 0
  %3748 = vmatpush1.bf16.xpose.msra.mxu0 %v3739
  %3749 = vmatprep.subr.bf16.mxu0 0
  %3750 = vmatpush1.bf16.xpose.msra.mxu0 0
  %3751 = vmatprep.subr.bf16.mxu0 0
  %3752 = vmatpush1.bf16.xpose.msra.mxu0 0
  %3753 = vmatprep.subr.bf16.mxu0 0
  %3754 = vmatpush1.bf16.xpose.msra.mxu0 0
  %3755 = vmatprep.subr.bf16.mxu0 0
  %3756 = vmatpush1.bf16.xpose.msra.mxu0 0
  %3757 = vmatprep.subr.bf16.mxu0 0
  %3758 = vmatpush1.bf16.xpose.msra.mxu0 0
  %3759 = vmatprep.subr.bf16.mxu0 0
  %3760 = vmatpush1.bf16.xpose.msra.mxu0 0
  %3761 = vmatprep.subr.bf16.mxu0 0
  %3762 = vmatpush1.bf16.xpose.msra.mxu0 0
  %3763 = vmatprep.subr.bf16.mxu0 0
  %3764 = vmatpush1.bf16.xpose.msra.mxu0 0
  %3765 = vmatprep.subr.bf16.mxu0 0
  %3766 = vmatpush1.bf16.xpose.msra.mxu0 0
  %3767 = vmatprep.subr.bf16.mxu0 0
  %3768 = vmatpush1.bf16.xpose.msra.mxu0 0
  %3769 = vmatprep.subr.bf16.mxu0 0
  %3770 = vmatpush1.bf16.xpose.msra.mxu0 0
  %3771 = vmatprep.subr.bf16.mxu0 0
  %3772 = vmatpush1.bf16.xpose.msra.mxu0 0
  %3773 = vmatprep.mubr.bf16.mxu0 0
  %3774 = vmatmul.mubr.bf16.gmra.mrb[0].mxu0 %v3718
  %v3775 = vpop.f32.mrb[0].mxu0
  %v3776 = vadd.f32 0.0, %v3775
  %v3777 = vpop.f32.mrb[0].mxu0
  %v3778 = vpop.f32.mrb[0].mxu0
  %v3779 = vadd.f32 0.0, %v3778
  %v3780 = vpop.f32.mrb[0].mxu0
  %3781 = vmatprep.mubr.bf16.mxu0 0
  %3782 = vmatmul.mubr.bf16.gmra.mrb[0].mxu0 %v3721
  %v3783 = vpop.f32.mrb[0].mxu0
  %v3784 = vadd.f32 0.0, %v3783
  %v3785 = vpop.f32.mrb[0].mxu0
  %v3786 = vpop.f32.mrb[0].mxu0
  %v3787 = vadd.f32 0.0, %v3786
  %v3788 = vpop.f32.mrb[0].mxu0
  %3789 = vmatprep.mubr.bf16.mxu0 0
  %3790 = vmatmul.mubr.bf16.gmra.mrb[0].mxu0 %v3724
  %v3791 = vpop.f32.mrb[0].mxu0
  %v3792 = vadd.f32 0.0, %v3791
  %v3793 = vpop.f32.mrb[0].mxu0
  %v3794 = vpop.f32.mrb[0].mxu0
  %v3795 = vadd.f32 0.0, %v3794
  %v3796 = vpop.f32.mrb[0].mxu0
  %3797 = vmatprep.mubr.bf16.mxu0 0
  %3798 = vmatmul.mubr.bf16.gmra.mrb[0].mxu0 %v3727
  %v3799 = vpop.f32.mrb[0].mxu0
  %v3800 = vadd.f32 0.0, %v3799
  %v3801 = vpop.f32.mrb[0].mxu0
  %v3802 = vpop.f32.mrb[0].mxu0
  %v3803 = vadd.f32 0.0, %v3802
  %v3804 = vpop.f32.mrb[0].mxu0
  %3805 = vdwg.mxu0
  %v3806 = vsel %vm808, %v3461, -inf
  %3807 = vmax.xlane.f32.xlu0 %v3806
  %v3808 = vpop.xlane.xlu0 %3807
  %v3809 = vsel %vm808, %v3464, -inf
  %3810 = vmax.xlane.f32.xlu0 %v3809
  %v3811 = vpop.xlane.xlu0 %3810
  %v3812 = vsel %vm808, %v3469, -inf
  %3813 = vmax.xlane.f32.xlu0 %v3812
  %v3814 = vpop.xlane.xlu0 %3813
  %v3815 = vsel %vm808, %v3472, -inf
  %3816 = vmax.xlane.f32.xlu0 %v3815
  %v3817 = vpop.xlane.xlu0 %3816
  %v3818 = vsel %vm808, %v3477, -inf
  %3819 = vmax.xlane.f32.xlu0 %v3818
  %v3820 = vpop.xlane.xlu0 %3819
  %v3821 = vsel %vm808, %v3480, -inf
  %3822 = vmax.xlane.f32.xlu0 %v3821
  %v3823 = vpop.xlane.xlu0 %3822
  %v3824 = vsel %vm808, %v3485, -inf
  %3825 = vmax.xlane.f32.xlu0 %v3824
  %v3826 = vpop.xlane.xlu0 %3825
  %v3827 = vsel %vm808, %v3488, -inf
  %3828 = vmax.xlane.f32.xlu0 %v3827
  %v3829 = vpop.xlane.xlu0 %3828
  %v3830 = vsel %vm808, %v3566, -inf
  %3831 = vmax.xlane.f32.xlu0 %v3830
  %v3832 = vpop.xlane.xlu0 %3831
  %v3833 = vsel %vm808, %v3569, -inf
  %3834 = vmax.xlane.f32.xlu0 %v3833
  %v3835 = vpop.xlane.xlu0 %3834
  %v3836 = vsel %vm808, %v3574, -inf
  %3837 = vmax.xlane.f32.xlu0 %v3836
  %v3838 = vpop.xlane.xlu0 %3837
  %v3839 = vsel %vm808, %v3577, -inf
  %3840 = vmax.xlane.f32.xlu0 %v3839
  %v3841 = vpop.xlane.xlu0 %3840
  %v3842 = vsel %vm808, %v3582, -inf
  %3843 = vmax.xlane.f32.xlu0 %v3842
  %v3844 = vpop.xlane.xlu0 %3843
  %v3845 = vsel %vm808, %v3585, -inf
  %3846 = vmax.xlane.f32.xlu0 %v3845
  %v3847 = vpop.xlane.xlu0 %3846
  %v3848 = vsel %vm808, %v3590, -inf
  %3849 = vmax.xlane.f32.xlu0 %v3848
  %v3850 = vpop.xlane.xlu0 %3849
  %v3851 = vsel %vm808, %v3593, -inf
  %3852 = vmax.xlane.f32.xlu0 %v3851
  %v3853 = vpop.xlane.xlu0 %3852
  %v3854 = vsel %vm808, %v3671, -inf
  %3855 = vmax.xlane.f32.xlu0 %v3854
  %v3856 = vpop.xlane.xlu0 %3855
  %v3857 = vsel %vm808, %v3674, -inf
  %3858 = vmax.xlane.f32.xlu0 %v3857
  %v3859 = vpop.xlane.xlu0 %3858
  %v3860 = vsel %vm808, %v3679, -inf
  %3861 = vmax.xlane.f32.xlu0 %v3860
  %v3862 = vpop.xlane.xlu0 %3861
  %v3863 = vsel %vm808, %v3682, -inf
  %3864 = vmax.xlane.f32.xlu0 %v3863
  %v3865 = vpop.xlane.xlu0 %3864
  %v3866 = vsel %vm808, %v3687, -inf
  %3867 = vmax.xlane.f32.xlu0 %v3866
  %v3868 = vpop.xlane.xlu0 %3867
  %v3869 = vsel %vm808, %v3690, -inf
  %3870 = vmax.xlane.f32.xlu0 %v3869
  %v3871 = vpop.xlane.xlu0 %3870
  %v3872 = vsel %vm808, %v3695, -inf
  %3873 = vmax.xlane.f32.xlu0 %v3872
  %v3874 = vpop.xlane.xlu0 %3873
  %v3875 = vsel %vm808, %v3698, -inf
  %3876 = vmax.xlane.f32.xlu0 %v3875
  %v3877 = vpop.xlane.xlu0 %3876
  %v3878 = vsel %vm808, %v3776, -inf
  %3879 = vmax.xlane.f32.xlu0 %v3878
  %v3880 = vpop.xlane.xlu0 %3879
  %v3881 = vsel %vm808, %v3779, -inf
  %3882 = vmax.xlane.f32.xlu0 %v3881
  %v3883 = vpop.xlane.xlu0 %3882
  %v3884 = vsel %vm808, %v3784, -inf
  %3885 = vmax.xlane.f32.xlu0 %v3884
  %v3886 = vpop.xlane.xlu0 %3885
  %v3887 = vsel %vm808, %v3787, -inf
  %3888 = vmax.xlane.f32.xlu0 %v3887
  %v3889 = vpop.xlane.xlu0 %3888
  %v3890 = vsel %vm808, %v3792, -inf
  %3891 = vmax.xlane.f32.xlu0 %v3890
  %v3892 = vpop.xlane.xlu0 %3891
  %v3893 = vsel %vm808, %v3795, -inf
  %3894 = vmax.xlane.f32.xlu0 %v3893
  %v3895 = vpop.xlane.xlu0 %3894
  %v3896 = vsel %vm808, %v3800, -inf
  %3897 = vmax.xlane.f32.xlu0 %v3896
  %v3898 = vpop.xlane.xlu0 %3897
  %v3899 = vsel %vm808, %v3803, -inf
  %3900 = vmax.xlane.f32.xlu0 %v3899
  %v3901 = vpop.xlane.xlu0 %3900
  %v3902 = vsub.f32 %v3461, %v3808
  %v3903 = vsub.f32 %v3464, %v3811
  %v3904 = vsub.f32 %v3469, %v3814
  %v3905 = vsub.f32 %v3472, %v3817
  %v3906 = vsub.f32 %v3477, %v3820
  %v3907 = vsub.f32 %v3480, %v3823
  %v3908 = vsub.f32 %v3485, %v3826
  %v3909 = vsub.f32 %v3488, %v3829
  %v3910 = vsub.f32 %v3566, %v3832
  %v3911 = vsub.f32 %v3569, %v3835
  %v3912 = vsub.f32 %v3574, %v3838
  %v3913 = vsub.f32 %v3577, %v3841
  %v3914 = vsub.f32 %v3582, %v3844
  %v3915 = vsub.f32 %v3585, %v3847
  %v3916 = vsub.f32 %v3590, %v3850
  %v3917 = vsub.f32 %v3593, %v3853
  %v3918 = vsub.f32 %v3671, %v3856
  %v3919 = vsub.f32 %v3674, %v3859
  %v3920 = vsub.f32 %v3679, %v3862
  %v3921 = vsub.f32 %v3682, %v3865
  %v3922 = vsub.f32 %v3687, %v3868
  %v3923 = vsub.f32 %v3690, %v3871
  %v3924 = vsub.f32 %v3695, %v3874
  %v3925 = vsub.f32 %v3698, %v3877
  %v3926 = vsub.f32 %v3776, %v3880
  %v3927 = vsub.f32 %v3779, %v3883
  %v3928 = vsub.f32 %v3784, %v3886
  %v3929 = vsub.f32 %v3787, %v3889
  %v3930 = vsub.f32 %v3792, %v3892
  %v3931 = vsub.f32 %v3795, %v3895
  %v3932 = vsub.f32 %v3800, %v3898
  %v3933 = vsub.f32 %v3803, %v3901
  %v3934 = vmul.f32 %v3902, 1.442695
  %v3935 = vpow.pop %v3934
  %v3936 = vmul.f32 %v3903, 1.442695
  %v3937 = vpow.pop %v3936
  %v3938 = vmul.f32 %v3904, 1.442695
  %v3939 = vpow.pop %v3938
  %v3940 = vmul.f32 %v3905, 1.442695
  %v3941 = vpow.pop %v3940
  %v3942 = vmul.f32 %v3906, 1.442695
  %v3943 = vpow.pop %v3942
  %v3944 = vmul.f32 %v3907, 1.442695
  %v3945 = vpow.pop %v3944
  %v3946 = vmul.f32 %v3908, 1.442695
  %v3947 = vpow.pop %v3946
  %v3948 = vmul.f32 %v3909, 1.442695
  %v3949 = vpow.pop %v3948
  %v3950 = vmul.f32 %v3910, 1.442695
  %v3951 = vpow.pop %v3950
  %v3952 = vmul.f32 %v3911, 1.442695
  %v3953 = vpow.pop %v3952
  %v3954 = vmul.f32 %v3912, 1.442695
  %v3955 = vpow.pop %v3954
  %v3956 = vmul.f32 %v3913, 1.442695
  %v3957 = vpow.pop %v3956
  %v3958 = vmul.f32 %v3914, 1.442695
  %v3959 = vpow.pop %v3958
  %v3960 = vmul.f32 %v3915, 1.442695
  %v3961 = vpow.pop %v3960
  %v3962 = vmul.f32 %v3916, 1.442695
  %v3963 = vpow.pop %v3962
  %v3964 = vmul.f32 %v3917, 1.442695
  %v3965 = vpow.pop %v3964
  %v3966 = vmul.f32 %v3918, 1.442695
  %v3967 = vpow.pop %v3966
  %v3968 = vmul.f32 %v3919, 1.442695
  %v3969 = vpow.pop %v3968
  %v3970 = vmul.f32 %v3920, 1.442695
  %v3971 = vpow.pop %v3970
  %v3972 = vmul.f32 %v3921, 1.442695
  %v3973 = vpow.pop %v3972
  %v3974 = vmul.f32 %v3922, 1.442695
  %v3975 = vpow.pop %v3974
  %v3976 = vmul.f32 %v3923, 1.442695
  %v3977 = vpow.pop %v3976
  %v3978 = vmul.f32 %v3924, 1.442695
  %v3979 = vpow.pop %v3978
  %v3980 = vmul.f32 %v3925, 1.442695
  %v3981 = vpow.pop %v3980
  %v3982 = vmul.f32 %v3926, 1.442695
  %v3983 = vpow.pop %v3982
  %v3984 = vmul.f32 %v3927, 1.442695
  %v3985 = vpow.pop %v3984
  %v3986 = vmul.f32 %v3928, 1.442695
  %v3987 = vpow.pop %v3986
  %v3988 = vmul.f32 %v3929, 1.442695
  %v3989 = vpow.pop %v3988
  %v3990 = vmul.f32 %v3930, 1.442695
  %v3991 = vpow.pop %v3990
  %v3992 = vmul.f32 %v3931, 1.442695
  %v3993 = vpow.pop %v3992
  %v3994 = vmul.f32 %v3932, 1.442695
  %v3995 = vpow.pop %v3994
  %v3996 = vmul.f32 %v3933, 1.442695
  %v3997 = vpow.pop %v3996
  %v3998 = vsel %vm808, %v3935, 0.0
  %3999 = vadd.xlane.f32.xlu0 %v3998
  %v4000 = vpop.xlane.xlu0 %3999
  %v4001 = vsel %vm808, %v3937, 0.0
  %4002 = vadd.xlane.f32.xlu0 %v4001
  %v4003 = vpop.xlane.xlu0 %4002
  %v4004 = vsel %vm808, %v3939, 0.0
  %4005 = vadd.xlane.f32.xlu0 %v4004
  %v4006 = vpop.xlane.xlu0 %4005
  %v4007 = vsel %vm808, %v3941, 0.0
  %4008 = vadd.xlane.f32.xlu0 %v4007
  %v4009 = vpop.xlane.xlu0 %4008
  %v4010 = vsel %vm808, %v3943, 0.0
  %4011 = vadd.xlane.f32.xlu0 %v4010
  %v4012 = vpop.xlane.xlu0 %4011
  %v4013 = vsel %vm808, %v3945, 0.0
  %4014 = vadd.xlane.f32.xlu0 %v4013
  %v4015 = vpop.xlane.xlu0 %4014
  %v4016 = vsel %vm808, %v3947, 0.0
  %4017 = vadd.xlane.f32.xlu0 %v4016
  %v4018 = vpop.xlane.xlu0 %4017
  %v4019 = vsel %vm808, %v3949, 0.0
  %4020 = vadd.xlane.f32.xlu0 %v4019
  %v4021 = vpop.xlane.xlu0 %4020
  %v4022 = vsel %vm808, %v3951, 0.0
  %4023 = vadd.xlane.f32.xlu0 %v4022
  %v4024 = vpop.xlane.xlu0 %4023
  %v4025 = vsel %vm808, %v3953, 0.0
  %4026 = vadd.xlane.f32.xlu0 %v4025
  %v4027 = vpop.xlane.xlu0 %4026
  %v4028 = vsel %vm808, %v3955, 0.0
  %4029 = vadd.xlane.f32.xlu0 %v4028
  %v4030 = vpop.xlane.xlu0 %4029
  %v4031 = vsel %vm808, %v3957, 0.0
  %4032 = vadd.xlane.f32.xlu0 %v4031
  %v4033 = vpop.xlane.xlu0 %4032
  %v4034 = vsel %vm808, %v3959, 0.0
  %4035 = vadd.xlane.f32.xlu0 %v4034
  %v4036 = vpop.xlane.xlu0 %4035
  %v4037 = vsel %vm808, %v3961, 0.0
  %4038 = vadd.xlane.f32.xlu0 %v4037
  %v4039 = vpop.xlane.xlu0 %4038
  %v4040 = vsel %vm808, %v3963, 0.0
  %4041 = vadd.xlane.f32.xlu0 %v4040
  %v4042 = vpop.xlane.xlu0 %4041
  %v4043 = vsel %vm808, %v3965, 0.0
  %4044 = vadd.xlane.f32.xlu0 %v4043
  %v4045 = vpop.xlane.xlu0 %4044
  %v4046 = vsel %vm808, %v3967, 0.0
  %4047 = vadd.xlane.f32.xlu0 %v4046
  %v4048 = vpop.xlane.xlu0 %4047
  %v4049 = vsel %vm808, %v3969, 0.0
  %4050 = vadd.xlane.f32.xlu0 %v4049
  %v4051 = vpop.xlane.xlu0 %4050
  %v4052 = vsel %vm808, %v3971, 0.0
  %4053 = vadd.xlane.f32.xlu0 %v4052
  %v4054 = vpop.xlane.xlu0 %4053
  %v4055 = vsel %vm808, %v3973, 0.0
  %4056 = vadd.xlane.f32.xlu0 %v4055
  %v4057 = vpop.xlane.xlu0 %4056
  %v4058 = vsel %vm808, %v3975, 0.0
  %4059 = vadd.xlane.f32.xlu0 %v4058
  %v4060 = vpop.xlane.xlu0 %4059
  %v4061 = vsel %vm808, %v3977, 0.0
  %4062 = vadd.xlane.f32.xlu0 %v4061
  %v4063 = vpop.xlane.xlu0 %4062
  %v4064 = vsel %vm808, %v3979, 0.0
  %4065 = vadd.xlane.f32.xlu0 %v4064
  %v4066 = vpop.xlane.xlu0 %4065
  %v4067 = vsel %vm808, %v3981, 0.0
  %4068 = vadd.xlane.f32.xlu0 %v4067
  %v4069 = vpop.xlane.xlu0 %4068
  %v4070 = vsel %vm808, %v3983, 0.0
  %4071 = vadd.xlane.f32.xlu0 %v4070
  %v4072 = vpop.xlane.xlu0 %4071
  %v4073 = vsel %vm808, %v3985, 0.0
  %4074 = vadd.xlane.f32.xlu0 %v4073
  %v4075 = vpop.xlane.xlu0 %4074
  %v4076 = vsel %vm808, %v3987, 0.0
  %4077 = vadd.xlane.f32.xlu0 %v4076
  %v4078 = vpop.xlane.xlu0 %4077
  %v4079 = vsel %vm808, %v3989, 0.0
  %4080 = vadd.xlane.f32.xlu0 %v4079
  %v4081 = vpop.xlane.xlu0 %4080
  %v4082 = vsel %vm808, %v3991, 0.0
  %4083 = vadd.xlane.f32.xlu0 %v4082
  %v4084 = vpop.xlane.xlu0 %4083
  %v4085 = vsel %vm808, %v3993, 0.0
  %4086 = vadd.xlane.f32.xlu0 %v4085
  %v4087 = vpop.xlane.xlu0 %4086
  %v4088 = vsel %vm808, %v3995, 0.0
  %4089 = vadd.xlane.f32.xlu0 %v4088
  %v4090 = vpop.xlane.xlu0 %4089
  %v4091 = vsel %vm808, %v3997, 0.0
  %4092 = vadd.xlane.f32.xlu0 %v4091
  %v4093 = vpop.xlane.xlu0 %4092
  %v4094 = vrcp.pop %v4000
  %v4095 = vrcp.pop %v4003
  %v4096 = vrcp.pop %v4006
  %v4097 = vrcp.pop %v4009
  %v4098 = vrcp.pop %v4012
  %v4099 = vrcp.pop %v4015
  %v4100 = vrcp.pop %v4018
  %v4101 = vrcp.pop %v4021
  %v4102 = vrcp.pop %v4024
  %v4103 = vrcp.pop %v4027
  %v4104 = vrcp.pop %v4030
  %v4105 = vrcp.pop %v4033
  %v4106 = vrcp.pop %v4036
  %v4107 = vrcp.pop %v4039
  %v4108 = vrcp.pop %v4042
  %v4109 = vrcp.pop %v4045
  %v4110 = vrcp.pop %v4048
  %v4111 = vrcp.pop %v4051
  %v4112 = vrcp.pop %v4054
  %v4113 = vrcp.pop %v4057
  %v4114 = vrcp.pop %v4060
  %v4115 = vrcp.pop %v4063
  %v4116 = vrcp.pop %v4066
  %v4117 = vrcp.pop %v4069
  %v4118 = vrcp.pop %v4072
  %v4119 = vrcp.pop %v4075
  %v4120 = vrcp.pop %v4078
  %v4121 = vrcp.pop %v4081
  %v4122 = vrcp.pop %v4084
  %v4123 = vrcp.pop %v4087
  %v4124 = vrcp.pop %v4090
  %v4125 = vrcp.pop %v4093
  %v4126 = vmul.f32 %v3935, %v4094
  %v4127 = vmul.f32 %v3937, %v4095
  %v4128 = vmul.f32 %v3939, %v4096
  %v4129 = vmul.f32 %v3941, %v4097
  %v4130 = vmul.f32 %v3943, %v4098
  %v4131 = vmul.f32 %v3945, %v4099
  %v4132 = vmul.f32 %v3947, %v4100
  %v4133 = vmul.f32 %v3949, %v4101
  %v4134 = vmul.f32 %v3951, %v4102
  %v4135 = vmul.f32 %v3953, %v4103
  %v4136 = vmul.f32 %v3955, %v4104
  %v4137 = vmul.f32 %v3957, %v4105
  %v4138 = vmul.f32 %v3959, %v4106
  %v4139 = vmul.f32 %v3961, %v4107
  %v4140 = vmul.f32 %v3963, %v4108
  %v4141 = vmul.f32 %v3965, %v4109
  %v4142 = vmul.f32 %v3967, %v4110
  %v4143 = vmul.f32 %v3969, %v4111
  %v4144 = vmul.f32 %v3971, %v4112
  %v4145 = vmul.f32 %v3973, %v4113
  %v4146 = vmul.f32 %v3975, %v4114
  %v4147 = vmul.f32 %v3977, %v4115
  %v4148 = vmul.f32 %v3979, %v4116
  %v4149 = vmul.f32 %v3981, %v4117
  %v4150 = vmul.f32 %v3983, %v4118
  %v4151 = vmul.f32 %v3985, %v4119
  %v4152 = vmul.f32 %v3987, %v4120
  %v4153 = vmul.f32 %v3989, %v4121
  %v4154 = vmul.f32 %v3991, %v4122
  %v4155 = vmul.f32 %v3993, %v4123
  %v4156 = vmul.f32 %v3995, %v4124
  %v4157 = vmul.f32 %v3997, %v4125
  %v4158 = vpack.c.bf16 %v4127, %v4126
  %v4159 = vpack.c.bf16 %v4129, %v4128
  %v4160 = vpack.c.bf16 %v4131, %v4130
  %v4161 = vpack.c.bf16 %v4133, %v4132
  %v4162 = vpack.c.bf16 %v4135, %v4134
  %v4163 = vpack.c.bf16 %v4137, %v4136
  %v4164 = vpack.c.bf16 %v4139, %v4138
  %v4165 = vpack.c.bf16 %v4141, %v4140
  %v4166 = vpack.c.bf16 %v4143, %v4142
  %v4167 = vpack.c.bf16 %v4145, %v4144
  %v4168 = vpack.c.bf16 %v4147, %v4146
  %v4169 = vpack.c.bf16 %v4149, %v4148
  %v4170 = vpack.c.bf16 %v4151, %v4150
  %v4171 = vpack.c.bf16 %v4153, %v4152
  %v4172 = vpack.c.bf16 %v4155, %v4154
  %v4173 = vpack.c.bf16 %v4157, %v4156
  %4174 = vrot.lane.b32.xlu0 %v3382, 64
  %v4175 = vpop.permute.xlu0 %4174
  %4176 = vrot.lane.b32.xlu0 %v3383, 64
  %v4177 = vpop.permute.xlu0 %4176
  %4178 = vrot.lane.b32.xlu0 %v3384, 64
  %v4179 = vpop.permute.xlu0 %4178
  %4180 = vrot.lane.b32.xlu0 %v3385, 64
  %v4181 = vpop.permute.xlu0 %4180
  %v4187 = vsel %vm808, %v4158, 0
  %v4190 = vsel %vm808, %v4159, 0
  %v4193 = vsel %vm808, %v4160, 0
  %v4196 = vsel %vm808, %v4161, 0
  %4198 = vmatprep.subr.bf16.mxu0 0
  %4199 = vmatpush1.bf16.msra.mxu0 %v4175
  %4200 = vmatprep.subr.bf16.mxu0 0
  %4201 = vmatpush1.bf16.msra.mxu0 %v4177
  %4202 = vmatprep.subr.bf16.mxu0 0
  %4203 = vmatpush1.bf16.msra.mxu0 %v4179
  %4204 = vmatprep.subr.bf16.mxu0 0
  %4205 = vmatpush1.bf16.msra.mxu0 %v4181
  %4206 = vmatprep.subr.bf16.mxu0 0
  %4207 = vmatpush1.bf16.msra.mxu0 0
  %4208 = vmatprep.subr.bf16.mxu0 0
  %4209 = vmatpush1.bf16.msra.mxu0 0
  %4210 = vmatprep.subr.bf16.mxu0 0
  %4211 = vmatpush1.bf16.msra.mxu0 0
  %4212 = vmatprep.subr.bf16.mxu0 0
  %4213 = vmatpush1.bf16.msra.mxu0 0
  %4214 = vmatprep.subr.bf16.mxu0 0
  %4215 = vmatpush1.bf16.msra.mxu0 0
  %4216 = vmatprep.subr.bf16.mxu0 0
  %4217 = vmatpush1.bf16.msra.mxu0 0
  %4218 = vmatprep.subr.bf16.mxu0 0
  %4219 = vmatpush1.bf16.msra.mxu0 0
  %4220 = vmatprep.subr.bf16.mxu0 0
  %4221 = vmatpush1.bf16.msra.mxu0 0
  %4222 = vmatprep.subr.bf16.mxu0 0
  %4223 = vmatpush1.bf16.msra.mxu0 0
  %4224 = vmatprep.subr.bf16.mxu0 0
  %4225 = vmatpush1.bf16.msra.mxu0 0
  %4226 = vmatprep.subr.bf16.mxu0 0
  %4227 = vmatpush1.bf16.msra.mxu0 0
  %4228 = vmatprep.subr.bf16.mxu0 0
  %4229 = vmatpush1.bf16.msra.mxu0 0
  %4230 = vmatprep.mubr.bf16.mxu0 0
  %4231 = vmatmul.mubr.bf16.gmra.mrb[0].mxu0 %v4187
  %v4232 = vpop.f32.mrb[0].mxu0
  %v4233 = vadd.f32 0.0, %v4232
  %v4234 = vpop.f32.mrb[0].mxu0
  %v4235 = vpop.f32.mrb[0].mxu0
  %v4236 = vadd.f32 0.0, %v4235
  %v4237 = vpop.f32.mrb[0].mxu0
  %4238 = vmatprep.mubr.bf16.mxu0 0
  %4239 = vmatmul.mubr.bf16.gmra.mrb[0].mxu0 %v4190
  %v4240 = vpop.f32.mrb[0].mxu0
  %v4241 = vadd.f32 0.0, %v4240
  %v4242 = vpop.f32.mrb[0].mxu0
  %v4243 = vpop.f32.mrb[0].mxu0
  %v4244 = vadd.f32 0.0, %v4243
  %v4245 = vpop.f32.mrb[0].mxu0
  %4246 = vmatprep.mubr.bf16.mxu0 0
  %4247 = vmatmul.mubr.bf16.gmra.mrb[0].mxu0 %v4193
  %v4248 = vpop.f32.mrb[0].mxu0
  %v4249 = vadd.f32 0.0, %v4248
  %v4250 = vpop.f32.mrb[0].mxu0
  %v4251 = vpop.f32.mrb[0].mxu0
  %v4252 = vadd.f32 0.0, %v4251
  %v4253 = vpop.f32.mrb[0].mxu0
  %4254 = vmatprep.mubr.bf16.mxu0 0
  %4255 = vmatmul.mubr.bf16.gmra.mrb[0].mxu0 %v4196
  %v4256 = vpop.f32.mrb[0].mxu0
  %v4257 = vadd.f32 0.0, %v4256
  %v4258 = vpop.f32.mrb[0].mxu0
  %v4259 = vpop.f32.mrb[0].mxu0
  %v4260 = vadd.f32 0.0, %v4259
  %v4261 = vpop.f32.mrb[0].mxu0
  %4262 = vdwg.mxu0
  %4263 = vrot.lane.b32.xlu0 %v3382, 56
  %v4264 = vpop.permute.xlu0 %4263
  %4265 = vrot.lane.b32.xlu0 %v3383, 56
  %v4266 = vpop.permute.xlu0 %4265
  %4267 = vrot.lane.b32.xlu0 %v3384, 56
  %v4268 = vpop.permute.xlu0 %4267
  %4269 = vrot.lane.b32.xlu0 %v3385, 56
  %v4270 = vpop.permute.xlu0 %4269
  %v4276 = vsel %vm808, %v4162, 0
  %v4279 = vsel %vm808, %v4163, 0
  %v4282 = vsel %vm808, %v4164, 0
  %v4285 = vsel %vm808, %v4165, 0
  %4287 = vmatprep.subr.bf16.mxu0 0
  %4288 = vmatpush1.bf16.msra.mxu0 %v4264
  %4289 = vmatprep.subr.bf16.mxu0 0
  %4290 = vmatpush1.bf16.msra.mxu0 %v4266
  %4291 = vmatprep.subr.bf16.mxu0 0
  %4292 = vmatpush1.bf16.msra.mxu0 %v4268
  %4293 = vmatprep.subr.bf16.mxu0 0
  %4294 = vmatpush1.bf16.msra.mxu0 %v4270
  %4295 = vmatprep.subr.bf16.mxu0 0
  %4296 = vmatpush1.bf16.msra.mxu0 0
  %4297 = vmatprep.subr.bf16.mxu0 0
  %4298 = vmatpush1.bf16.msra.mxu0 0
  %4299 = vmatprep.subr.bf16.mxu0 0
  %4300 = vmatpush1.bf16.msra.mxu0 0
  %4301 = vmatprep.subr.bf16.mxu0 0
  %4302 = vmatpush1.bf16.msra.mxu0 0
  %4303 = vmatprep.subr.bf16.mxu0 0
  %4304 = vmatpush1.bf16.msra.mxu0 0
  %4305 = vmatprep.subr.bf16.mxu0 0
  %4306 = vmatpush1.bf16.msra.mxu0 0
  %4307 = vmatprep.subr.bf16.mxu0 0
  %4308 = vmatpush1.bf16.msra.mxu0 0
  %4309 = vmatprep.subr.bf16.mxu0 0
  %4310 = vmatpush1.bf16.msra.mxu0 0
  %4311 = vmatprep.subr.bf16.mxu0 0
  %4312 = vmatpush1.bf16.msra.mxu0 0
  %4313 = vmatprep.subr.bf16.mxu0 0
  %4314 = vmatpush1.bf16.msra.mxu0 0
  %4315 = vmatprep.subr.bf16.mxu0 0
  %4316 = vmatpush1.bf16.msra.mxu0 0
  %4317 = vmatprep.subr.bf16.mxu0 0
  %4318 = vmatpush1.bf16.msra.mxu0 0
  %4319 = vmatprep.mubr.bf16.mxu0 0
  %4320 = vmatmul.mubr.bf16.gmra.mrb[0].mxu0 %v4276
  %v4321 = vpop.f32.mrb[0].mxu0
  %v4322 = vadd.f32 0.0, %v4321
  %v4323 = vpop.f32.mrb[0].mxu0
  %v4324 = vpop.f32.mrb[0].mxu0
  %v4325 = vadd.f32 0.0, %v4324
  %v4326 = vpop.f32.mrb[0].mxu0
  %4327 = vmatprep.mubr.bf16.mxu0 0
  %4328 = vmatmul.mubr.bf16.gmra.mrb[0].mxu0 %v4279
  %v4329 = vpop.f32.mrb[0].mxu0
  %v4330 = vadd.f32 0.0, %v4329
  %v4331 = vpop.f32.mrb[0].mxu0
  %v4332 = vpop.f32.mrb[0].mxu0
  %v4333 = vadd.f32 0.0, %v4332
  %v4334 = vpop.f32.mrb[0].mxu0
  %4335 = vmatprep.mubr.bf16.mxu0 0
  %4336 = vmatmul.mubr.bf16.gmra.mrb[0].mxu0 %v4282
  %v4337 = vpop.f32.mrb[0].mxu0
  %v4338 = vadd.f32 0.0, %v4337
  %v4339 = vpop.f32.mrb[0].mxu0
  %v4340 = vpop.f32.mrb[0].mxu0
  %v4341 = vadd.f32 0.0, %v4340
  %v4342 = vpop.f32.mrb[0].mxu0
  %4343 = vmatprep.mubr.bf16.mxu0 0
  %4344 = vmatmul.mubr.bf16.gmra.mrb[0].mxu0 %v4285
  %v4345 = vpop.f32.mrb[0].mxu0
  %v4346 = vadd.f32 0.0, %v4345
  %v4347 = vpop.f32.mrb[0].mxu0
  %v4348 = vpop.f32.mrb[0].mxu0
  %v4349 = vadd.f32 0.0, %v4348
  %v4350 = vpop.f32.mrb[0].mxu0
  %4351 = vdwg.mxu0
  %4352 = vrot.lane.b32.xlu0 %v3382, 48
  %v4353 = vpop.permute.xlu0 %4352
  %4354 = vrot.lane.b32.xlu0 %v3383, 48
  %v4355 = vpop.permute.xlu0 %4354
  %4356 = vrot.lane.b32.xlu0 %v3384, 48
  %v4357 = vpop.permute.xlu0 %4356
  %4358 = vrot.lane.b32.xlu0 %v3385, 48
  %v4359 = vpop.permute.xlu0 %4358
  %v4365 = vsel %vm808, %v4166, 0
  %v4368 = vsel %vm808, %v4167, 0
  %v4371 = vsel %vm808, %v4168, 0
  %v4374 = vsel %vm808, %v4169, 0
  %4376 = vmatprep.subr.bf16.mxu0 0
  %4377 = vmatpush1.bf16.msra.mxu0 %v4353
  %4378 = vmatprep.subr.bf16.mxu0 0
  %4379 = vmatpush1.bf16.msra.mxu0 %v4355
  %4380 = vmatprep.subr.bf16.mxu0 0
  %4381 = vmatpush1.bf16.msra.mxu0 %v4357
  %4382 = vmatprep.subr.bf16.mxu0 0
  %4383 = vmatpush1.bf16.msra.mxu0 %v4359
  %4384 = vmatprep.subr.bf16.mxu0 0
  %4385 = vmatpush1.bf16.msra.mxu0 0
  %4386 = vmatprep.subr.bf16.mxu0 0
  %4387 = vmatpush1.bf16.msra.mxu0 0
  %4388 = vmatprep.subr.bf16.mxu0 0
  %4389 = vmatpush1.bf16.msra.mxu0 0
  %4390 = vmatprep.subr.bf16.mxu0 0
  %4391 = vmatpush1.bf16.msra.mxu0 0
  %4392 = vmatprep.subr.bf16.mxu0 0
  %4393 = vmatpush1.bf16.msra.mxu0 0
  %4394 = vmatprep.subr.bf16.mxu0 0
  %4395 = vmatpush1.bf16.msra.mxu0 0
  %4396 = vmatprep.subr.bf16.mxu0 0
  %4397 = vmatpush1.bf16.msra.mxu0 0
  %4398 = vmatprep.subr.bf16.mxu0 0
  %4399 = vmatpush1.bf16.msra.mxu0 0
  %4400 = vmatprep.subr.bf16.mxu0 0
  %4401 = vmatpush1.bf16.msra.mxu0 0
  %4402 = vmatprep.subr.bf16.mxu0 0
  %4403 = vmatpush1.bf16.msra.mxu0 0
  %4404 = vmatprep.subr.bf16.mxu0 0
  %4405 = vmatpush1.bf16.msra.mxu0 0
  %4406 = vmatprep.subr.bf16.mxu0 0
  %4407 = vmatpush1.bf16.msra.mxu0 0
  %4408 = vmatprep.mubr.bf16.mxu0 0
  %4409 = vmatmul.mubr.bf16.gmra.mrb[0].mxu0 %v4365
  %v4410 = vpop.f32.mrb[0].mxu0
  %v4411 = vadd.f32 0.0, %v4410
  %v4412 = vpop.f32.mrb[0].mxu0
  %v4413 = vpop.f32.mrb[0].mxu0
  %v4414 = vadd.f32 0.0, %v4413
  %v4415 = vpop.f32.mrb[0].mxu0
  %4416 = vmatprep.mubr.bf16.mxu0 0
  %4417 = vmatmul.mubr.bf16.gmra.mrb[0].mxu0 %v4368
  %v4418 = vpop.f32.mrb[0].mxu0
  %v4419 = vadd.f32 0.0, %v4418
  %v4420 = vpop.f32.mrb[0].mxu0
  %v4421 = vpop.f32.mrb[0].mxu0
  %v4422 = vadd.f32 0.0, %v4421
  %v4423 = vpop.f32.mrb[0].mxu0
  %4424 = vmatprep.mubr.bf16.mxu0 0
  %4425 = vmatmul.mubr.bf16.gmra.mrb[0].mxu0 %v4371
  %v4426 = vpop.f32.mrb[0].mxu0
  %v4427 = vadd.f32 0.0, %v4426
  %v4428 = vpop.f32.mrb[0].mxu0
  %v4429 = vpop.f32.mrb[0].mxu0
  %v4430 = vadd.f32 0.0, %v4429
  %v4431 = vpop.f32.mrb[0].mxu0
  %4432 = vmatprep.mubr.bf16.mxu0 0
  %4433 = vmatmul.mubr.bf16.gmra.mrb[0].mxu0 %v4374
  %v4434 = vpop.f32.mrb[0].mxu0
  %v4435 = vadd.f32 0.0, %v4434
  %v4436 = vpop.f32.mrb[0].mxu0
  %v4437 = vpop.f32.mrb[0].mxu0
  %v4438 = vadd.f32 0.0, %v4437
  %v4439 = vpop.f32.mrb[0].mxu0
  %4440 = vdwg.mxu0
  %4441 = vrot.lane.b32.xlu0 %v3382, 40
  %v4442 = vpop.permute.xlu0 %4441
  %4443 = vrot.lane.b32.xlu0 %v3383, 40
  %v4444 = vpop.permute.xlu0 %4443
  %4445 = vrot.lane.b32.xlu0 %v3384, 40
  %v4446 = vpop.permute.xlu0 %4445
  %4447 = vrot.lane.b32.xlu0 %v3385, 40
  %v4448 = vpop.permute.xlu0 %4447
  %v4454 = vsel %vm808, %v4170, 0
  %v4457 = vsel %vm808, %v4171, 0
  %v4460 = vsel %vm808, %v4172, 0
  %v4463 = vsel %vm808, %v4173, 0
  %4465 = vmatprep.subr.bf16.mxu0 0
  %4466 = vmatpush1.bf16.msra.mxu0 %v4442
  %4467 = vmatprep.subr.bf16.mxu0 0
  %4468 = vmatpush1.bf16.msra.mxu0 %v4444
  %4469 = vmatprep.subr.bf16.mxu0 0
  %4470 = vmatpush1.bf16.msra.mxu0 %v4446
  %4471 = vmatprep.subr.bf16.mxu0 0
  %4472 = vmatpush1.bf16.msra.mxu0 %v4448
  %4473 = vmatprep.subr.bf16.mxu0 0
  %4474 = vmatpush1.bf16.msra.mxu0 0
  %4475 = vmatprep.subr.bf16.mxu0 0
  %4476 = vmatpush1.bf16.msra.mxu0 0
  %4477 = vmatprep.subr.bf16.mxu0 0
  %4478 = vmatpush1.bf16.msra.mxu0 0
  %4479 = vmatprep.subr.bf16.mxu0 0
  %4480 = vmatpush1.bf16.msra.mxu0 0
  %4481 = vmatprep.subr.bf16.mxu0 0
  %4482 = vmatpush1.bf16.msra.mxu0 0
  %4483 = vmatprep.subr.bf16.mxu0 0
  %4484 = vmatpush1.bf16.msra.mxu0 0
  %4485 = vmatprep.subr.bf16.mxu0 0
  %4486 = vmatpush1.bf16.msra.mxu0 0
  %4487 = vmatprep.subr.bf16.mxu0 0
  %4488 = vmatpush1.bf16.msra.mxu0 0
  %4489 = vmatprep.subr.bf16.mxu0 0
  %4490 = vmatpush1.bf16.msra.mxu0 0
  %4491 = vmatprep.subr.bf16.mxu0 0
  %4492 = vmatpush1.bf16.msra.mxu0 0
  %4493 = vmatprep.subr.bf16.mxu0 0
  %4494 = vmatpush1.bf16.msra.mxu0 0
  %4495 = vmatprep.subr.bf16.mxu0 0
  %4496 = vmatpush1.bf16.msra.mxu0 0
  %4497 = vmatprep.mubr.bf16.mxu0 0
  %4498 = vmatmul.mubr.bf16.gmra.mrb[0].mxu0 %v4454
  %v4499 = vpop.f32.mrb[0].mxu0
  %v4500 = vadd.f32 0.0, %v4499
  %v4501 = vpop.f32.mrb[0].mxu0
  %v4502 = vpop.f32.mrb[0].mxu0
  %v4503 = vadd.f32 0.0, %v4502
  %v4504 = vpop.f32.mrb[0].mxu0
  %4505 = vmatprep.mubr.bf16.mxu0 0
  %4506 = vmatmul.mubr.bf16.gmra.mrb[0].mxu0 %v4457
  %v4507 = vpop.f32.mrb[0].mxu0
  %v4508 = vadd.f32 0.0, %v4507
  %v4509 = vpop.f32.mrb[0].mxu0
  %v4510 = vpop.f32.mrb[0].mxu0
  %v4511 = vadd.f32 0.0, %v4510
  %v4512 = vpop.f32.mrb[0].mxu0
  %4513 = vmatprep.mubr.bf16.mxu0 0
  %4514 = vmatmul.mubr.bf16.gmra.mrb[0].mxu0 %v4460
  %v4515 = vpop.f32.mrb[0].mxu0
  %v4516 = vadd.f32 0.0, %v4515
  %v4517 = vpop.f32.mrb[0].mxu0
  %v4518 = vpop.f32.mrb[0].mxu0
  %v4519 = vadd.f32 0.0, %v4518
  %v4520 = vpop.f32.mrb[0].mxu0
  %4521 = vmatprep.mubr.bf16.mxu0 0
  %4522 = vmatmul.mubr.bf16.gmra.mrb[0].mxu0 %v4463
  %v4523 = vpop.f32.mrb[0].mxu0
  %v4524 = vadd.f32 0.0, %v4523
  %v4525 = vpop.f32.mrb[0].mxu0
  %v4526 = vpop.f32.mrb[0].mxu0
  %v4527 = vadd.f32 0.0, %v4526
  %v4528 = vpop.f32.mrb[0].mxu0
  %4529 = vdwg.mxu0
  %4538 = vrot.lane.b32.xlu0 %v4322, 8
  %v4539 = vpop.permute.xlu0 %4538
  %4540 = vrot.lane.b32.xlu0 %v4325, 8
  %v4541 = vpop.permute.xlu0 %4540
  %4542 = vrot.lane.b32.xlu0 %v4330, 8
  %v4543 = vpop.permute.xlu0 %4542
  %4544 = vrot.lane.b32.xlu0 %v4333, 8
  %v4545 = vpop.permute.xlu0 %4544
  %4546 = vrot.lane.b32.xlu0 %v4338, 8
  %v4547 = vpop.permute.xlu0 %4546
  %4548 = vrot.lane.b32.xlu0 %v4341, 8
  %v4549 = vpop.permute.xlu0 %4548
  %4550 = vrot.lane.b32.xlu0 %v4346, 8
  %v4551 = vpop.permute.xlu0 %4550
  %4552 = vrot.lane.b32.xlu0 %v4349, 8
  %v4553 = vpop.permute.xlu0 %4552
  %4570 = vrot.lane.b32.xlu0 %v4411, 16
  %v4571 = vpop.permute.xlu0 %4570
  %4572 = vrot.lane.b32.xlu0 %v4414, 16
  %v4573 = vpop.permute.xlu0 %4572
  %4574 = vrot.lane.b32.xlu0 %v4419, 16
  %v4575 = vpop.permute.xlu0 %4574
  %4576 = vrot.lane.b32.xlu0 %v4422, 16
  %v4577 = vpop.permute.xlu0 %4576
  %4578 = vrot.lane.b32.xlu0 %v4427, 16
  %v4579 = vpop.permute.xlu0 %4578
  %4580 = vrot.lane.b32.xlu0 %v4430, 16
  %v4581 = vpop.permute.xlu0 %4580
  %4582 = vrot.lane.b32.xlu0 %v4435, 16
  %v4583 = vpop.permute.xlu0 %4582
  %4584 = vrot.lane.b32.xlu0 %v4438, 16
  %v4585 = vpop.permute.xlu0 %4584
  %4602 = vrot.lane.b32.xlu0 %v4500, 24
  %v4603 = vpop.permute.xlu0 %4602
  %4604 = vrot.lane.b32.xlu0 %v4503, 24
  %v4605 = vpop.permute.xlu0 %4604
  %4606 = vrot.lane.b32.xlu0 %v4508, 24
  %v4607 = vpop.permute.xlu0 %4606
  %4608 = vrot.lane.b32.xlu0 %v4511, 24
  %v4609 = vpop.permute.xlu0 %4608
  %4610 = vrot.lane.b32.xlu0 %v4516, 24
  %v4611 = vpop.permute.xlu0 %4610
  %4612 = vrot.lane.b32.xlu0 %v4519, 24
  %v4613 = vpop.permute.xlu0 %4612
  %4614 = vrot.lane.b32.xlu0 %v4524, 24
  %v4615 = vpop.permute.xlu0 %4614
  %4616 = vrot.lane.b32.xlu0 %v4527, 24
  %v4617 = vpop.permute.xlu0 %4616
  %v4626 = vsel %vm403, %v4233, %v4539
  %v4627 = vsel %vm403, %v4236, %v4541
  %v4628 = vsel %vm403, %v4241, %v4543
  %v4629 = vsel %vm403, %v4244, %v4545
  %v4630 = vsel %vm403, %v4249, %v4547
  %v4631 = vsel %vm403, %v4252, %v4549
  %v4632 = vsel %vm403, %v4257, %v4551
  %v4633 = vsel %vm403, %v4260, %v4553
  %v4634 = vsel %vm1637, %v4626, %v4571
  %v4635 = vsel %vm1637, %v4627, %v4573
  %v4636 = vsel %vm1637, %v4628, %v4575
  %v4637 = vsel %vm1637, %v4629, %v4577
  %v4638 = vsel %vm1637, %v4630, %v4579
  %v4639 = vsel %vm1637, %v4631, %v4581
  %v4640 = vsel %vm1637, %v4632, %v4583
  %v4641 = vsel %vm1637, %v4633, %v4585
  %v4642 = vsel %vm1646, %v4634, %v4603
  %v4643 = vsel %vm1646, %v4635, %v4605
  %v4644 = vsel %vm1646, %v4636, %v4607
  %v4645 = vsel %vm1646, %v4637, %v4609
  %v4646 = vsel %vm1646, %v4638, %v4611
  %v4647 = vsel %vm1646, %v4639, %v4613
  %v4648 = vsel %vm1646, %v4640, %v4615
  %v4649 = vsel %vm1646, %v4641, %v4617
  %4654 = vrot.lane.b32.xlu0 %v3386, 96
  %v4655 = vpop.permute.xlu0 %4654
  %4656 = vrot.lane.b32.xlu0 %v3387, 96
  %v4657 = vpop.permute.xlu0 %4656
  %4658 = vrot.lane.b32.xlu0 %v3388, 96
  %v4659 = vpop.permute.xlu0 %4658
  %4660 = vrot.lane.b32.xlu0 %v3389, 96
  %v4661 = vpop.permute.xlu0 %4660
  %v4663 = vsel %vm403, %v3386, 0
  %v4666 = vsel %vm403, %v3387, 0
  %v4669 = vsel %vm403, %v3388, 0
  %v4672 = vsel %vm403, %v3389, 0
  %v4675 = vsel %vm403, %v4655, 0
  %v4678 = vsel %vm403, %v4657, 0
  %v4681 = vsel %vm403, %v4659, 0
  %v4684 = vsel %vm403, %v4661, 0
  %4686 = vmatprep.subr.bf16.mxu0 0
  %4687 = vmatpush1.bf16.xpose.msra.mxu0 %v4675
  %4688 = vmatprep.subr.bf16.mxu0 0
  %4689 = vmatpush1.bf16.xpose.msra.mxu0 %v4678
  %4690 = vmatprep.subr.bf16.mxu0 0
  %4691 = vmatpush1.bf16.xpose.msra.mxu0 %v4681
  %4692 = vmatprep.subr.bf16.mxu0 0
  %4693 = vmatpush1.bf16.xpose.msra.mxu0 %v4684
  %4694 = vmatprep.subr.bf16.mxu0 0
  %4695 = vmatpush1.bf16.xpose.msra.mxu0 0
  %4696 = vmatprep.subr.bf16.mxu0 0
  %4697 = vmatpush1.bf16.xpose.msra.mxu0 0
  %4698 = vmatprep.subr.bf16.mxu0 0
  %4699 = vmatpush1.bf16.xpose.msra.mxu0 0
  %4700 = vmatprep.subr.bf16.mxu0 0
  %4701 = vmatpush1.bf16.xpose.msra.mxu0 0
  %4702 = vmatprep.subr.bf16.mxu0 0
  %4703 = vmatpush1.bf16.xpose.msra.mxu0 0
  %4704 = vmatprep.subr.bf16.mxu0 0
  %4705 = vmatpush1.bf16.xpose.msra.mxu0 0
  %4706 = vmatprep.subr.bf16.mxu0 0
  %4707 = vmatpush1.bf16.xpose.msra.mxu0 0
  %4708 = vmatprep.subr.bf16.mxu0 0
  %4709 = vmatpush1.bf16.xpose.msra.mxu0 0
  %4710 = vmatprep.subr.bf16.mxu0 0
  %4711 = vmatpush1.bf16.xpose.msra.mxu0 0
  %4712 = vmatprep.subr.bf16.mxu0 0
  %4713 = vmatpush1.bf16.xpose.msra.mxu0 0
  %4714 = vmatprep.subr.bf16.mxu0 0
  %4715 = vmatpush1.bf16.xpose.msra.mxu0 0
  %4716 = vmatprep.subr.bf16.mxu0 0
  %4717 = vmatpush1.bf16.xpose.msra.mxu0 0
  %4718 = vmatprep.mubr.bf16.mxu0 0
  %4719 = vmatmul.mubr.bf16.gmra.mrb[0].mxu0 %v4663
  %v4720 = vpop.f32.mrb[0].mxu0
  %v4721 = vadd.f32 0.0, %v4720
  %v4722 = vpop.f32.mrb[0].mxu0
  %v4723 = vpop.f32.mrb[0].mxu0
  %v4724 = vadd.f32 0.0, %v4723
  %v4725 = vpop.f32.mrb[0].mxu0
  %4726 = vmatprep.mubr.bf16.mxu0 0
  %4727 = vmatmul.mubr.bf16.gmra.mrb[0].mxu0 %v4666
  %v4728 = vpop.f32.mrb[0].mxu0
  %v4729 = vadd.f32 0.0, %v4728
  %v4730 = vpop.f32.mrb[0].mxu0
  %v4731 = vpop.f32.mrb[0].mxu0
  %v4732 = vadd.f32 0.0, %v4731
  %v4733 = vpop.f32.mrb[0].mxu0
  %4734 = vmatprep.mubr.bf16.mxu0 0
  %4735 = vmatmul.mubr.bf16.gmra.mrb[0].mxu0 %v4669
  %v4736 = vpop.f32.mrb[0].mxu0
  %v4737 = vadd.f32 0.0, %v4736
  %v4738 = vpop.f32.mrb[0].mxu0
  %v4739 = vpop.f32.mrb[0].mxu0
  %v4740 = vadd.f32 0.0, %v4739
  %v4741 = vpop.f32.mrb[0].mxu0
  %4742 = vmatprep.mubr.bf16.mxu0 0
  %4743 = vmatmul.mubr.bf16.gmra.mrb[0].mxu0 %v4672
  %v4744 = vpop.f32.mrb[0].mxu0
  %v4745 = vadd.f32 0.0, %v4744
  %v4746 = vpop.f32.mrb[0].mxu0
  %v4747 = vpop.f32.mrb[0].mxu0
  %v4748 = vadd.f32 0.0, %v4747
  %v4749 = vpop.f32.mrb[0].mxu0
  %4750 = vdwg.mxu0
  %4751 = vrot.lane.b32.xlu0 %v3386, 120
  %v4752 = vpop.permute.xlu0 %4751
  %4753 = vrot.lane.b32.xlu0 %v3387, 120
  %v4754 = vpop.permute.xlu0 %4753
  %4755 = vrot.lane.b32.xlu0 %v3388, 120
  %v4756 = vpop.permute.xlu0 %4755
  %4757 = vrot.lane.b32.xlu0 %v3389, 120
  %v4758 = vpop.permute.xlu0 %4757
  %4759 = vrot.lane.b32.xlu0 %v3386, 88
  %v4760 = vpop.permute.xlu0 %4759
  %4761 = vrot.lane.b32.xlu0 %v3387, 88
  %v4762 = vpop.permute.xlu0 %4761
  %4763 = vrot.lane.b32.xlu0 %v3388, 88
  %v4764 = vpop.permute.xlu0 %4763
  %4765 = vrot.lane.b32.xlu0 %v3389, 88
  %v4766 = vpop.permute.xlu0 %4765
  %v4768 = vsel %vm403, %v4752, 0
  %v4771 = vsel %vm403, %v4754, 0
  %v4774 = vsel %vm403, %v4756, 0
  %v4777 = vsel %vm403, %v4758, 0
  %v4780 = vsel %vm403, %v4760, 0
  %v4783 = vsel %vm403, %v4762, 0
  %v4786 = vsel %vm403, %v4764, 0
  %v4789 = vsel %vm403, %v4766, 0
  %4791 = vmatprep.subr.bf16.mxu0 0
  %4792 = vmatpush1.bf16.xpose.msra.mxu0 %v4780
  %4793 = vmatprep.subr.bf16.mxu0 0
  %4794 = vmatpush1.bf16.xpose.msra.mxu0 %v4783
  %4795 = vmatprep.subr.bf16.mxu0 0
  %4796 = vmatpush1.bf16.xpose.msra.mxu0 %v4786
  %4797 = vmatprep.subr.bf16.mxu0 0
  %4798 = vmatpush1.bf16.xpose.msra.mxu0 %v4789
  %4799 = vmatprep.subr.bf16.mxu0 0
  %4800 = vmatpush1.bf16.xpose.msra.mxu0 0
  %4801 = vmatprep.subr.bf16.mxu0 0
  %4802 = vmatpush1.bf16.xpose.msra.mxu0 0
  %4803 = vmatprep.subr.bf16.mxu0 0
  %4804 = vmatpush1.bf16.xpose.msra.mxu0 0
  %4805 = vmatprep.subr.bf16.mxu0 0
  %4806 = vmatpush1.bf16.xpose.msra.mxu0 0
  %4807 = vmatprep.subr.bf16.mxu0 0
  %4808 = vmatpush1.bf16.xpose.msra.mxu0 0
  %4809 = vmatprep.subr.bf16.mxu0 0
  %4810 = vmatpush1.bf16.xpose.msra.mxu0 0
  %4811 = vmatprep.subr.bf16.mxu0 0
  %4812 = vmatpush1.bf16.xpose.msra.mxu0 0
  %4813 = vmatprep.subr.bf16.mxu0 0
  %4814 = vmatpush1.bf16.xpose.msra.mxu0 0
  %4815 = vmatprep.subr.bf16.mxu0 0
  %4816 = vmatpush1.bf16.xpose.msra.mxu0 0
  %4817 = vmatprep.subr.bf16.mxu0 0
  %4818 = vmatpush1.bf16.xpose.msra.mxu0 0
  %4819 = vmatprep.subr.bf16.mxu0 0
  %4820 = vmatpush1.bf16.xpose.msra.mxu0 0
  %4821 = vmatprep.subr.bf16.mxu0 0
  %4822 = vmatpush1.bf16.xpose.msra.mxu0 0
  %4823 = vmatprep.mubr.bf16.mxu0 0
  %4824 = vmatmul.mubr.bf16.gmra.mrb[0].mxu0 %v4768
  %v4825 = vpop.f32.mrb[0].mxu0
  %v4826 = vadd.f32 0.0, %v4825
  %v4827 = vpop.f32.mrb[0].mxu0
  %v4828 = vpop.f32.mrb[0].mxu0
  %v4829 = vadd.f32 0.0, %v4828
  %v4830 = vpop.f32.mrb[0].mxu0
  %4831 = vmatprep.mubr.bf16.mxu0 0
  %4832 = vmatmul.mubr.bf16.gmra.mrb[0].mxu0 %v4771
  %v4833 = vpop.f32.mrb[0].mxu0
  %v4834 = vadd.f32 0.0, %v4833
  %v4835 = vpop.f32.mrb[0].mxu0
  %v4836 = vpop.f32.mrb[0].mxu0
  %v4837 = vadd.f32 0.0, %v4836
  %v4838 = vpop.f32.mrb[0].mxu0
  %4839 = vmatprep.mubr.bf16.mxu0 0
  %4840 = vmatmul.mubr.bf16.gmra.mrb[0].mxu0 %v4774
  %v4841 = vpop.f32.mrb[0].mxu0
  %v4842 = vadd.f32 0.0, %v4841
  %v4843 = vpop.f32.mrb[0].mxu0
  %v4844 = vpop.f32.mrb[0].mxu0
  %v4845 = vadd.f32 0.0, %v4844
  %v4846 = vpop.f32.mrb[0].mxu0
  %4847 = vmatprep.mubr.bf16.mxu0 0
  %4848 = vmatmul.mubr.bf16.gmra.mrb[0].mxu0 %v4777
  %v4849 = vpop.f32.mrb[0].mxu0
  %v4850 = vadd.f32 0.0, %v4849
  %v4851 = vpop.f32.mrb[0].mxu0
  %v4852 = vpop.f32.mrb[0].mxu0
  %v4853 = vadd.f32 0.0, %v4852
  %v4854 = vpop.f32.mrb[0].mxu0
  %4855 = vdwg.mxu0
  %4856 = vrot.lane.b32.xlu0 %v3386, 112
  %v4857 = vpop.permute.xlu0 %4856
  %4858 = vrot.lane.b32.xlu0 %v3387, 112
  %v4859 = vpop.permute.xlu0 %4858
  %4860 = vrot.lane.b32.xlu0 %v3388, 112
  %v4861 = vpop.permute.xlu0 %4860
  %4862 = vrot.lane.b32.xlu0 %v3389, 112
  %v4863 = vpop.permute.xlu0 %4862
  %4864 = vrot.lane.b32.xlu0 %v3386, 80
  %v4865 = vpop.permute.xlu0 %4864
  %4866 = vrot.lane.b32.xlu0 %v3387, 80
  %v4867 = vpop.permute.xlu0 %4866
  %4868 = vrot.lane.b32.xlu0 %v3388, 80
  %v4869 = vpop.permute.xlu0 %4868
  %4870 = vrot.lane.b32.xlu0 %v3389, 80
  %v4871 = vpop.permute.xlu0 %4870
  %v4873 = vsel %vm403, %v4857, 0
  %v4876 = vsel %vm403, %v4859, 0
  %v4879 = vsel %vm403, %v4861, 0
  %v4882 = vsel %vm403, %v4863, 0
  %v4885 = vsel %vm403, %v4865, 0
  %v4888 = vsel %vm403, %v4867, 0
  %v4891 = vsel %vm403, %v4869, 0
  %v4894 = vsel %vm403, %v4871, 0
  %4896 = vmatprep.subr.bf16.mxu0 0
  %4897 = vmatpush1.bf16.xpose.msra.mxu0 %v4885
  %4898 = vmatprep.subr.bf16.mxu0 0
  %4899 = vmatpush1.bf16.xpose.msra.mxu0 %v4888
  %4900 = vmatprep.subr.bf16.mxu0 0
  %4901 = vmatpush1.bf16.xpose.msra.mxu0 %v4891
  %4902 = vmatprep.subr.bf16.mxu0 0
  %4903 = vmatpush1.bf16.xpose.msra.mxu0 %v4894
  %4904 = vmatprep.subr.bf16.mxu0 0
  %4905 = vmatpush1.bf16.xpose.msra.mxu0 0
  %4906 = vmatprep.subr.bf16.mxu0 0
  %4907 = vmatpush1.bf16.xpose.msra.mxu0 0
  %4908 = vmatprep.subr.bf16.mxu0 0
  %4909 = vmatpush1.bf16.xpose.msra.mxu0 0
  %4910 = vmatprep.subr.bf16.mxu0 0
  %4911 = vmatpush1.bf16.xpose.msra.mxu0 0
  %4912 = vmatprep.subr.bf16.mxu0 0
  %4913 = vmatpush1.bf16.xpose.msra.mxu0 0
  %4914 = vmatprep.subr.bf16.mxu0 0
  %4915 = vmatpush1.bf16.xpose.msra.mxu0 0
  %4916 = vmatprep.subr.bf16.mxu0 0
  %4917 = vmatpush1.bf16.xpose.msra.mxu0 0
  %4918 = vmatprep.subr.bf16.mxu0 0
  %4919 = vmatpush1.bf16.xpose.msra.mxu0 0
  %4920 = vmatprep.subr.bf16.mxu0 0
  %4921 = vmatpush1.bf16.xpose.msra.mxu0 0
  %4922 = vmatprep.subr.bf16.mxu0 0
  %4923 = vmatpush1.bf16.xpose.msra.mxu0 0
  %4924 = vmatprep.subr.bf16.mxu0 0
  %4925 = vmatpush1.bf16.xpose.msra.mxu0 0
  %4926 = vmatprep.subr.bf16.mxu0 0
  %4927 = vmatpush1.bf16.xpose.msra.mxu0 0
  %4928 = vmatprep.mubr.bf16.mxu0 0
  %4929 = vmatmul.mubr.bf16.gmra.mrb[0].mxu0 %v4873
  %v4930 = vpop.f32.mrb[0].mxu0
  %v4931 = vadd.f32 0.0, %v4930
  %v4932 = vpop.f32.mrb[0].mxu0
  %v4933 = vpop.f32.mrb[0].mxu0
  %v4934 = vadd.f32 0.0, %v4933
  %v4935 = vpop.f32.mrb[0].mxu0
  %4936 = vmatprep.mubr.bf16.mxu0 0
  %4937 = vmatmul.mubr.bf16.gmra.mrb[0].mxu0 %v4876
  %v4938 = vpop.f32.mrb[0].mxu0
  %v4939 = vadd.f32 0.0, %v4938
  %v4940 = vpop.f32.mrb[0].mxu0
  %v4941 = vpop.f32.mrb[0].mxu0
  %v4942 = vadd.f32 0.0, %v4941
  %v4943 = vpop.f32.mrb[0].mxu0
  %4944 = vmatprep.mubr.bf16.mxu0 0
  %4945 = vmatmul.mubr.bf16.gmra.mrb[0].mxu0 %v4879
  %v4946 = vpop.f32.mrb[0].mxu0
  %v4947 = vadd.f32 0.0, %v4946
  %v4948 = vpop.f32.mrb[0].mxu0
  %v4949 = vpop.f32.mrb[0].mxu0
  %v4950 = vadd.f32 0.0, %v4949
  %v4951 = vpop.f32.mrb[0].mxu0
  %4952 = vmatprep.mubr.bf16.mxu0 0
  %4953 = vmatmul.mubr.bf16.gmra.mrb[0].mxu0 %v4882
  %v4954 = vpop.f32.mrb[0].mxu0
  %v4955 = vadd.f32 0.0, %v4954
  %v4956 = vpop.f32.mrb[0].mxu0
  %v4957 = vpop.f32.mrb[0].mxu0
  %v4958 = vadd.f32 0.0, %v4957
  %v4959 = vpop.f32.mrb[0].mxu0
  %4960 = vdwg.mxu0
  %4961 = vrot.lane.b32.xlu0 %v3386, 104
  %v4962 = vpop.permute.xlu0 %4961
  %4963 = vrot.lane.b32.xlu0 %v3387, 104
  %v4964 = vpop.permute.xlu0 %4963
  %4965 = vrot.lane.b32.xlu0 %v3388, 104
  %v4966 = vpop.permute.xlu0 %4965
  %4967 = vrot.lane.b32.xlu0 %v3389, 104
  %v4968 = vpop.permute.xlu0 %4967
  %4969 = vrot.lane.b32.xlu0 %v3386, 72
  %v4970 = vpop.permute.xlu0 %4969
  %4971 = vrot.lane.b32.xlu0 %v3387, 72
  %v4972 = vpop.permute.xlu0 %4971
  %4973 = vrot.lane.b32.xlu0 %v3388, 72
  %v4974 = vpop.permute.xlu0 %4973
  %4975 = vrot.lane.b32.xlu0 %v3389, 72
  %v4976 = vpop.permute.xlu0 %4975
  %v4978 = vsel %vm403, %v4962, 0
  %v4981 = vsel %vm403, %v4964, 0
  %v4984 = vsel %vm403, %v4966, 0
  %v4987 = vsel %vm403, %v4968, 0
  %v4990 = vsel %vm403, %v4970, 0
  %v4993 = vsel %vm403, %v4972, 0
  %v4996 = vsel %vm403, %v4974, 0
  %v4999 = vsel %vm403, %v4976, 0
  %5001 = vmatprep.subr.bf16.mxu0 0
  %5002 = vmatpush1.bf16.xpose.msra.mxu0 %v4990
  %5003 = vmatprep.subr.bf16.mxu0 0
  %5004 = vmatpush1.bf16.xpose.msra.mxu0 %v4993
  %5005 = vmatprep.subr.bf16.mxu0 0
  %5006 = vmatpush1.bf16.xpose.msra.mxu0 %v4996
  %5007 = vmatprep.subr.bf16.mxu0 0
  %5008 = vmatpush1.bf16.xpose.msra.mxu0 %v4999
  %5009 = vmatprep.subr.bf16.mxu0 0
  %5010 = vmatpush1.bf16.xpose.msra.mxu0 0
  %5011 = vmatprep.subr.bf16.mxu0 0
  %5012 = vmatpush1.bf16.xpose.msra.mxu0 0
  %5013 = vmatprep.subr.bf16.mxu0 0
  %5014 = vmatpush1.bf16.xpose.msra.mxu0 0
  %5015 = vmatprep.subr.bf16.mxu0 0
  %5016 = vmatpush1.bf16.xpose.msra.mxu0 0
  %5017 = vmatprep.subr.bf16.mxu0 0
  %5018 = vmatpush1.bf16.xpose.msra.mxu0 0
  %5019 = vmatprep.subr.bf16.mxu0 0
  %5020 = vmatpush1.bf16.xpose.msra.mxu0 0
  %5021 = vmatprep.subr.bf16.mxu0 0
  %5022 = vmatpush1.bf16.xpose.msra.mxu0 0
  %5023 = vmatprep.subr.bf16.mxu0 0
  %5024 = vmatpush1.bf16.xpose.msra.mxu0 0
  %5025 = vmatprep.subr.bf16.mxu0 0
  %5026 = vmatpush1.bf16.xpose.msra.mxu0 0
  %5027 = vmatprep.subr.bf16.mxu0 0
  %5028 = vmatpush1.bf16.xpose.msra.mxu0 0
  %5029 = vmatprep.subr.bf16.mxu0 0
  %5030 = vmatpush1.bf16.xpose.msra.mxu0 0
  %5031 = vmatprep.subr.bf16.mxu0 0
  %5032 = vmatpush1.bf16.xpose.msra.mxu0 0
  %5033 = vmatprep.mubr.bf16.mxu0 0
  %5034 = vmatmul.mubr.bf16.gmra.mrb[0].mxu0 %v4978
  %v5035 = vpop.f32.mrb[0].mxu0
  %v5036 = vadd.f32 0.0, %v5035
  %v5037 = vpop.f32.mrb[0].mxu0
  %v5038 = vpop.f32.mrb[0].mxu0
  %v5039 = vadd.f32 0.0, %v5038
  %v5040 = vpop.f32.mrb[0].mxu0
  %5041 = vmatprep.mubr.bf16.mxu0 0
  %5042 = vmatmul.mubr.bf16.gmra.mrb[0].mxu0 %v4981
  %v5043 = vpop.f32.mrb[0].mxu0
  %v5044 = vadd.f32 0.0, %v5043
  %v5045 = vpop.f32.mrb[0].mxu0
  %v5046 = vpop.f32.mrb[0].mxu0
  %v5047 = vadd.f32 0.0, %v5046
  %v5048 = vpop.f32.mrb[0].mxu0
  %5049 = vmatprep.mubr.bf16.mxu0 0
  %5050 = vmatmul.mubr.bf16.gmra.mrb[0].mxu0 %v4984
  %v5051 = vpop.f32.mrb[0].mxu0
  %v5052 = vadd.f32 0.0, %v5051
  %v5053 = vpop.f32.mrb[0].mxu0
  %v5054 = vpop.f32.mrb[0].mxu0
  %v5055 = vadd.f32 0.0, %v5054
  %v5056 = vpop.f32.mrb[0].mxu0
  %5057 = vmatprep.mubr.bf16.mxu0 0
  %5058 = vmatmul.mubr.bf16.gmra.mrb[0].mxu0 %v4987
  %v5059 = vpop.f32.mrb[0].mxu0
  %v5060 = vadd.f32 0.0, %v5059
  %v5061 = vpop.f32.mrb[0].mxu0
  %v5062 = vpop.f32.mrb[0].mxu0
  %v5063 = vadd.f32 0.0, %v5062
  %v5064 = vpop.f32.mrb[0].mxu0
  %5065 = vdwg.mxu0
  %v5066 = vsel %vm808, %v4721, -inf
  %5067 = vmax.xlane.f32.xlu0 %v5066
  %v5068 = vpop.xlane.xlu0 %5067
  %v5069 = vsel %vm808, %v4724, -inf
  %5070 = vmax.xlane.f32.xlu0 %v5069
  %v5071 = vpop.xlane.xlu0 %5070
  %v5072 = vsel %vm808, %v4729, -inf
  %5073 = vmax.xlane.f32.xlu0 %v5072
  %v5074 = vpop.xlane.xlu0 %5073
  %v5075 = vsel %vm808, %v4732, -inf
  %5076 = vmax.xlane.f32.xlu0 %v5075
  %v5077 = vpop.xlane.xlu0 %5076
  %v5078 = vsel %vm808, %v4737, -inf
  %5079 = vmax.xlane.f32.xlu0 %v5078
  %v5080 = vpop.xlane.xlu0 %5079
  %v5081 = vsel %vm808, %v4740, -inf
  %5082 = vmax.xlane.f32.xlu0 %v5081
  %v5083 = vpop.xlane.xlu0 %5082
  %v5084 = vsel %vm808, %v4745, -inf
  %5085 = vmax.xlane.f32.xlu0 %v5084
  %v5086 = vpop.xlane.xlu0 %5085
  %v5087 = vsel %vm808, %v4748, -inf
  %5088 = vmax.xlane.f32.xlu0 %v5087
  %v5089 = vpop.xlane.xlu0 %5088
  %v5090 = vsel %vm808, %v4826, -inf
  %5091 = vmax.xlane.f32.xlu0 %v5090
  %v5092 = vpop.xlane.xlu0 %5091
  %v5093 = vsel %vm808, %v4829, -inf
  %5094 = vmax.xlane.f32.xlu0 %v5093
  %v5095 = vpop.xlane.xlu0 %5094
  %v5096 = vsel %vm808, %v4834, -inf
  %5097 = vmax.xlane.f32.xlu0 %v5096
  %v5098 = vpop.xlane.xlu0 %5097
  %v5099 = vsel %vm808, %v4837, -inf
  %5100 = vmax.xlane.f32.xlu0 %v5099
  %v5101 = vpop.xlane.xlu0 %5100
  %v5102 = vsel %vm808, %v4842, -inf
  %5103 = vmax.xlane.f32.xlu0 %v5102
  %v5104 = vpop.xlane.xlu0 %5103
  %v5105 = vsel %vm808, %v4845, -inf
  %5106 = vmax.xlane.f32.xlu0 %v5105
  %v5107 = vpop.xlane.xlu0 %5106
  %v5108 = vsel %vm808, %v4850, -inf
  %5109 = vmax.xlane.f32.xlu0 %v5108
  %v5110 = vpop.xlane.xlu0 %5109
  %v5111 = vsel %vm808, %v4853, -inf
  %5112 = vmax.xlane.f32.xlu0 %v5111
  %v5113 = vpop.xlane.xlu0 %5112
  %v5114 = vsel %vm808, %v4931, -inf
  %5115 = vmax.xlane.f32.xlu0 %v5114
  %v5116 = vpop.xlane.xlu0 %5115
  %v5117 = vsel %vm808, %v4934, -inf
  %5118 = vmax.xlane.f32.xlu0 %v5117
  %v5119 = vpop.xlane.xlu0 %5118
  %v5120 = vsel %vm808, %v4939, -inf
  %5121 = vmax.xlane.f32.xlu0 %v5120
  %v5122 = vpop.xlane.xlu0 %5121
  %v5123 = vsel %vm808, %v4942, -inf
  %5124 = vmax.xlane.f32.xlu0 %v5123
  %v5125 = vpop.xlane.xlu0 %5124
  %v5126 = vsel %vm808, %v4947, -inf
  %5127 = vmax.xlane.f32.xlu0 %v5126
  %v5128 = vpop.xlane.xlu0 %5127
  %v5129 = vsel %vm808, %v4950, -inf
  %5130 = vmax.xlane.f32.xlu0 %v5129
  %v5131 = vpop.xlane.xlu0 %5130
  %v5132 = vsel %vm808, %v4955, -inf
  %5133 = vmax.xlane.f32.xlu0 %v5132
  %v5134 = vpop.xlane.xlu0 %5133
  %v5135 = vsel %vm808, %v4958, -inf
  %5136 = vmax.xlane.f32.xlu0 %v5135
  %v5137 = vpop.xlane.xlu0 %5136
  %v5138 = vsel %vm808, %v5036, -inf
  %5139 = vmax.xlane.f32.xlu0 %v5138
  %v5140 = vpop.xlane.xlu0 %5139
  %v5141 = vsel %vm808, %v5039, -inf
  %5142 = vmax.xlane.f32.xlu0 %v5141
  %v5143 = vpop.xlane.xlu0 %5142
  %v5144 = vsel %vm808, %v5044, -inf
  %5145 = vmax.xlane.f32.xlu0 %v5144
  %v5146 = vpop.xlane.xlu0 %5145
  %v5147 = vsel %vm808, %v5047, -inf
  %5148 = vmax.xlane.f32.xlu0 %v5147
  %v5149 = vpop.xlane.xlu0 %5148
  %v5150 = vsel %vm808, %v5052, -inf
  %5151 = vmax.xlane.f32.xlu0 %v5150
  %v5152 = vpop.xlane.xlu0 %5151
  %v5153 = vsel %vm808, %v5055, -inf
  %5154 = vmax.xlane.f32.xlu0 %v5153
  %v5155 = vpop.xlane.xlu0 %5154
  %v5156 = vsel %vm808, %v5060, -inf
  %5157 = vmax.xlane.f32.xlu0 %v5156
  %v5158 = vpop.xlane.xlu0 %5157
  %v5159 = vsel %vm808, %v5063, -inf
  %5160 = vmax.xlane.f32.xlu0 %v5159
  %v5161 = vpop.xlane.xlu0 %5160
  %v5162 = vsub.f32 %v4721, %v5068
  %v5163 = vsub.f32 %v4724, %v5071
  %v5164 = vsub.f32 %v4729, %v5074
  %v5165 = vsub.f32 %v4732, %v5077
  %v5166 = vsub.f32 %v4737, %v5080
  %v5167 = vsub.f32 %v4740, %v5083
  %v5168 = vsub.f32 %v4745, %v5086
  %v5169 = vsub.f32 %v4748, %v5089
  %v5170 = vsub.f32 %v4826, %v5092
  %v5171 = vsub.f32 %v4829, %v5095
  %v5172 = vsub.f32 %v4834, %v5098
  %v5173 = vsub.f32 %v4837, %v5101
  %v5174 = vsub.f32 %v4842, %v5104
  %v5175 = vsub.f32 %v4845, %v5107
  %v5176 = vsub.f32 %v4850, %v5110
  %v5177 = vsub.f32 %v4853, %v5113
  %v5178 = vsub.f32 %v4931, %v5116
  %v5179 = vsub.f32 %v4934, %v5119
  %v5180 = vsub.f32 %v4939, %v5122
  %v5181 = vsub.f32 %v4942, %v5125
  %v5182 = vsub.f32 %v4947, %v5128
  %v5183 = vsub.f32 %v4950, %v5131
  %v5184 = vsub.f32 %v4955, %v5134
  %v5185 = vsub.f32 %v4958, %v5137
  %v5186 = vsub.f32 %v5036, %v5140
  %v5187 = vsub.f32 %v5039, %v5143
  %v5188 = vsub.f32 %v5044, %v5146
  %v5189 = vsub.f32 %v5047, %v5149
  %v5190 = vsub.f32 %v5052, %v5152
  %v5191 = vsub.f32 %v5055, %v5155
  %v5192 = vsub.f32 %v5060, %v5158
  %v5193 = vsub.f32 %v5063, %v5161
  %v5194 = vmul.f32 %v5162, 1.442695
  %v5195 = vpow.pop %v5194
  %v5196 = vmul.f32 %v5163, 1.442695
  %v5197 = vpow.pop %v5196
  %v5198 = vmul.f32 %v5164, 1.442695
  %v5199 = vpow.pop %v5198
  %v5200 = vmul.f32 %v5165, 1.442695
  %v5201 = vpow.pop %v5200
  %v5202 = vmul.f32 %v5166, 1.442695
  %v5203 = vpow.pop %v5202
  %v5204 = vmul.f32 %v5167, 1.442695
  %v5205 = vpow.pop %v5204
  %v5206 = vmul.f32 %v5168, 1.442695
  %v5207 = vpow.pop %v5206
  %v5208 = vmul.f32 %v5169, 1.442695
  %v5209 = vpow.pop %v5208
  %v5210 = vmul.f32 %v5170, 1.442695
  %v5211 = vpow.pop %v5210
  %v5212 = vmul.f32 %v5171, 1.442695
  %v5213 = vpow.pop %v5212
  %v5214 = vmul.f32 %v5172, 1.442695
  %v5215 = vpow.pop %v5214
  %v5216 = vmul.f32 %v5173, 1.442695
  %v5217 = vpow.pop %v5216
  %v5218 = vmul.f32 %v5174, 1.442695
  %v5219 = vpow.pop %v5218
  %v5220 = vmul.f32 %v5175, 1.442695
  %v5221 = vpow.pop %v5220
  %v5222 = vmul.f32 %v5176, 1.442695
  %v5223 = vpow.pop %v5222
  %v5224 = vmul.f32 %v5177, 1.442695
  %v5225 = vpow.pop %v5224
  %v5226 = vmul.f32 %v5178, 1.442695
  %v5227 = vpow.pop %v5226
  %v5228 = vmul.f32 %v5179, 1.442695
  %v5229 = vpow.pop %v5228
  %v5230 = vmul.f32 %v5180, 1.442695
  %v5231 = vpow.pop %v5230
  %v5232 = vmul.f32 %v5181, 1.442695
  %v5233 = vpow.pop %v5232
  %v5234 = vmul.f32 %v5182, 1.442695
  %v5235 = vpow.pop %v5234
  %v5236 = vmul.f32 %v5183, 1.442695
  %v5237 = vpow.pop %v5236
  %v5238 = vmul.f32 %v5184, 1.442695
  %v5239 = vpow.pop %v5238
  %v5240 = vmul.f32 %v5185, 1.442695
  %v5241 = vpow.pop %v5240
  %v5242 = vmul.f32 %v5186, 1.442695
  %v5243 = vpow.pop %v5242
  %v5244 = vmul.f32 %v5187, 1.442695
  %v5245 = vpow.pop %v5244
  %v5246 = vmul.f32 %v5188, 1.442695
  %v5247 = vpow.pop %v5246
  %v5248 = vmul.f32 %v5189, 1.442695
  %v5249 = vpow.pop %v5248
  %v5250 = vmul.f32 %v5190, 1.442695
  %v5251 = vpow.pop %v5250
  %v5252 = vmul.f32 %v5191, 1.442695
  %v5253 = vpow.pop %v5252
  %v5254 = vmul.f32 %v5192, 1.442695
  %v5255 = vpow.pop %v5254
  %v5256 = vmul.f32 %v5193, 1.442695
  %v5257 = vpow.pop %v5256
  %v5258 = vsel %vm808, %v5195, 0.0
  %5259 = vadd.xlane.f32.xlu0 %v5258
  %v5260 = vpop.xlane.xlu0 %5259
  %v5261 = vsel %vm808, %v5197, 0.0
  %5262 = vadd.xlane.f32.xlu0 %v5261
  %v5263 = vpop.xlane.xlu0 %5262
  %v5264 = vsel %vm808, %v5199, 0.0
  %5265 = vadd.xlane.f32.xlu0 %v5264
  %v5266 = vpop.xlane.xlu0 %5265
  %v5267 = vsel %vm808, %v5201, 0.0
  %5268 = vadd.xlane.f32.xlu0 %v5267
  %v5269 = vpop.xlane.xlu0 %5268
  %v5270 = vsel %vm808, %v5203, 0.0
  %5271 = vadd.xlane.f32.xlu0 %v5270
  %v5272 = vpop.xlane.xlu0 %5271
  %v5273 = vsel %vm808, %v5205, 0.0
  %5274 = vadd.xlane.f32.xlu0 %v5273
  %v5275 = vpop.xlane.xlu0 %5274
  %v5276 = vsel %vm808, %v5207, 0.0
  %5277 = vadd.xlane.f32.xlu0 %v5276
  %v5278 = vpop.xlane.xlu0 %5277
  %v5279 = vsel %vm808, %v5209, 0.0
  %5280 = vadd.xlane.f32.xlu0 %v5279
  %v5281 = vpop.xlane.xlu0 %5280
  %v5282 = vsel %vm808, %v5211, 0.0
  %5283 = vadd.xlane.f32.xlu0 %v5282
  %v5284 = vpop.xlane.xlu0 %5283
  %v5285 = vsel %vm808, %v5213, 0.0
  %5286 = vadd.xlane.f32.xlu0 %v5285
  %v5287 = vpop.xlane.xlu0 %5286
  %v5288 = vsel %vm808, %v5215, 0.0
  %5289 = vadd.xlane.f32.xlu0 %v5288
  %v5290 = vpop.xlane.xlu0 %5289
  %v5291 = vsel %vm808, %v5217, 0.0
  %5292 = vadd.xlane.f32.xlu0 %v5291
  %v5293 = vpop.xlane.xlu0 %5292
  %v5294 = vsel %vm808, %v5219, 0.0
  %5295 = vadd.xlane.f32.xlu0 %v5294
  %v5296 = vpop.xlane.xlu0 %5295
  %v5297 = vsel %vm808, %v5221, 0.0
  %5298 = vadd.xlane.f32.xlu0 %v5297
  %v5299 = vpop.xlane.xlu0 %5298
  %v5300 = vsel %vm808, %v5223, 0.0
  %5301 = vadd.xlane.f32.xlu0 %v5300
  %v5302 = vpop.xlane.xlu0 %5301
  %v5303 = vsel %vm808, %v5225, 0.0
  %5304 = vadd.xlane.f32.xlu0 %v5303
  %v5305 = vpop.xlane.xlu0 %5304
  %v5306 = vsel %vm808, %v5227, 0.0
  %5307 = vadd.xlane.f32.xlu0 %v5306
  %v5308 = vpop.xlane.xlu0 %5307
  %v5309 = vsel %vm808, %v5229, 0.0
  %5310 = vadd.xlane.f32.xlu0 %v5309
  %v5311 = vpop.xlane.xlu0 %5310
  %v5312 = vsel %vm808, %v5231, 0.0
  %5313 = vadd.xlane.f32.xlu0 %v5312
  %v5314 = vpop.xlane.xlu0 %5313
  %v5315 = vsel %vm808, %v5233, 0.0
  %5316 = vadd.xlane.f32.xlu0 %v5315
  %v5317 = vpop.xlane.xlu0 %5316
  %v5318 = vsel %vm808, %v5235, 0.0
  %5319 = vadd.xlane.f32.xlu0 %v5318
  %v5320 = vpop.xlane.xlu0 %5319
  %v5321 = vsel %vm808, %v5237, 0.0
  %5322 = vadd.xlane.f32.xlu0 %v5321
  %v5323 = vpop.xlane.xlu0 %5322
  %v5324 = vsel %vm808, %v5239, 0.0
  %5325 = vadd.xlane.f32.xlu0 %v5324
  %v5326 = vpop.xlane.xlu0 %5325
  %v5327 = vsel %vm808, %v5241, 0.0
  %5328 = vadd.xlane.f32.xlu0 %v5327
  %v5329 = vpop.xlane.xlu0 %5328
  %v5330 = vsel %vm808, %v5243, 0.0
  %5331 = vadd.xlane.f32.xlu0 %v5330
  %v5332 = vpop.xlane.xlu0 %5331
  %v5333 = vsel %vm808, %v5245, 0.0
  %5334 = vadd.xlane.f32.xlu0 %v5333
  %v5335 = vpop.xlane.xlu0 %5334
  %v5336 = vsel %vm808, %v5247, 0.0
  %5337 = vadd.xlane.f32.xlu0 %v5336
  %v5338 = vpop.xlane.xlu0 %5337
  %v5339 = vsel %vm808, %v5249, 0.0
  %5340 = vadd.xlane.f32.xlu0 %v5339
  %v5341 = vpop.xlane.xlu0 %5340
  %v5342 = vsel %vm808, %v5251, 0.0
  %5343 = vadd.xlane.f32.xlu0 %v5342
  %v5344 = vpop.xlane.xlu0 %5343
  %v5345 = vsel %vm808, %v5253, 0.0
  %5346 = vadd.xlane.f32.xlu0 %v5345
  %v5347 = vpop.xlane.xlu0 %5346
  %v5348 = vsel %vm808, %v5255, 0.0
  %5349 = vadd.xlane.f32.xlu0 %v5348
  %v5350 = vpop.xlane.xlu0 %5349
  %v5351 = vsel %vm808, %v5257, 0.0
  %5352 = vadd.xlane.f32.xlu0 %v5351
  %v5353 = vpop.xlane.xlu0 %5352
  %v5354 = vrcp.pop %v5260
  %v5355 = vrcp.pop %v5263
  %v5356 = vrcp.pop %v5266
  %v5357 = vrcp.pop %v5269
  %v5358 = vrcp.pop %v5272
  %v5359 = vrcp.pop %v5275
  %v5360 = vrcp.pop %v5278
  %v5361 = vrcp.pop %v5281
  %v5362 = vrcp.pop %v5284
  %v5363 = vrcp.pop %v5287
  %v5364 = vrcp.pop %v5290
  %v5365 = vrcp.pop %v5293
  %v5366 = vrcp.pop %v5296
  %v5367 = vrcp.pop %v5299
  %v5368 = vrcp.pop %v5302
  %v5369 = vrcp.pop %v5305
  %v5370 = vrcp.pop %v5308
  %v5371 = vrcp.pop %v5311
  %v5372 = vrcp.pop %v5314
  %v5373 = vrcp.pop %v5317
  %v5374 = vrcp.pop %v5320
  %v5375 = vrcp.pop %v5323
  %v5376 = vrcp.pop %v5326
  %v5377 = vrcp.pop %v5329
  %v5378 = vrcp.pop %v5332
  %v5379 = vrcp.pop %v5335
  %v5380 = vrcp.pop %v5338
  %v5381 = vrcp.pop %v5341
  %v5382 = vrcp.pop %v5344
  %v5383 = vrcp.pop %v5347
  %v5384 = vrcp.pop %v5350
  %v5385 = vrcp.pop %v5353
  %v5386 = vmul.f32 %v5195, %v5354
  %v5387 = vmul.f32 %v5197, %v5355
  %v5388 = vmul.f32 %v5199, %v5356
  %v5389 = vmul.f32 %v5201, %v5357
  %v5390 = vmul.f32 %v5203, %v5358
  %v5391 = vmul.f32 %v5205, %v5359
  %v5392 = vmul.f32 %v5207, %v5360
  %v5393 = vmul.f32 %v5209, %v5361
  %v5394 = vmul.f32 %v5211, %v5362
  %v5395 = vmul.f32 %v5213, %v5363
  %v5396 = vmul.f32 %v5215, %v5364
  %v5397 = vmul.f32 %v5217, %v5365
  %v5398 = vmul.f32 %v5219, %v5366
  %v5399 = vmul.f32 %v5221, %v5367
  %v5400 = vmul.f32 %v5223, %v5368
  %v5401 = vmul.f32 %v5225, %v5369
  %v5402 = vmul.f32 %v5227, %v5370
  %v5403 = vmul.f32 %v5229, %v5371
  %v5404 = vmul.f32 %v5231, %v5372
  %v5405 = vmul.f32 %v5233, %v5373
  %v5406 = vmul.f32 %v5235, %v5374
  %v5407 = vmul.f32 %v5237, %v5375
  %v5408 = vmul.f32 %v5239, %v5376
  %v5409 = vmul.f32 %v5241, %v5377
  %v5410 = vmul.f32 %v5243, %v5378
  %v5411 = vmul.f32 %v5245, %v5379
  %v5412 = vmul.f32 %v5247, %v5380
  %v5413 = vmul.f32 %v5249, %v5381
  %v5414 = vmul.f32 %v5251, %v5382
  %v5415 = vmul.f32 %v5253, %v5383
  %v5416 = vmul.f32 %v5255, %v5384
  %v5417 = vmul.f32 %v5257, %v5385
  %v5418 = vpack.c.bf16 %v5387, %v5386
  %v5419 = vpack.c.bf16 %v5389, %v5388
  %v5420 = vpack.c.bf16 %v5391, %v5390
  %v5421 = vpack.c.bf16 %v5393, %v5392
  %v5422 = vpack.c.bf16 %v5395, %v5394
  %v5423 = vpack.c.bf16 %v5397, %v5396
  %v5424 = vpack.c.bf16 %v5399, %v5398
  %v5425 = vpack.c.bf16 %v5401, %v5400
  %v5426 = vpack.c.bf16 %v5403, %v5402
  %v5427 = vpack.c.bf16 %v5405, %v5404
  %v5428 = vpack.c.bf16 %v5407, %v5406
  %v5429 = vpack.c.bf16 %v5409, %v5408
  %v5430 = vpack.c.bf16 %v5411, %v5410
  %v5431 = vpack.c.bf16 %v5413, %v5412
  %v5432 = vpack.c.bf16 %v5415, %v5414
  %v5433 = vpack.c.bf16 %v5417, %v5416
  %5434 = vrot.lane.b32.xlu0 %v3386, 64
  %v5435 = vpop.permute.xlu0 %5434
  %5436 = vrot.lane.b32.xlu0 %v3387, 64
  %v5437 = vpop.permute.xlu0 %5436
  %5438 = vrot.lane.b32.xlu0 %v3388, 64
  %v5439 = vpop.permute.xlu0 %5438
  %5440 = vrot.lane.b32.xlu0 %v3389, 64
  %v5441 = vpop.permute.xlu0 %5440
  %v5447 = vsel %vm808, %v5418, 0
  %v5450 = vsel %vm808, %v5419, 0
  %v5453 = vsel %vm808, %v5420, 0
  %v5456 = vsel %vm808, %v5421, 0
  %5458 = vmatprep.subr.bf16.mxu0 0
  %5459 = vmatpush1.bf16.msra.mxu0 %v5435
  %5460 = vmatprep.subr.bf16.mxu0 0
  %5461 = vmatpush1.bf16.msra.mxu0 %v5437
  %5462 = vmatprep.subr.bf16.mxu0 0
  %5463 = vmatpush1.bf16.msra.mxu0 %v5439
  %5464 = vmatprep.subr.bf16.mxu0 0
  %5465 = vmatpush1.bf16.msra.mxu0 %v5441
  %5466 = vmatprep.subr.bf16.mxu0 0
  %5467 = vmatpush1.bf16.msra.mxu0 0
  %5468 = vmatprep.subr.bf16.mxu0 0
  %5469 = vmatpush1.bf16.msra.mxu0 0
  %5470 = vmatprep.subr.bf16.mxu0 0
  %5471 = vmatpush1.bf16.msra.mxu0 0
  %5472 = vmatprep.subr.bf16.mxu0 0
  %5473 = vmatpush1.bf16.msra.mxu0 0
  %5474 = vmatprep.subr.bf16.mxu0 0
  %5475 = vmatpush1.bf16.msra.mxu0 0
  %5476 = vmatprep.subr.bf16.mxu0 0
  %5477 = vmatpush1.bf16.msra.mxu0 0
  %5478 = vmatprep.subr.bf16.mxu0 0
  %5479 = vmatpush1.bf16.msra.mxu0 0
  %5480 = vmatprep.subr.bf16.mxu0 0
  %5481 = vmatpush1.bf16.msra.mxu0 0
  %5482 = vmatprep.subr.bf16.mxu0 0
  %5483 = vmatpush1.bf16.msra.mxu0 0
  %5484 = vmatprep.subr.bf16.mxu0 0
  %5485 = vmatpush1.bf16.msra.mxu0 0
  %5486 = vmatprep.subr.bf16.mxu0 0
  %5487 = vmatpush1.bf16.msra.mxu0 0
  %5488 = vmatprep.subr.bf16.mxu0 0
  %5489 = vmatpush1.bf16.msra.mxu0 0
  %5490 = vmatprep.mubr.bf16.mxu0 0
  %5491 = vmatmul.mubr.bf16.gmra.mrb[0].mxu0 %v5447
  %v5492 = vpop.f32.mrb[0].mxu0
  %v5493 = vadd.f32 0.0, %v5492
  %v5494 = vpop.f32.mrb[0].mxu0
  %v5495 = vpop.f32.mrb[0].mxu0
  %v5496 = vadd.f32 0.0, %v5495
  %v5497 = vpop.f32.mrb[0].mxu0
  %5498 = vmatprep.mubr.bf16.mxu0 0
  %5499 = vmatmul.mubr.bf16.gmra.mrb[0].mxu0 %v5450
  %v5500 = vpop.f32.mrb[0].mxu0
  %v5501 = vadd.f32 0.0, %v5500
  %v5502 = vpop.f32.mrb[0].mxu0
  %v5503 = vpop.f32.mrb[0].mxu0
  %v5504 = vadd.f32 0.0, %v5503
  %v5505 = vpop.f32.mrb[0].mxu0
  %5506 = vmatprep.mubr.bf16.mxu0 0
  %5507 = vmatmul.mubr.bf16.gmra.mrb[0].mxu0 %v5453
  %v5508 = vpop.f32.mrb[0].mxu0
  %v5509 = vadd.f32 0.0, %v5508
  %v5510 = vpop.f32.mrb[0].mxu0
  %v5511 = vpop.f32.mrb[0].mxu0
  %v5512 = vadd.f32 0.0, %v5511
  %v5513 = vpop.f32.mrb[0].mxu0
  %5514 = vmatprep.mubr.bf16.mxu0 0
  %5515 = vmatmul.mubr.bf16.gmra.mrb[0].mxu0 %v5456
  %v5516 = vpop.f32.mrb[0].mxu0
  %v5517 = vadd.f32 0.0, %v5516
  %v5518 = vpop.f32.mrb[0].mxu0
  %v5519 = vpop.f32.mrb[0].mxu0
  %v5520 = vadd.f32 0.0, %v5519
  %v5521 = vpop.f32.mrb[0].mxu0
  %5522 = vdwg.mxu0
  %5523 = vrot.lane.b32.xlu0 %v3386, 56
  %v5524 = vpop.permute.xlu0 %5523
  %5525 = vrot.lane.b32.xlu0 %v3387, 56
  %v5526 = vpop.permute.xlu0 %5525
  %5527 = vrot.lane.b32.xlu0 %v3388, 56
  %v5528 = vpop.permute.xlu0 %5527
  %5529 = vrot.lane.b32.xlu0 %v3389, 56
  %v5530 = vpop.permute.xlu0 %5529
  %v5536 = vsel %vm808, %v5422, 0
  %v5539 = vsel %vm808, %v5423, 0
  %v5542 = vsel %vm808, %v5424, 0
  %v5545 = vsel %vm808, %v5425, 0
  %5547 = vmatprep.subr.bf16.mxu0 0
  %5548 = vmatpush1.bf16.msra.mxu0 %v5524
  %5549 = vmatprep.subr.bf16.mxu0 0
  %5550 = vmatpush1.bf16.msra.mxu0 %v5526
  %5551 = vmatprep.subr.bf16.mxu0 0
  %5552 = vmatpush1.bf16.msra.mxu0 %v5528
  %5553 = vmatprep.subr.bf16.mxu0 0
  %5554 = vmatpush1.bf16.msra.mxu0 %v5530
  %5555 = vmatprep.subr.bf16.mxu0 0
  %5556 = vmatpush1.bf16.msra.mxu0 0
  %5557 = vmatprep.subr.bf16.mxu0 0
  %5558 = vmatpush1.bf16.msra.mxu0 0
  %5559 = vmatprep.subr.bf16.mxu0 0
  %5560 = vmatpush1.bf16.msra.mxu0 0
  %5561 = vmatprep.subr.bf16.mxu0 0
  %5562 = vmatpush1.bf16.msra.mxu0 0
  %5563 = vmatprep.subr.bf16.mxu0 0
  %5564 = vmatpush1.bf16.msra.mxu0 0
  %5565 = vmatprep.subr.bf16.mxu0 0
  %5566 = vmatpush1.bf16.msra.mxu0 0
  %5567 = vmatprep.subr.bf16.mxu0 0
  %5568 = vmatpush1.bf16.msra.mxu0 0
  %5569 = vmatprep.subr.bf16.mxu0 0
  %5570 = vmatpush1.bf16.msra.mxu0 0
  %5571 = vmatprep.subr.bf16.mxu0 0
  %5572 = vmatpush1.bf16.msra.mxu0 0
  %5573 = vmatprep.subr.bf16.mxu0 0
  %5574 = vmatpush1.bf16.msra.mxu0 0
  %5575 = vmatprep.subr.bf16.mxu0 0
  %5576 = vmatpush1.bf16.msra.mxu0 0
  %5577 = vmatprep.subr.bf16.mxu0 0
  %5578 = vmatpush1.bf16.msra.mxu0 0
  %5579 = vmatprep.mubr.bf16.mxu0 0
  %5580 = vmatmul.mubr.bf16.gmra.mrb[0].mxu0 %v5536
  %v5581 = vpop.f32.mrb[0].mxu0
  %v5582 = vadd.f32 0.0, %v5581
  %v5583 = vpop.f32.mrb[0].mxu0
  %v5584 = vpop.f32.mrb[0].mxu0
  %v5585 = vadd.f32 0.0, %v5584
  %v5586 = vpop.f32.mrb[0].mxu0
  %5587 = vmatprep.mubr.bf16.mxu0 0
  %5588 = vmatmul.mubr.bf16.gmra.mrb[0].mxu0 %v5539
  %v5589 = vpop.f32.mrb[0].mxu0
  %v5590 = vadd.f32 0.0, %v5589
  %v5591 = vpop.f32.mrb[0].mxu0
  %v5592 = vpop.f32.mrb[0].mxu0
  %v5593 = vadd.f32 0.0, %v5592
  %v5594 = vpop.f32.mrb[0].mxu0
  %5595 = vmatprep.mubr.bf16.mxu0 0
  %5596 = vmatmul.mubr.bf16.gmra.mrb[0].mxu0 %v5542
  %v5597 = vpop.f32.mrb[0].mxu0
  %v5598 = vadd.f32 0.0, %v5597
  %v5599 = vpop.f32.mrb[0].mxu0
  %v5600 = vpop.f32.mrb[0].mxu0
  %v5601 = vadd.f32 0.0, %v5600
  %v5602 = vpop.f32.mrb[0].mxu0
  %5603 = vmatprep.mubr.bf16.mxu0 0
  %5604 = vmatmul.mubr.bf16.gmra.mrb[0].mxu0 %v5545
  %v5605 = vpop.f32.mrb[0].mxu0
  %v5606 = vadd.f32 0.0, %v5605
  %v5607 = vpop.f32.mrb[0].mxu0
  %v5608 = vpop.f32.mrb[0].mxu0
  %v5609 = vadd.f32 0.0, %v5608
  %v5610 = vpop.f32.mrb[0].mxu0
  %5611 = vdwg.mxu0
  %5612 = vrot.lane.b32.xlu0 %v3386, 48
  %v5613 = vpop.permute.xlu0 %5612
  %5614 = vrot.lane.b32.xlu0 %v3387, 48
  %v5615 = vpop.permute.xlu0 %5614
  %5616 = vrot.lane.b32.xlu0 %v3388, 48
  %v5617 = vpop.permute.xlu0 %5616
  %5618 = vrot.lane.b32.xlu0 %v3389, 48
  %v5619 = vpop.permute.xlu0 %5618
  %v5625 = vsel %vm808, %v5426, 0
  %v5628 = vsel %vm808, %v5427, 0
  %v5631 = vsel %vm808, %v5428, 0
  %v5634 = vsel %vm808, %v5429, 0
  %5636 = vmatprep.subr.bf16.mxu0 0
  %5637 = vmatpush1.bf16.msra.mxu0 %v5613
  %5638 = vmatprep.subr.bf16.mxu0 0
  %5639 = vmatpush1.bf16.msra.mxu0 %v5615
  %5640 = vmatprep.subr.bf16.mxu0 0
  %5641 = vmatpush1.bf16.msra.mxu0 %v5617
  %5642 = vmatprep.subr.bf16.mxu0 0
  %5643 = vmatpush1.bf16.msra.mxu0 %v5619
  %5644 = vmatprep.subr.bf16.mxu0 0
  %5645 = vmatpush1.bf16.msra.mxu0 0
  %5646 = vmatprep.subr.bf16.mxu0 0
  %5647 = vmatpush1.bf16.msra.mxu0 0
  %5648 = vmatprep.subr.bf16.mxu0 0
  %5649 = vmatpush1.bf16.msra.mxu0 0
  %5650 = vmatprep.subr.bf16.mxu0 0
  %5651 = vmatpush1.bf16.msra.mxu0 0
  %5652 = vmatprep.subr.bf16.mxu0 0
  %5653 = vmatpush1.bf16.msra.mxu0 0
  %5654 = vmatprep.subr.bf16.mxu0 0
  %5655 = vmatpush1.bf16.msra.mxu0 0
  %5656 = vmatprep.subr.bf16.mxu0 0
  %5657 = vmatpush1.bf16.msra.mxu0 0
  %5658 = vmatprep.subr.bf16.mxu0 0
  %5659 = vmatpush1.bf16.msra.mxu0 0
  %5660 = vmatprep.subr.bf16.mxu0 0
  %5661 = vmatpush1.bf16.msra.mxu0 0
  %5662 = vmatprep.subr.bf16.mxu0 0
  %5663 = vmatpush1.bf16.msra.mxu0 0
  %5664 = vmatprep.subr.bf16.mxu0 0
  %5665 = vmatpush1.bf16.msra.mxu0 0
  %5666 = vmatprep.subr.bf16.mxu0 0
  %5667 = vmatpush1.bf16.msra.mxu0 0
  %5668 = vmatprep.mubr.bf16.mxu0 0
  %5669 = vmatmul.mubr.bf16.gmra.mrb[0].mxu0 %v5625
  %v5670 = vpop.f32.mrb[0].mxu0
  %v5671 = vadd.f32 0.0, %v5670
  %v5672 = vpop.f32.mrb[0].mxu0
  %v5673 = vpop.f32.mrb[0].mxu0
  %v5674 = vadd.f32 0.0, %v5673
  %v5675 = vpop.f32.mrb[0].mxu0
  %5676 = vmatprep.mubr.bf16.mxu0 0
  %5677 = vmatmul.mubr.bf16.gmra.mrb[0].mxu0 %v5628
  %v5678 = vpop.f32.mrb[0].mxu0
  %v5679 = vadd.f32 0.0, %v5678
  %v5680 = vpop.f32.mrb[0].mxu0
  %v5681 = vpop.f32.mrb[0].mxu0
  %v5682 = vadd.f32 0.0, %v5681
  %v5683 = vpop.f32.mrb[0].mxu0
  %5684 = vmatprep.mubr.bf16.mxu0 0
  %5685 = vmatmul.mubr.bf16.gmra.mrb[0].mxu0 %v5631
  %v5686 = vpop.f32.mrb[0].mxu0
  %v5687 = vadd.f32 0.0, %v5686
  %v5688 = vpop.f32.mrb[0].mxu0
  %v5689 = vpop.f32.mrb[0].mxu0
  %v5690 = vadd.f32 0.0, %v5689
  %v5691 = vpop.f32.mrb[0].mxu0
  %5692 = vmatprep.mubr.bf16.mxu0 0
  %5693 = vmatmul.mubr.bf16.gmra.mrb[0].mxu0 %v5634
  %v5694 = vpop.f32.mrb[0].mxu0
  %v5695 = vadd.f32 0.0, %v5694
  %v5696 = vpop.f32.mrb[0].mxu0
  %v5697 = vpop.f32.mrb[0].mxu0
  %v5698 = vadd.f32 0.0, %v5697
  %v5699 = vpop.f32.mrb[0].mxu0
  %5700 = vdwg.mxu0
  %5701 = vrot.lane.b32.xlu0 %v3386, 40
  %v5702 = vpop.permute.xlu0 %5701
  %5703 = vrot.lane.b32.xlu0 %v3387, 40
  %v5704 = vpop.permute.xlu0 %5703
  %5705 = vrot.lane.b32.xlu0 %v3388, 40
  %v5706 = vpop.permute.xlu0 %5705
  %5707 = vrot.lane.b32.xlu0 %v3389, 40
  %v5708 = vpop.permute.xlu0 %5707
  %v5714 = vsel %vm808, %v5430, 0
  %v5717 = vsel %vm808, %v5431, 0
  %v5720 = vsel %vm808, %v5432, 0
  %v5723 = vsel %vm808, %v5433, 0
  %5725 = vmatprep.subr.bf16.mxu0 0
  %5726 = vmatpush1.bf16.msra.mxu0 %v5702
  %5727 = vmatprep.subr.bf16.mxu0 0
  %5728 = vmatpush1.bf16.msra.mxu0 %v5704
  %5729 = vmatprep.subr.bf16.mxu0 0
  %5730 = vmatpush1.bf16.msra.mxu0 %v5706
  %5731 = vmatprep.subr.bf16.mxu0 0
  %5732 = vmatpush1.bf16.msra.mxu0 %v5708
  %5733 = vmatprep.subr.bf16.mxu0 0
  %5734 = vmatpush1.bf16.msra.mxu0 0
  %5735 = vmatprep.subr.bf16.mxu0 0
  %5736 = vmatpush1.bf16.msra.mxu0 0
  %5737 = vmatprep.subr.bf16.mxu0 0
  %5738 = vmatpush1.bf16.msra.mxu0 0
  %5739 = vmatprep.subr.bf16.mxu0 0
  %5740 = vmatpush1.bf16.msra.mxu0 0
  %5741 = vmatprep.subr.bf16.mxu0 0
  %5742 = vmatpush1.bf16.msra.mxu0 0
  %5743 = vmatprep.subr.bf16.mxu0 0
  %5744 = vmatpush1.bf16.msra.mxu0 0
  %5745 = vmatprep.subr.bf16.mxu0 0
  %5746 = vmatpush1.bf16.msra.mxu0 0
  %5747 = vmatprep.subr.bf16.mxu0 0
  %5748 = vmatpush1.bf16.msra.mxu0 0
  %5749 = vmatprep.subr.bf16.mxu0 0
  %5750 = vmatpush1.bf16.msra.mxu0 0
  %5751 = vmatprep.subr.bf16.mxu0 0
  %5752 = vmatpush1.bf16.msra.mxu0 0
  %5753 = vmatprep.subr.bf16.mxu0 0
  %5754 = vmatpush1.bf16.msra.mxu0 0
  %5755 = vmatprep.subr.bf16.mxu0 0
  %5756 = vmatpush1.bf16.msra.mxu0 0
  %5757 = vmatprep.mubr.bf16.mxu0 0
  %5758 = vmatmul.mubr.bf16.gmra.mrb[0].mxu0 %v5714
  %v5759 = vpop.f32.mrb[0].mxu0
  %v5760 = vadd.f32 0.0, %v5759
  %v5761 = vpop.f32.mrb[0].mxu0
  %v5762 = vpop.f32.mrb[0].mxu0
  %v5763 = vadd.f32 0.0, %v5762
  %v5764 = vpop.f32.mrb[0].mxu0
  %5765 = vmatprep.mubr.bf16.mxu0 0
  %5766 = vmatmul.mubr.bf16.gmra.mrb[0].mxu0 %v5717
  %v5767 = vpop.f32.mrb[0].mxu0
  %v5768 = vadd.f32 0.0, %v5767
  %v5769 = vpop.f32.mrb[0].mxu0
  %v5770 = vpop.f32.mrb[0].mxu0
  %v5771 = vadd.f32 0.0, %v5770
  %v5772 = vpop.f32.mrb[0].mxu0
  %5773 = vmatprep.mubr.bf16.mxu0 0
  %5774 = vmatmul.mubr.bf16.gmra.mrb[0].mxu0 %v5720
  %v5775 = vpop.f32.mrb[0].mxu0
  %v5776 = vadd.f32 0.0, %v5775
  %v5777 = vpop.f32.mrb[0].mxu0
  %v5778 = vpop.f32.mrb[0].mxu0
  %v5779 = vadd.f32 0.0, %v5778
  %v5780 = vpop.f32.mrb[0].mxu0
  %5781 = vmatprep.mubr.bf16.mxu0 0
  %5782 = vmatmul.mubr.bf16.gmra.mrb[0].mxu0 %v5723
  %v5783 = vpop.f32.mrb[0].mxu0
  %v5784 = vadd.f32 0.0, %v5783
  %v5785 = vpop.f32.mrb[0].mxu0
  %v5786 = vpop.f32.mrb[0].mxu0
  %v5787 = vadd.f32 0.0, %v5786
  %v5788 = vpop.f32.mrb[0].mxu0
  %5789 = vdwg.mxu0
  %5798 = vrot.lane.b32.xlu0 %v5582, 8
  %v5799 = vpop.permute.xlu0 %5798
  %5800 = vrot.lane.b32.xlu0 %v5585, 8
  %v5801 = vpop.permute.xlu0 %5800
  %5802 = vrot.lane.b32.xlu0 %v5590, 8
  %v5803 = vpop.permute.xlu0 %5802
  %5804 = vrot.lane.b32.xlu0 %v5593, 8
  %v5805 = vpop.permute.xlu0 %5804
  %5806 = vrot.lane.b32.xlu0 %v5598, 8
  %v5807 = vpop.permute.xlu0 %5806
  %5808 = vrot.lane.b32.xlu0 %v5601, 8
  %v5809 = vpop.permute.xlu0 %5808
  %5810 = vrot.lane.b32.xlu0 %v5606, 8
  %v5811 = vpop.permute.xlu0 %5810
  %5812 = vrot.lane.b32.xlu0 %v5609, 8
  %v5813 = vpop.permute.xlu0 %5812
  %5830 = vrot.lane.b32.xlu0 %v5671, 16
  %v5831 = vpop.permute.xlu0 %5830
  %5832 = vrot.lane.b32.xlu0 %v5674, 16
  %v5833 = vpop.permute.xlu0 %5832
  %5834 = vrot.lane.b32.xlu0 %v5679, 16
  %v5835 = vpop.permute.xlu0 %5834
  %5836 = vrot.lane.b32.xlu0 %v5682, 16
  %v5837 = vpop.permute.xlu0 %5836
  %5838 = vrot.lane.b32.xlu0 %v5687, 16
  %v5839 = vpop.permute.xlu0 %5838
  %5840 = vrot.lane.b32.xlu0 %v5690, 16
  %v5841 = vpop.permute.xlu0 %5840
  %5842 = vrot.lane.b32.xlu0 %v5695, 16
  %v5843 = vpop.permute.xlu0 %5842
  %5844 = vrot.lane.b32.xlu0 %v5698, 16
  %v5845 = vpop.permute.xlu0 %5844
  %5862 = vrot.lane.b32.xlu0 %v5760, 24
  %v5863 = vpop.permute.xlu0 %5862
  %5864 = vrot.lane.b32.xlu0 %v5763, 24
  %v5865 = vpop.permute.xlu0 %5864
  %5866 = vrot.lane.b32.xlu0 %v5768, 24
  %v5867 = vpop.permute.xlu0 %5866
  %5868 = vrot.lane.b32.xlu0 %v5771, 24
  %v5869 = vpop.permute.xlu0 %5868
  %5870 = vrot.lane.b32.xlu0 %v5776, 24
  %v5871 = vpop.permute.xlu0 %5870
  %5872 = vrot.lane.b32.xlu0 %v5779, 24
  %v5873 = vpop.permute.xlu0 %5872
  %5874 = vrot.lane.b32.xlu0 %v5784, 24
  %v5875 = vpop.permute.xlu0 %5874
  %5876 = vrot.lane.b32.xlu0 %v5787, 24
  %v5877 = vpop.permute.xlu0 %5876
  %v5886 = vsel %vm403, %v5493, %v5799
  %v5887 = vsel %vm403, %v5496, %v5801
  %v5888 = vsel %vm403, %v5501, %v5803
  %v5889 = vsel %vm403, %v5504, %v5805
  %v5890 = vsel %vm403, %v5509, %v5807
  %v5891 = vsel %vm403, %v5512, %v5809
  %v5892 = vsel %vm403, %v5517, %v5811
  %v5893 = vsel %vm403, %v5520, %v5813
  %v5894 = vsel %vm1637, %v5886, %v5831
  %v5895 = vsel %vm1637, %v5887, %v5833
  %v5896 = vsel %vm1637, %v5888, %v5835
  %v5897 = vsel %vm1637, %v5889, %v5837
  %v5898 = vsel %vm1637, %v5890, %v5839
  %v5899 = vsel %vm1637, %v5891, %v5841
  %v5900 = vsel %vm1637, %v5892, %v5843
  %v5901 = vsel %vm1637, %v5893, %v5845
  %v5902 = vsel %vm1646, %v5894, %v5863
  %v5903 = vsel %vm1646, %v5895, %v5865
  %v5904 = vsel %vm1646, %v5896, %v5867
  %v5905 = vsel %vm1646, %v5897, %v5869
  %v5906 = vsel %vm1646, %v5898, %v5871
  %v5907 = vsel %vm1646, %v5899, %v5873
  %v5908 = vsel %vm1646, %v5900, %v5875
  %v5909 = vsel %vm1646, %v5901, %v5877
  %v5910 = vpack.c.bf16 %v4643, %v4642
  %v5911 = vpack.c.bf16 %v4645, %v4644
  %v5912 = vpack.c.bf16 %v4647, %v4646
  %v5913 = vpack.c.bf16 %v4649, %v4648
  %v5914 = vpack.c.bf16 %v5903, %v5902
  %v5915 = vpack.c.bf16 %v5905, %v5904
  %v5916 = vpack.c.bf16 %v5907, %v5906
  %v5917 = vpack.c.bf16 %v5909, %v5908
  %s5918 = scalar_lea.vmem %s5, 16
  %v5919 = vld [vmem:[%s5918] sm:$0xf]
  %v5920 = vld [vmem:[%s5918 + $0x4] sm:$0xf]
  %v5921 = vld [vmem:[%s5918 + $0x8] sm:$0xf]
  %v5922 = vld [vmem:[%s5918 + $0xc] sm:$0xf]
  %s5923 = scalar_lea.vmem %s6, 1
  %v5924 = vld [vmem:[%s5923] sm:$0x1]
  %v5926 = vlaneseq
  %v5927 = vshrl.u32 %v5926, 7
  %v5928 = vsub.s32 0, %v5927
  %v5929 = vrot.slane %v5924, %v5928
  %v5935 = vunpack.c.l.b16 %v5919
  %v5936 = vunpack.c.l.b16 %v5920
  %v5937 = vunpack.c.l.b16 %v5921
  %v5938 = vunpack.c.l.b16 %v5922
  %v5939 = vpack.c.b16 %v5936, %v5935
  %v5940 = vpack.c.b16 %v5938, %v5937
  %v5944 = vsel %vm93, %v5910, 0
  %v5947 = vsel %vm93, %v5911, 0
  %v5950 = vsel %vm93, %v5912, 0
  %v5953 = vsel %vm93, %v5913, 0
  %v5956 = vsel %vm93, %v5914, 0
  %v5959 = vsel %vm93, %v5915, 0
  %v5962 = vsel %vm93, %v5916, 0
  %v5965 = vsel %vm93, %v5917, 0
  %5967 = vmatprep.subr.bf16.mxu0 0
  %5968 = vmatpush1.bf16.msra.mxu0 %v5939
  %5969 = vmatprep.subr.bf16.mxu0 0
  %5970 = vmatpush1.bf16.msra.mxu0 %v5940
  %5971 = vmatprep.subr.bf16.mxu0 0
  %5972 = vmatpush1.bf16.msra.mxu0 0
  %5973 = vmatprep.subr.bf16.mxu0 0
  %5974 = vmatpush1.bf16.msra.mxu0 0
  %5975 = vmatprep.subr.bf16.mxu0 0
  %5976 = vmatpush1.bf16.msra.mxu0 0
  %5977 = vmatprep.subr.bf16.mxu0 0
  %5978 = vmatpush1.bf16.msra.mxu0 0
  %5979 = vmatprep.subr.bf16.mxu0 0
  %5980 = vmatpush1.bf16.msra.mxu0 0
  %5981 = vmatprep.subr.bf16.mxu0 0
  %5982 = vmatpush1.bf16.msra.mxu0 0
  %5983 = vmatprep.subr.bf16.mxu0 0
  %5984 = vmatpush1.bf16.msra.mxu0 0
  %5985 = vmatprep.subr.bf16.mxu0 0
  %5986 = vmatpush1.bf16.msra.mxu0 0
  %5987 = vmatprep.subr.bf16.mxu0 0
  %5988 = vmatpush1.bf16.msra.mxu0 0
  %5989 = vmatprep.subr.bf16.mxu0 0
  %5990 = vmatpush1.bf16.msra.mxu0 0
  %5991 = vmatprep.subr.bf16.mxu0 0
  %5992 = vmatpush1.bf16.msra.mxu0 0
  %5993 = vmatprep.subr.bf16.mxu0 0
  %5994 = vmatpush1.bf16.msra.mxu0 0
  %5995 = vmatprep.subr.bf16.mxu0 0
  %5996 = vmatpush1.bf16.msra.mxu0 0
  %5997 = vmatprep.subr.bf16.mxu0 0
  %5998 = vmatpush1.bf16.msra.mxu0 0
  %5999 = vmatprep.mubr.bf16.mxu0 0
  %6000 = vmatmul.mubr.bf16.gmra.mrb[0].mxu0 %v5944
  %v6001 = vpop.f32.mrb[0].mxu0
  %v6002 = vadd.f32 %v5929, %v6001
  %v6003 = vpop.f32.mrb[0].mxu0
  %v6004 = vpop.f32.mrb[0].mxu0
  %v6005 = vadd.f32 %v5929, %v6004
  %v6006 = vpop.f32.mrb[0].mxu0
  %6007 = vmatprep.mubr.bf16.mxu0 0
  %6008 = vmatmul.mubr.bf16.gmra.mrb[0].mxu0 %v5947
  %v6009 = vpop.f32.mrb[0].mxu0
  %v6010 = vadd.f32 %v5929, %v6009
  %v6011 = vpop.f32.mrb[0].mxu0
  %v6012 = vpop.f32.mrb[0].mxu0
  %v6013 = vadd.f32 %v5929, %v6012
  %v6014 = vpop.f32.mrb[0].mxu0
  %6015 = vmatprep.mubr.bf16.mxu0 0
  %6016 = vmatmul.mubr.bf16.gmra.mrb[0].mxu0 %v5950
  %v6017 = vpop.f32.mrb[0].mxu0
  %v6018 = vadd.f32 %v5929, %v6017
  %v6019 = vpop.f32.mrb[0].mxu0
  %v6020 = vpop.f32.mrb[0].mxu0
  %v6021 = vadd.f32 %v5929, %v6020
  %v6022 = vpop.f32.mrb[0].mxu0
  %6023 = vmatprep.mubr.bf16.mxu0 0
  %6024 = vmatmul.mubr.bf16.gmra.mrb[0].mxu0 %v5953
  %v6025 = vpop.f32.mrb[0].mxu0
  %v6026 = vadd.f32 %v5929, %v6025
  %v6027 = vpop.f32.mrb[0].mxu0
  %v6028 = vpop.f32.mrb[0].mxu0
  %v6029 = vadd.f32 %v5929, %v6028
  %v6030 = vpop.f32.mrb[0].mxu0
  %6031 = vmatprep.mubr.bf16.mxu0 0
  %6032 = vmatmul.mubr.bf16.gmra.mrb[0].mxu0 %v5956
  %v6033 = vpop.f32.mrb[0].mxu0
  %v6034 = vadd.f32 %v5929, %v6033
  %v6035 = vpop.f32.mrb[0].mxu0
  %v6036 = vpop.f32.mrb[0].mxu0
  %v6037 = vadd.f32 %v5929, %v6036
  %v6038 = vpop.f32.mrb[0].mxu0
  %6039 = vmatprep.mubr.bf16.mxu0 0
  %6040 = vmatmul.mubr.bf16.gmra.mrb[0].mxu0 %v5959
  %v6041 = vpop.f32.mrb[0].mxu0
  %v6042 = vadd.f32 %v5929, %v6041
  %v6043 = vpop.f32.mrb[0].mxu0
  %v6044 = vpop.f32.mrb[0].mxu0
  %v6045 = vadd.f32 %v5929, %v6044
  %v6046 = vpop.f32.mrb[0].mxu0
  %6047 = vmatprep.mubr.bf16.mxu0 0
  %6048 = vmatmul.mubr.bf16.gmra.mrb[0].mxu0 %v5962
  %v6049 = vpop.f32.mrb[0].mxu0
  %v6050 = vadd.f32 %v5929, %v6049
  %v6051 = vpop.f32.mrb[0].mxu0
  %v6052 = vpop.f32.mrb[0].mxu0
  %v6053 = vadd.f32 %v5929, %v6052
  %v6054 = vpop.f32.mrb[0].mxu0
  %6055 = vmatprep.mubr.bf16.mxu0 0
  %6056 = vmatmul.mubr.bf16.gmra.mrb[0].mxu0 %v5965
  %v6057 = vpop.f32.mrb[0].mxu0
  %v6058 = vadd.f32 %v5929, %v6057
  %v6059 = vpop.f32.mrb[0].mxu0
  %v6060 = vpop.f32.mrb[0].mxu0
  %v6061 = vadd.f32 %v5929, %v6060
  %v6062 = vpop.f32.mrb[0].mxu0
  %6063 = vdwg.mxu0
  %v6064 = vadd.f32 %v6002, %v3166
  %v6065 = vadd.f32 %v6005, %v3169
  %v6066 = vadd.f32 %v6010, %v3174
  %v6067 = vadd.f32 %v6013, %v3177
  %v6068 = vadd.f32 %v6018, %v3182
  %v6069 = vadd.f32 %v6021, %v3185
  %v6070 = vadd.f32 %v6026, %v3190
  %v6071 = vadd.f32 %v6029, %v3193
  %v6072 = vadd.f32 %v6034, %v3198
  %v6073 = vadd.f32 %v6037, %v3201
  %v6074 = vadd.f32 %v6042, %v3206
  %v6075 = vadd.f32 %v6045, %v3209
  %v6076 = vadd.f32 %v6050, %v3214
  %v6077 = vadd.f32 %v6053, %v3217
  %v6078 = vadd.f32 %v6058, %v3222
  %v6079 = vadd.f32 %v6061, %v3225
  %v6080 = vpack.c.bf16 %v6065, %v6064
  %v6081 = vpack.c.bf16 %v6067, %v6066
  %v6082 = vpack.c.bf16 %v6069, %v6068
  %v6083 = vpack.c.bf16 %v6071, %v6070
  %v6084 = vpack.c.bf16 %v6073, %v6072
  %v6085 = vpack.c.bf16 %v6075, %v6074
  %v6086 = vpack.c.bf16 %v6077, %v6076
  %v6087 = vpack.c.bf16 %v6079, %v6078
  %s6088 = scalar_lea.vmem %s7, 16
  %v6089 = vld [vmem:[%s6088] sm:$0xf]
  %v6090 = vld [vmem:[%s6088 + $0x4] sm:$0xf]
  %v6091 = vld [vmem:[%s6088 + $0x8] sm:$0xf]
  %v6092 = vld [vmem:[%s6088 + $0xc] sm:$0xf]
  %v6097 = vunpack.c.l.b16 %v6089
  %v6098 = vunpack.c.l.b16 %v6090
  %v6099 = vunpack.c.l.b16 %v6091
  %v6100 = vunpack.c.l.b16 %v6092
  %v6101 = vpack.c.b16 %v6098, %v6097
  %v6102 = vpack.c.b16 %v6100, %v6099
  %v6106 = vsel %vm93, %v6080, 0
  %v6109 = vsel %vm93, %v6081, 0
  %v6112 = vsel %vm93, %v6082, 0
  %v6115 = vsel %vm93, %v6083, 0
  %v6118 = vsel %vm93, %v6084, 0
  %v6121 = vsel %vm93, %v6085, 0
  %v6124 = vsel %vm93, %v6086, 0
  %v6127 = vsel %vm93, %v6087, 0
  %6129 = vmatprep.subr.bf16.mxu0 0
  %6130 = vmatpush1.bf16.msra.mxu0 %v6101
  %6131 = vmatprep.subr.bf16.mxu0 0
  %6132 = vmatpush1.bf16.msra.mxu0 %v6102
  %6133 = vmatprep.subr.bf16.mxu0 0
  %6134 = vmatpush1.bf16.msra.mxu0 0
  %6135 = vmatprep.subr.bf16.mxu0 0
  %6136 = vmatpush1.bf16.msra.mxu0 0
  %6137 = vmatprep.subr.bf16.mxu0 0
  %6138 = vmatpush1.bf16.msra.mxu0 0
  %6139 = vmatprep.subr.bf16.mxu0 0
  %6140 = vmatpush1.bf16.msra.mxu0 0
  %6141 = vmatprep.subr.bf16.mxu0 0
  %6142 = vmatpush1.bf16.msra.mxu0 0
  %6143 = vmatprep.subr.bf16.mxu0 0
  %6144 = vmatpush1.bf16.msra.mxu0 0
  %6145 = vmatprep.subr.bf16.mxu0 0
  %6146 = vmatpush1.bf16.msra.mxu0 0
  %6147 = vmatprep.subr.bf16.mxu0 0
  %6148 = vmatpush1.bf16.msra.mxu0 0
  %6149 = vmatprep.subr.bf16.mxu0 0
  %6150 = vmatpush1.bf16.msra.mxu0 0
  %6151 = vmatprep.subr.bf16.mxu0 0
  %6152 = vmatpush1.bf16.msra.mxu0 0
  %6153 = vmatprep.subr.bf16.mxu0 0
  %6154 = vmatpush1.bf16.msra.mxu0 0
  %6155 = vmatprep.subr.bf16.mxu0 0
  %6156 = vmatpush1.bf16.msra.mxu0 0
  %6157 = vmatprep.subr.bf16.mxu0 0
  %6158 = vmatpush1.bf16.msra.mxu0 0
  %6159 = vmatprep.subr.bf16.mxu0 0
  %6160 = vmatpush1.bf16.msra.mxu0 0
  %6161 = vmatprep.mubr.bf16.mxu0 0
  %6162 = vmatmul.mubr.bf16.gmra.mrb[0].mxu0 %v6106
  %v6163 = vpop.f32.mrb[0].mxu0
  %v6164 = vadd.f32 %v6064, %v6163
  %v6165 = vpop.f32.mrb[0].mxu0
  %v6166 = vpop.f32.mrb[0].mxu0
  %v6167 = vadd.f32 %v6065, %v6166
  %v6168 = vpop.f32.mrb[0].mxu0
  %6169 = vmatprep.mubr.bf16.mxu0 0
  %6170 = vmatmul.mubr.bf16.gmra.mrb[0].mxu0 %v6109
  %v6171 = vpop.f32.mrb[0].mxu0
  %v6172 = vadd.f32 %v6066, %v6171
  %v6173 = vpop.f32.mrb[0].mxu0
  %v6174 = vpop.f32.mrb[0].mxu0
  %v6175 = vadd.f32 %v6067, %v6174
  %v6176 = vpop.f32.mrb[0].mxu0
  %6177 = vmatprep.mubr.bf16.mxu0 0
  %6178 = vmatmul.mubr.bf16.gmra.mrb[0].mxu0 %v6112
  %v6179 = vpop.f32.mrb[0].mxu0
  %v6180 = vadd.f32 %v6068, %v6179
  %v6181 = vpop.f32.mrb[0].mxu0
  %v6182 = vpop.f32.mrb[0].mxu0
  %v6183 = vadd.f32 %v6069, %v6182
  %v6184 = vpop.f32.mrb[0].mxu0
  %6185 = vmatprep.mubr.bf16.mxu0 0
  %6186 = vmatmul.mubr.bf16.gmra.mrb[0].mxu0 %v6115
  %v6187 = vpop.f32.mrb[0].mxu0
  %v6188 = vadd.f32 %v6070, %v6187
  %v6189 = vpop.f32.mrb[0].mxu0
  %v6190 = vpop.f32.mrb[0].mxu0
  %v6191 = vadd.f32 %v6071, %v6190
  %v6192 = vpop.f32.mrb[0].mxu0
  %6193 = vmatprep.mubr.bf16.mxu0 0
  %6194 = vmatmul.mubr.bf16.gmra.mrb[0].mxu0 %v6118
  %v6195 = vpop.f32.mrb[0].mxu0
  %v6196 = vadd.f32 %v6072, %v6195
  %v6197 = vpop.f32.mrb[0].mxu0
  %v6198 = vpop.f32.mrb[0].mxu0
  %v6199 = vadd.f32 %v6073, %v6198
  %v6200 = vpop.f32.mrb[0].mxu0
  %6201 = vmatprep.mubr.bf16.mxu0 0
  %6202 = vmatmul.mubr.bf16.gmra.mrb[0].mxu0 %v6121
  %v6203 = vpop.f32.mrb[0].mxu0
  %v6204 = vadd.f32 %v6074, %v6203
  %v6205 = vpop.f32.mrb[0].mxu0
  %v6206 = vpop.f32.mrb[0].mxu0
  %v6207 = vadd.f32 %v6075, %v6206
  %v6208 = vpop.f32.mrb[0].mxu0
  %6209 = vmatprep.mubr.bf16.mxu0 0
  %6210 = vmatmul.mubr.bf16.gmra.mrb[0].mxu0 %v6124
  %v6211 = vpop.f32.mrb[0].mxu0
  %v6212 = vadd.f32 %v6076, %v6211
  %v6213 = vpop.f32.mrb[0].mxu0
  %v6214 = vpop.f32.mrb[0].mxu0
  %v6215 = vadd.f32 %v6077, %v6214
  %v6216 = vpop.f32.mrb[0].mxu0
  %6217 = vmatprep.mubr.bf16.mxu0 0
  %6218 = vmatmul.mubr.bf16.gmra.mrb[0].mxu0 %v6127
  %v6219 = vpop.f32.mrb[0].mxu0
  %v6220 = vadd.f32 %v6078, %v6219
  %v6221 = vpop.f32.mrb[0].mxu0
  %v6222 = vpop.f32.mrb[0].mxu0
  %v6223 = vadd.f32 %v6079, %v6222
  %v6224 = vpop.f32.mrb[0].mxu0
  %6225 = vdwg.mxu0
  %6226 = vst.msk [vmem:[%s8] sm:$0xff] %vm93, %v6164
  %6227 = vst.msk [vmem:[%s8 + $0x8] sm:$0xff] %vm93, %v6167
  %6228 = vst.msk [vmem:[%s8 + $0x10] sm:$0xff] %vm93, %v6172
  %6229 = vst.msk [vmem:[%s8 + $0x18] sm:$0xff] %vm93, %v6175
  %6230 = vst.msk [vmem:[%s8 + $0x20] sm:$0xff] %vm93, %v6180
  %6231 = vst.msk [vmem:[%s8 + $0x28] sm:$0xff] %vm93, %v6183
  %6232 = vst.msk [vmem:[%s8 + $0x30] sm:$0xff] %vm93, %v6188
  %6233 = vst.msk [vmem:[%s8 + $0x38] sm:$0xff] %vm93, %v6191
  %6234 = vst.msk [vmem:[%s8 + $0x40] sm:$0xff] %vm93, %v6196
  %6235 = vst.msk [vmem:[%s8 + $0x48] sm:$0xff] %vm93, %v6199
  %6236 = vst.msk [vmem:[%s8 + $0x50] sm:$0xff] %vm93, %v6204
  %6237 = vst.msk [vmem:[%s8 + $0x58] sm:$0xff] %vm93, %v6207
  %6238 = vst.msk [vmem:[%s8 + $0x60] sm:$0xff] %vm93, %v6212
  %6239 = vst.msk [vmem:[%s8 + $0x68] sm:$0xff] %vm93, %v6215
  %6240 = vst.msk [vmem:[%s8 + $0x70] sm:$0xff] %vm93, %v6220
  %6241 = vst.msk [vmem:[%s8 + $0x78] sm:$0xff] %vm93, %v6223
  // Predicated region
  $region34: #{tpu_custom_call.1} parent=0 // pred_check
    _
  $region35: #{tpu_custom_call.1} parent=0 // pred_check_branch
    %6243 = sbr.rel (0) target = $region37
  $region36: #{tpu_custom_call.1} parent=0 // pred_region
    _
  $region37: #{tpu_custom_call.1} parent=0 // pred_fallthru
    _
  // Predicated region
  $region38: #{tpu_custom_call.1} parent=0 // pred_check
    _
  $region39: #{tpu_custom_call.1} parent=0 // pred_check_branch
    %6245 = sbr.rel (0) target = $region41
  $region40: #{tpu_custom_call.1} parent=0 // pred_region
    _
  $region41: #{tpu_custom_call.1} parent=0 // pred_fallthru
    _

</llo_original>
